<compile_context>
chip_gen: v6e
topology: v6e:2x2x1
jax: 0.10.0
libtpu: 0.0.40
codegen_flags: <defaults>
</compile_context>

<pallas_src>
import functools

import numpy as np
import jax
import jax.numpy as jnp
from jax import lax
from jax.experimental import pallas as pl
from jax.experimental.pallas import tpu as pltpu

HW = 32            # AdaptiveAvgPool2d target size ("hw" in the module)
MP_K, MP_S = 5, 2  # MaxPool2d(kernel_size=5, stride=2)
OFF = MP_K // 2    # centre offset of the 5-tap window


# ----------------------------------------------------------------------------
# Host-side construction of the constant pooling / selection / tiling matrices
# ----------------------------------------------------------------------------
def _adaptive_avg_matrix(n_in, n_out):
    """1-D PyTorch AdaptiveAvgPool as a (n_out, n_in) row-stochastic matrix."""
    m = np.zeros((n_out, n_in), dtype=np.float32)
    for o in range(n_out):
        s = (o * n_in) // n_out
        e = -(-((o + 1) * n_in) // n_out)  # ceil
        m[o, s:e] = 1.0 / (e - s)
    return m


def _centre_select_matrix(n_rows, n_cols, stride, n_valid):
    """(n_rows, n_cols); row a selects column a*stride + OFF (window centre).

    Rows a >= n_valid are all-zero (padding rows)."""
    m = np.zeros((n_rows, n_cols), dtype=np.float32)
    for a in range(n_valid):
        m[a, a * stride + OFF] = 1.0
    return m


def _tile_matrix(n_out, n_in):
    """torch .repeat along one spatial axis: out[i] = x[i % n_in]."""
    m = np.zeros((n_out, n_in), dtype=np.float32)
    for i in range(n_out):
        m[i, i % n_in] = 1.0
    return m


def _kron_eye(m, k):
    return np.kron(np.eye(k, dtype=np.float32), m).astype(np.float32)


# ----------------------------------------------------------------------------
# Wrapper + kernels
# ----------------------------------------------------------------------------
@functools.partial(jax.jit, static_argnames=("hw",))
def featmap_transfer(style_feat, style_skt, content_skt, hw=HW):
    B, C, H, W = style_feat.shape
    assert H == W, "square inputs expected"
    assert style_skt.shape == (B, 1, H, W) and content_skt.shape == (B, 1, H, W)
    assert hw % 8 == 0 and hw >= 16

    # ---- static tiling config -------------------------------------------------
    # Cb channels lane-packed per slab (target 128 lanes per half; edge/plain
    # stacking doubles to 256-lane operands for the pooled chain).
    cands, c0 = [], max(1, 128 // hw)
    while c0 >= 1:
        cands.append(c0)
        c0 //= 2
    Cb = 1
    for cand in cands:
        if C % cand == 0:
            Cb = cand
            break
    NCh = 2 * Cb                       # edge + plain virtual channels
    nG = C // Cb                       # channel blocks

    n1 = (hw - MP_K) // MP_S + 1       # size after first  MaxPool2d(5,2)
    n2 = (n1 - MP_K) // MP_S + 1       # size after second MaxPool2d(5,2)
    assert n2 >= 1
    n1p = ((n1 + 7) // 8) * 8          # sublane-padded pool-1 size (vreg aligned)

    # channel blocks per grid step (fatten the grid: amortize ~0.35us/step)
    per_block_bytes = Cb * H * W * 4
    max_sps = max(1, min(8, (2 * 1024 * 1024) // per_block_bytes))
    if B == 1 and nG >= 2:             # keep >=2 parallel steps for megacore (v7x)
        max_sps = min(max_sps, max(1, nG // 2))
    SPS = 1
    for d in range(1, nG + 1):
        if nG % d == 0 and d <= max_sps:
            SPS = d
    nGsteps = nG // SPS

    # ---- constant matrices (host side) ----------------------------------------
    P = _adaptive_avg_matrix(H, hw)                                  # (hw, H)
    PT = jnp.asarray(P.T)                                            # (H, hw)
    BlkPT = jnp.asarray(_kron_eye(P.T, Cb))                          # (Cb*H, Cb*hw)
    BBT = jnp.asarray(_kron_eye(P.T, B))                             # (B*H, B*hw)
    LaneTile = jnp.asarray(np.tile(np.eye(hw, dtype=np.float32), (1, Cb)))  # (hw, Cb*hw)

    S1p_np = _centre_select_matrix(n1p, hw, MP_S, n1)                # (n1p, hw)
    S1p = jnp.asarray(S1p_np)
    C1p = jnp.asarray(_kron_eye(S1p_np.T, NCh))                      # (NCh*hw, NCh*n1p)

    S2w = _centre_select_matrix(n2, n1p, MP_S, n2)                   # (n2, n1p)
    A = _adaptive_avg_matrix(n2, hw // 8)                            # (hw//8, n2)
    T = _tile_matrix(hw, hw // 8)                                    # (hw, hw//8)
    TAS2p_np = (T @ A @ S2w).astype(np.float32)                      # (hw, n1p)
    TAS2p = jnp.asarray(TAS2p_np)
    TAS2blkT = jnp.asarray(_kron_eye(TAS2p_np.T, NCh))               # (NCh*n1p, NCh*hw)

    # ---- kernel 1: pooled + rescaled sketch masks (both sketches, one call) ----
    def sketch_kernel(skt_ref, pt_ref, bbt_ref, o_ref):
        f32 = jnp.float32
        y = jnp.dot(skt_ref[0], pt_ref[...], preferred_element_type=f32)   # (B*H, hw)
        # z[j, b*hw+i] = (P @ skt_b @ P^T)[i, j]  (transposed pooled sketch)
        z = lax.dot_general(y, bbt_ref[...], (((0,), (0,)), ((), ())),
                            preferred_element_type=f32)                    # (hw, B*hw)
        mn = jnp.min(z, keepdims=True)
        mx = jnp.max(z, keepdims=True)
        # TODO(synk): torch would give Inf/NaN for a constant sketch; guard instead.
        res = (z - mn) / jnp.maximum(mx - mn, 1e-12)
        for b in range(B):
            o_ref[0, b] = res[:, b * hw:(b + 1) * hw]

    skts = jnp.stack([style_skt, content_skt], axis=0).reshape(2, B * H, W)
    masks = pl.pallas_call(
        sketch_kernel,
        out_shape=jax.ShapeDtypeStruct((2, B, hw, hw), jnp.float32),
        grid=(2,),
        in_specs=[pl.BlockSpec((1, B * H, W), lambda s: (s, 0, 0)),
                  pl.BlockSpec((H, hw), lambda s: (0, 0)),
                  pl.BlockSpec((B * H, B * hw), lambda s: (0, 0))],
        out_specs=pl.BlockSpec((1, B, hw, hw), lambda s: (s, 0, 0, 0)),
        compiler_params=pltpu.CompilerParams(
            dimension_semantics=("parallel",)),
    )(skts, PT, BBT)                                                  # (2, B, hw, hw)

    # ---- kernel 2: main feature-transfer chain ---------------------------------
    def featmap_kernel(sf_ref, masks_ref, pt_ref, blkpt_ref, lt_ref,
                       s1p_ref, c1p_ref, tas2p_ref, tas2bt_ref, o_ref):
        f32 = jnp.float32

        def win_max(x, axis):
            # centred 5-tap sliding max: max_{|d|<=2} x[idx+d]  (XLU roll + VPU max)
            # symmetric shifts -> independent of roll sign convention; wrap-around
            # only contaminates positions that the select matrices never pick.
            n = x.shape[axis]
            out = x
            for e in (1, 2):
                out = jnp.maximum(out, pltpu.roll(x, shift=e, axis=axis))
                out = jnp.maximum(out, pltpu.roll(x, shift=n - e, axis=axis))
            return out

        # hoisted once per grid step: masks lane-tiled across Cb blocks (exact 0/1 matmul)
        m_cb = jnp.dot(masks_ref[0, 0], lt_ref[...], preferred_element_type=f32)
        cm_cb = jnp.dot(masks_ref[1, 0], lt_ref[...], preferred_element_type=f32)

        pt, blkpt = pt_ref[...], blkpt_ref[...]
        s1p, c1p = s1p_ref[...], c1p_ref[...]
        tas2p, tas2bt = tas2p_ref[...], tas2bt_ref[...]

        for s in range(SPS):            # static unroll over the step's channel blocks
            x = sf_ref[0, s * Cb * H:(s + 1) * Cb * H, :]              # (Cb*H, W)
            y = jnp.dot(x, pt, preferred_element_type=f32)             # (Cb*H, hw)
            # g[j, c*hw+i] = (P @ X_c @ P^T)[i, j]: transposed, lane-packed pooled maps.
            # TODO(synk): dim-0/dim-0 contraction may lower with an XLU transpose of y;
            # check the Mosaic dump and feed a pre-transposed layout if it shows up hot.
            g = lax.dot_general(y, blkpt, (((0,), (0,)), ((), ())),
                                preferred_element_type=f32)            # (hw, Cb*hw)
            edge = g * m_cb
            plain = g - edge
            # MaxPool2d(5,2) #1: rolls+max per axis, then ONE centre/stride-select
            # matmul per axis (block-diagonal over the 2*Cb stacked channels).
            v = jnp.concatenate([win_max(edge, 1), win_max(plain, 1)], axis=-1)
            w = win_max(v, 0)                                          # (hw, NCh*hw)
            r = jnp.dot(s1p, w, preferred_element_type=f32)            # (n1p, NCh*hw)
            r = jnp.dot(r, c1p, preferred_element_type=f32)            # (n1p, NCh*n1p)
            # MaxPool2d(5,2) #2 + AdaptiveAvgPool2d(hw//8) + repeat(8,8): window max,
            # then the host-fused linear tail (T @ A @ S2) applied on both axes.
            w2 = win_max(win_max(r, 1), 0)
            t = jnp.dot(tas2p, w2, preferred_element_type=f32)         # (hw, NCh*n1p)
            out_v = jnp.dot(t, tas2bt, preferred_element_type=f32)     # (hw, NCh*hw)
            eo = out_v[:, :Cb * hw]
            po = out_v[:, Cb * hw:]
            o_ref[0, s] = (po + (eo - po) * cm_cb).astype(o_ref.dtype)

    sf2 = style_feat.reshape(B, C * H, W)

    flops_block = 2 * (
        Cb * H * W * hw
        + Cb * H * hw * (Cb * hw)
        + n1p * hw * (NCh * hw)
        + n1p * (NCh * hw) * (NCh * n1p)
        + hw * n1p * (NCh * n1p)
        + hw * (NCh * n1p) * (NCh * hw))
    flops_step = SPS * flops_block + 2 * 2 * hw * hw * (Cb * hw)
    bytes_step = 4 * (SPS * Cb * H * W + 2 * hw * hw + SPS * hw * Cb * hw
                      + H * hw + Cb * H * Cb * hw + hw * Cb * hw + n1p * hw
                      + NCh * hw * NCh * n1p + hw * n1p + NCh * n1p * NCh * hw)
    n_steps = B * nGsteps
    cost = pl.CostEstimate(flops=int(flops_step * n_steps), transcendentals=0,
                           bytes_accessed=int(bytes_step * n_steps))

    out_packed = pl.pallas_call(
        featmap_kernel,
        out_shape=jax.ShapeDtypeStruct((B, nG, hw, Cb * hw), style_feat.dtype),
        grid=(B, nGsteps),
        in_specs=[
            pl.BlockSpec((1, SPS * Cb * H, W), lambda b, g: (b, g, 0)),   # feat chunk
            pl.BlockSpec((2, 1, hw, hw), lambda b, g: (0, b, 0, 0)),      # both masks
            pl.BlockSpec((H, hw), lambda b, g: (0, 0)),                   # P^T
            pl.BlockSpec((Cb * H, Cb * hw), lambda b, g: (0, 0)),         # blkdiag(P)^T
            pl.BlockSpec((hw, Cb * hw), lambda b, g: (0, 0)),             # lane-tile
            pl.BlockSpec((n1p, hw), lambda b, g: (0, 0)),                 # row select #1
            pl.BlockSpec((NCh * hw, NCh * n1p), lambda b, g: (0, 0)),     # col select #1
            pl.BlockSpec((hw, n1p), lambda b, g: (0, 0)),                 # T@A@S2 rows
            pl.BlockSpec((NCh * n1p, NCh * hw), lambda b, g: (0, 0)),     # T@A@S2 cols
        ],
        out_specs=pl.BlockSpec((1, SPS, hw, Cb * hw), lambda b, g: (b, g, 0, 0)),
        compiler_params=pltpu.CompilerParams(
            dimension_semantics=("parallel", "parallel"),
            vmem_limit_bytes=32 * 1024 * 1024),
        cost_estimate=cost,
    )(sf2, masks, PT, BlkPT, LaneTile, S1p, C1p, TAS2p, TAS2blkT)

    # un-pack (layout plumbing): out_packed[b, g, j, c*hw + i] == out[b, g*Cb + c, i, j]
    out = out_packed.reshape(B, nG, hw, Cb, hw).transpose(0, 1, 3, 4, 2)
    return out.reshape(B, C, hw, hw)


# ----------------------------------------------------------------------------
# Pure-JAX reference (independent ops: reduce_window / einsum / tile)
# ----------------------------------------------------------------------------
def featmap_transfer_reference(style_feat, style_skt, content_skt, hw=HW):
    def ad_pool(x, out):
        P = jnp.asarray(_adaptive_avg_matrix(x.shape[-1], out))
        return jnp.einsum("ij,bcjk,lk->bcil", P, x, P,
                          precision=lax.Precision.HIGHEST)

    def rescale(t):
        return (t - t.min()) / (t.max() - t.min())

    def maxpool(x):
        return lax.reduce_window(x, -jnp.inf, lax.max,
                                 (1, 1, MP_K, MP_K), (1, 1, MP_S, MP_S), "VALID")

    sf = ad_pool(style_feat, hw)
    ss = rescale(ad_pool(style_skt, hw))
    cs = rescale(ad_pool(content_skt, hw))
    edge = sf * ss
    plain = sf * (1.0 - ss)

    def feat_pool(x):
        x = maxpool(maxpool(x))
        x = ad_pool(x, hw // 8)
        return jnp.tile(x, (1, 1, 8, 8))

    return feat_pool(edge) * cs + feat_pool(plain) * (1.0 - cs)


if __name__ == "__main__":
    key = jax.random.PRNGKey(0)
    k1, k2, k3 = jax.random.split(key, 3)
    B, C, H = 2, 8, 64
    style_feat = jax.random.normal(k1, (B, C, H, H), dtype=jnp.float32)
    style_skt = jax.random.uniform(k2, (B, 1, H, H), dtype=jnp.float32)
    content_skt = jax.random.uniform(k3, (B, 1, H, H), dtype=jnp.float32)

    out = featmap_transfer(style_feat, style_skt, content_skt)
    out = jax.block_until_ready(out)
    assert out.shape == (B, C, HW, HW) and out.dtype == jnp.float32

    ref = featmap_transfer_reference(style_feat, style_skt, content_skt)
    np.testing.assert_allclose(np.asarray(out), np.asarray(ref),
                               rtol=2e-2, atol=2e-2)
    print("KERNEL_OK")
</pallas_src>

<mosaic_0001>
module attributes {stable_mosaic.version = 11 : i64} {
  func.func @sketch_kernel(%arg0: i32, %arg1: memref<1x128x64xf32, #tpu.memory_space<vmem>>, %arg2: memref<64x32xf32, #tpu.memory_space<vmem>>, %arg3: memref<128x64xf32, #tpu.memory_space<vmem>>, %arg4: memref<1x2x32x32xf32, #tpu.memory_space<vmem>>) attributes {dimension_semantics = [#tpu.dimension_semantics<parallel>], iteration_bounds = array<i64: 2>, scalar_prefetch = 0 : i64, scratch_operands = 0 : i64, tpu.core_type = #tpu.core_type<tc>, window_params = [{transform_indices = @transform_0, window_bounds = array<i64: 1, 128, 64>}, {pipeline_mode = #tpu.pipeline_mode<synchronous>, transform_indices = @transform_1, window_bounds = array<i64: 64, 32>}, {pipeline_mode = #tpu.pipeline_mode<synchronous>, transform_indices = @transform_2, window_bounds = array<i64: 128, 64>}, {transform_indices = @transform_3, window_bounds = array<i64: 1, 2, 32, 32>}]} {
    %c0 = arith.constant 0 : index
    %c0_0 = arith.constant 0 : index
    %c0_1 = arith.constant 0 : index
    %0 = vector.load %arg1[%c0, %c0_0, %c0_1] : memref<1x128x64xf32, #tpu.memory_space<vmem>>, vector<1x128x64xf32>
    %1 = vector.shape_cast %0 : vector<1x128x64xf32> to vector<128x64xf32>
    %c0_2 = arith.constant 0 : index
    %c0_3 = arith.constant 0 : index
    %2 = vector.load %arg2[%c0_2, %c0_3] : memref<64x32xf32, #tpu.memory_space<vmem>>, vector<64x32xf32>
    %cst = arith.constant dense<0.000000e+00> : vector<128x32xf32>
    %3 = tpu.matmul %1, %2, %cst {dimension_numbers = #tpu.dot_dimension_numbers<[1], [0], [0], [1], [0, 0, 1, 1], [], []>} : vector<128x64xf32>, vector<64x32xf32>, vector<128x32xf32> -> vector<128x32xf32>
    %c0_4 = arith.constant 0 : index
    %c0_5 = arith.constant 0 : index
    %4 = vector.load %arg3[%c0_4, %c0_5] : memref<128x64xf32, #tpu.memory_space<vmem>>, vector<128x64xf32>
    %cst_6 = arith.constant dense<0.000000e+00> : vector<32x64xf32>
    %5 = tpu.matmul %3, %4, %cst_6 {dimension_numbers = #tpu.dot_dimension_numbers<[0], [0], [1], [1], [0, 1, 1, 1], [], []>} : vector<128x32xf32>, vector<128x64xf32>, vector<32x64xf32> -> vector<32x64xf32>
    %6 = vector.shape_cast %5 : vector<32x64xf32> to vector<1x32x64xf32>
    %cst_7 = arith.constant dense<0x7F800000> : vector<1xf32>
    %7 = vector.multi_reduction <minimumf>, %6, %cst_7 [1, 2] : vector<1x32x64xf32> to vector<1xf32>
    %8 = vector.shape_cast %7 : vector<1xf32> to vector<1x1x1xf32>
    %9 = vector.extract %8[0, 0, 0] : f32 from vector<1x1x1xf32>
    %10 = vector.broadcast %9 : f32 to vector<1x1xf32>
    %11 = vector.shape_cast %5 : vector<32x64xf32> to vector<1x32x64xf32>
    %cst_8 = arith.constant dense<0xFF800000> : vector<1xf32>
    %12 = vector.multi_reduction <maximumf>, %11, %cst_8 [1, 2] : vector<1x32x64xf32> to vector<1xf32>
    %13 = vector.shape_cast %12 : vector<1xf32> to vector<1x1x1xf32>
    %14 = vector.extract %13[0, 0, 0] : f32 from vector<1x1x1xf32>
    %15 = vector.broadcast %14 : f32 to vector<1x1xf32>
    %16 = vector.broadcast %10 : vector<1x1xf32> to vector<32x64xf32>
    %17 = arith.subf %5, %16 : vector<32x64xf32>
    %18 = arith.subf %15, %10 : vector<1x1xf32>
    %cst_9 = arith.constant 9.99999996E-13 : f32
    %19 = vector.broadcast %cst_9 : f32 to vector<1x1xf32>
    %20 = arith.maximumf %18, %19 : vector<1x1xf32>
    %21 = vector.broadcast %20 : vector<1x1xf32> to vector<32x64xf32>
    %22 = arith.divf %17, %21 : vector<32x64xf32>
    %23 = vector.extract_strided_slice %22 {offsets = [0, 0], sizes = [32, 32], strides = [1, 1]} : vector<32x64xf32> to vector<32x32xf32>
    %c0_10 = arith.constant 0 : index
    %c0_11 = arith.constant 0 : index
    %c0_12 = arith.constant 0 : index
    %c0_13 = arith.constant 0 : index
    %24 = vector.load %arg4[%c0_10, %c0_11, %c0_12, %c0_13] : memref<1x2x32x32xf32, #tpu.memory_space<vmem>>, vector<1x1x32x32xf32>
    %25 = vector.shape_cast %24 : vector<1x1x32x32xf32> to vector<32x32xf32>
    %26 = vector.shape_cast %23 : vector<32x32xf32> to vector<1x1x32x32xf32>
    tpu.vector_store %arg4[%c0_10, %c0_11, %c0_12, %c0_13], %26 {strides = array<i32>} : memref<1x2x32x32xf32, #tpu.memory_space<vmem>>, vector<1x1x32x32xf32>,
    %27 = vector.extract_strided_slice %22 {offsets = [0, 32], sizes = [32, 32], strides = [1, 1]} : vector<32x64xf32> to vector<32x32xf32>
    %c0_14 = arith.constant 0 : index
    %c1 = arith.constant 1 : index
    %c0_15 = arith.constant 0 : index
    %c0_16 = arith.constant 0 : index
    %28 = vector.load %arg4[%c0_14, %c1, %c0_15, %c0_16] : memref<1x2x32x32xf32, #tpu.memory_space<vmem>>, vector<1x1x32x32xf32>
    %29 = vector.shape_cast %28 : vector<1x1x32x32xf32> to vector<32x32xf32>
    %30 = vector.shape_cast %27 : vector<32x32xf32> to vector<1x1x32x32xf32>
    tpu.vector_store %arg4[%c0_14, %c1, %c0_15, %c0_16], %30 {strides = array<i32>} : memref<1x2x32x32xf32, #tpu.memory_space<vmem>>, vector<1x1x32x32xf32>,
    return
  }
  func.func @transform_0(%arg0: i32) -> (i32, i32, i32) {
    %c0_i32 = arith.constant 0 : i32
    %c0_i32_0 = arith.constant 0 : i32
    %c0_i32_1 = arith.constant 0 : i32
    return %arg0, %c0_i32, %c0_i32_0 : i32, i32, i32
  }
  func.func @transform_1(%arg0: i32) -> (i32, i32) {
    %c0_i32 = arith.constant 0 : i32
    %c0_i32_0 = arith.constant 0 : i32
    %c0_i32_1 = arith.constant 0 : i32
    return %c0_i32, %c0_i32_0 : i32, i32
  }
  func.func @transform_2(%arg0: i32) -> (i32, i32) {
    %c0_i32 = arith.constant 0 : i32
    %c0_i32_0 = arith.constant 0 : i32
    %c0_i32_1 = arith.constant 0 : i32
    return %c0_i32, %c0_i32_0 : i32, i32
  }
  func.func @transform_3(%arg0: i32) -> (i32, i32, i32, i32) {
    %c0_i32 = arith.constant 0 : i32
    %c0_i32_0 = arith.constant 0 : i32
    %c0_i32_1 = arith.constant 0 : i32
    %c0_i32_2 = arith.constant 0 : i32
    return %arg0, %c0_i32, %c0_i32_0, %c0_i32_1 : i32, i32, i32, i32
  }
}

module attributes {stable_mosaic.version = 11 : i64} {
  func.func @featmap_kernel(%arg0: i32, %arg1: i32, %arg2: memref<1x512x64xf32, #tpu.memory_space<vmem>>, %arg3: memref<2x1x32x32xf32, #tpu.memory_space<vmem>>, %arg4: memref<64x32xf32, #tpu.memory_space<vmem>>, %arg5: memref<256x128xf32, #tpu.memory_space<vmem>>, %arg6: memref<32x128xf32, #tpu.memory_space<vmem>>, %arg7: memref<16x32xf32, #tpu.memory_space<vmem>>, %arg8: memref<256x128xf32, #tpu.memory_space<vmem>>, %arg9: memref<32x16xf32, #tpu.memory_space<vmem>>, %arg10: memref<128x256xf32, #tpu.memory_space<vmem>>, %arg11: memref<1x2x32x128xf32, #tpu.memory_space<vmem>>) attributes {dimension_semantics = [#tpu.dimension_semantics<parallel>, #tpu.dimension_semantics<parallel>], iteration_bounds = array<i64: 2, 1>, scalar_prefetch = 0 : i64, scratch_operands = 0 : i64, tpu.core_type = #tpu.core_type<tc>, window_params = [{transform_indices = @transform_0, window_bounds = array<i64: 1, 512, 64>}, {transform_indices = @transform_1, window_bounds = array<i64: 2, 1, 32, 32>}, {pipeline_mode = #tpu.pipeline_mode<synchronous>, transform_indices = @transform_2, window_bounds = array<i64: 64, 32>}, {pipeline_mode = #tpu.pipeline_mode<synchronous>, transform_indices = @transform_3, window_bounds = array<i64: 256, 128>}, {pipeline_mode = #tpu.pipeline_mode<synchronous>, transform_indices = @transform_4, window_bounds = array<i64: 32, 128>}, {pipeline_mode = #tpu.pipeline_mode<synchronous>, transform_indices = @transform_5, window_bounds = array<i64: 16, 32>}, {pipeline_mode = #tpu.pipeline_mode<synchronous>, transform_indices = @transform_6, window_bounds = array<i64: 256, 128>}, {pipeline_mode = #tpu.pipeline_mode<synchronous>, transform_indices = @transform_7, window_bounds = array<i64: 32, 16>}, {pipeline_mode = #tpu.pipeline_mode<synchronous>, transform_indices = @transform_8, window_bounds = array<i64: 128, 256>}, {transform_indices = @transform_9, window_bounds = array<i64: 1, 2, 32, 128>}]} {
    %c0 = arith.constant 0 : index
    %c0_0 = arith.constant 0 : index
    %c0_1 = arith.constant 0 : index
    %c0_2 = arith.constant 0 : index
    %0 = vector.load %arg3[%c0, %c0_0, %c0_1, %c0_2] : memref<2x1x32x32xf32, #tpu.memory_space<vmem>>, vector<1x1x32x32xf32>
    %1 = vector.shape_cast %0 : vector<1x1x32x32xf32> to vector<32x32xf32>
    %c0_3 = arith.constant 0 : index
    %c0_4 = arith.constant 0 : index
    %2 = vector.load %arg6[%c0_3, %c0_4] : memref<32x128xf32, #tpu.memory_space<vmem>>, vector<32x128xf32>
    %cst = arith.constant dense<0.000000e+00> : vector<32x128xf32>
    %3 = tpu.matmul %1, %2, %cst {dimension_numbers = #tpu.dot_dimension_numbers<[1], [0], [0], [1], [0, 0, 1, 1], [], []>} : vector<32x32xf32>, vector<32x128xf32>, vector<32x128xf32> -> vector<32x128xf32>
    %c1 = arith.constant 1 : index
    %c0_5 = arith.constant 0 : index
    %c0_6 = arith.constant 0 : index
    %c0_7 = arith.constant 0 : index
    %4 = vector.load %arg3[%c1, %c0_5, %c0_6, %c0_7] : memref<2x1x32x32xf32, #tpu.memory_space<vmem>>, vector<1x1x32x32xf32>
    %5 = vector.shape_cast %4 : vector<1x1x32x32xf32> to vector<32x32xf32>
    %c0_8 = arith.constant 0 : index
    %c0_9 = arith.constant 0 : index
    %6 = vector.load %arg6[%c0_8, %c0_9] : memref<32x128xf32, #tpu.memory_space<vmem>>, vector<32x128xf32>
    %cst_10 = arith.constant dense<0.000000e+00> : vector<32x128xf32>
    %7 = tpu.matmul %5, %6, %cst_10 {dimension_numbers = #tpu.dot_dimension_numbers<[1], [0], [0], [1], [0, 0, 1, 1], [], []>} : vector<32x32xf32>, vector<32x128xf32>, vector<32x128xf32> -> vector<32x128xf32>
    %c0_11 = arith.constant 0 : index
    %c0_12 = arith.constant 0 : index
    %8 = vector.load %arg4[%c0_11, %c0_12] : memref<64x32xf32, #tpu.memory_space<vmem>>, vector<64x32xf32>
    %c0_13 = arith.constant 0 : index
    %c0_14 = arith.constant 0 : index
    %9 = vector.load %arg5[%c0_13, %c0_14] : memref<256x128xf32, #tpu.memory_space<vmem>>, vector<256x128xf32>
    %c0_15 = arith.constant 0 : index
    %c0_16 = arith.constant 0 : index
    %10 = vector.load %arg7[%c0_15, %c0_16] : memref<16x32xf32, #tpu.memory_space<vmem>>, vector<16x32xf32>
    %c0_17 = arith.constant 0 : index
    %c0_18 = arith.constant 0 : index
    %11 = vector.load %arg8[%c0_17, %c0_18] : memref<256x128xf32, #tpu.memory_space<vmem>>, vector<256x128xf32>
    %c0_19 = arith.constant 0 : index
    %c0_20 = arith.constant 0 : index
    %12 = vector.load %arg9[%c0_19, %c0_20] : memref<32x16xf32, #tpu.memory_space<vmem>>, vector<32x16xf32>
    %c0_21 = arith.constant 0 : index
    %c0_22 = arith.constant 0 : index
    %13 = vector.load %arg10[%c0_21, %c0_22] : memref<128x256xf32, #tpu.memory_space<vmem>>, vector<128x256xf32>
    %c0_23 = arith.constant 0 : index
    %c0_24 = arith.constant 0 : index
    %c0_25 = arith.constant 0 : index
    %14 = vector.load %arg2[%c0_23, %c0_24, %c0_25] : memref<1x512x64xf32, #tpu.memory_space<vmem>>, vector<1x256x64xf32>
    %15 = vector.shape_cast %14 : vector<1x256x64xf32> to vector<256x64xf32>
    %cst_26 = arith.constant dense<0.000000e+00> : vector<256x32xf32>
    %16 = tpu.matmul %15, %8, %cst_26 {dimension_numbers = #tpu.dot_dimension_numbers<[1], [0], [0], [1], [0, 0, 1, 1], [], []>} : vector<256x64xf32>, vector<64x32xf32>, vector<256x32xf32> -> vector<256x32xf32>
    %cst_27 = arith.constant dense<0.000000e+00> : vector<32x128xf32>
    %17 = tpu.matmul %16, %9, %cst_27 {dimension_numbers = #tpu.dot_dimension_numbers<[0], [0], [1], [1], [0, 1, 1, 1], [], []>} : vector<256x32xf32>, vector<256x128xf32>, vector<32x128xf32> -> vector<32x128xf32>
    %18 = arith.mulf %17, %3 : vector<32x128xf32>
    %19 = arith.subf %17, %18 : vector<32x128xf32>
    %c1_i32 = arith.constant 1 : i32
    %20 = tpu.dynamic_rotate %18 by %c1_i32 dim 1 : vector<32x128xf32>, i32 -> vector<32x128xf32>
    %21 = arith.maximumf %18, %20 : vector<32x128xf32>
    %c127_i32 = arith.constant 127 : i32
    %22 = tpu.dynamic_rotate %18 by %c127_i32 dim 1 : vector<32x128xf32>, i32 -> vector<32x128xf32>
    %23 = arith.maximumf %21, %22 : vector<32x128xf32>
    %c2_i32 = arith.constant 2 : i32
    %24 = tpu.dynamic_rotate %18 by %c2_i32 dim 1 : vector<32x128xf32>, i32 -> vector<32x128xf32>
    %25 = arith.maximumf %23, %24 : vector<32x128xf32>
    %c126_i32 = arith.constant 126 : i32
    %26 = tpu.dynamic_rotate %18 by %c126_i32 dim 1 : vector<32x128xf32>, i32 -> vector<32x128xf32>
    %27 = arith.maximumf %25, %26 : vector<32x128xf32>
    %c1_i32_28 = arith.constant 1 : i32
    %28 = tpu.dynamic_rotate %19 by %c1_i32_28 dim 1 : vector<32x128xf32>, i32 -> vector<32x128xf32>
    %29 = arith.maximumf %19, %28 : vector<32x128xf32>
    %c127_i32_29 = arith.constant 127 : i32
    %30 = tpu.dynamic_rotate %19 by %c127_i32_29 dim 1 : vector<32x128xf32>, i32 -> vector<32x128xf32>
    %31 = arith.maximumf %29, %30 : vector<32x128xf32>
    %c2_i32_30 = arith.constant 2 : i32
    %32 = tpu.dynamic_rotate %19 by %c2_i32_30 dim 1 : vector<32x128xf32>, i32 -> vector<32x128xf32>
    %33 = arith.maximumf %31, %32 : vector<32x128xf32>
    %c126_i32_31 = arith.constant 126 : i32
    %34 = tpu.dynamic_rotate %19 by %c126_i32_31 dim 1 : vector<32x128xf32>, i32 -> vector<32x128xf32>
    %35 = arith.maximumf %33, %34 : vector<32x128xf32>
    %36 = tpu.concatenate %27, %35 in 1 : vector<32x128xf32>, vector<32x128xf32> -> vector<32x256xf32>
    %c1_i32_32 = arith.constant 1 : i32
    %37 = tpu.dynamic_rotate %36 by %c1_i32_32 dim 0 : vector<32x256xf32>, i32 -> vector<32x256xf32>
    %38 = arith.maximumf %36, %37 : vector<32x256xf32>
    %c31_i32 = arith.constant 31 : i32
    %39 = tpu.dynamic_rotate %36 by %c31_i32 dim 0 : vector<32x256xf32>, i32 -> vector<32x256xf32>
    %40 = arith.maximumf %38, %39 : vector<32x256xf32>
    %c2_i32_33 = arith.constant 2 : i32
    %41 = tpu.dynamic_rotate %36 by %c2_i32_33 dim 0 : vector<32x256xf32>, i32 -> vector<32x256xf32>
    %42 = arith.maximumf %40, %41 : vector<32x256xf32>
    %c30_i32 = arith.constant 30 : i32
    %43 = tpu.dynamic_rotate %36 by %c30_i32 dim 0 : vector<32x256xf32>, i32 -> vector<32x256xf32>
    %44 = arith.maximumf %42, %43 : vector<32x256xf32>
    %cst_34 = arith.constant dense<0.000000e+00> : vector<16x256xf32>
    %45 = tpu.matmul %10, %44, %cst_34 {dimension_numbers = #tpu.dot_dimension_numbers<[1], [0], [0], [1], [0, 0, 1, 1], [], []>} : vector<16x32xf32>, vector<32x256xf32>, vector<16x256xf32> -> vector<16x256xf32>
    %cst_35 = arith.constant dense<0.000000e+00> : vector<16x128xf32>
    %46 = tpu.matmul %45, %11, %cst_35 {dimension_numbers = #tpu.dot_dimension_numbers<[1], [0], [0], [1], [0, 0, 1, 1], [], []>} : vector<16x256xf32>, vector<256x128xf32>, vector<16x128xf32> -> vector<16x128xf32>
    %c1_i32_36 = arith.constant 1 : i32
    %47 = tpu.dynamic_rotate %46 by %c1_i32_36 dim 1 : vector<16x128xf32>, i32 -> vector<16x128xf32>
    %48 = arith.maximumf %46, %47 : vector<16x128xf32>
    %c127_i32_37 = arith.constant 127 : i32
    %49 = tpu.dynamic_rotate %46 by %c127_i32_37 dim 1 : vector<16x128xf32>, i32 -> vector<16x128xf32>
    %50 = arith.maximumf %48, %49 : vector<16x128xf32>
    %c2_i32_38 = arith.constant 2 : i32
    %51 = tpu.dynamic_rotate %46 by %c2_i32_38 dim 1 : vector<16x128xf32>, i32 -> vector<16x128xf32>
    %52 = arith.maximumf %50, %51 : vector<16x128xf32>
    %c126_i32_39 = arith.constant 126 : i32
    %53 = tpu.dynamic_rotate %46 by %c126_i32_39 dim 1 : vector<16x128xf32>, i32 -> vector<16x128xf32>
    %54 = arith.maximumf %52, %53 : vector<16x128xf32>
    %c1_i32_40 = arith.constant 1 : i32
    %55 = tpu.dynamic_rotate %54 by %c1_i32_40 dim 0 : vector<16x128xf32>, i32 -> vector<16x128xf32>
    %56 = arith.maximumf %54, %55 : vector<16x128xf32>
    %c15_i32 = arith.constant 15 : i32
    %57 = tpu.dynamic_rotate %54 by %c15_i32 dim 0 : vector<16x128xf32>, i32 -> vector<16x128xf32>
    %58 = arith.maximumf %56, %57 : vector<16x128xf32>
    %c2_i32_41 = arith.constant 2 : i32
    %59 = tpu.dynamic_rotate %54 by %c2_i32_41 dim 0 : vector<16x128xf32>, i32 -> vector<16x128xf32>
    %60 = arith.maximumf %58, %59 : vector<16x128xf32>
    %c14_i32 = arith.constant 14 : i32
    %61 = tpu.dynamic_rotate %54 by %c14_i32 dim 0 : vector<16x128xf32>, i32 -> vector<16x128xf32>
    %62 = arith.maximumf %60, %61 : vector<16x128xf32>
    %cst_42 = arith.constant dense<0.000000e+00> : vector<32x128xf32>
    %63 = tpu.matmul %12, %62, %cst_42 {dimension_numbers = #tpu.dot_dimension_numbers<[1], [0], [0], [1], [0, 0, 1, 1], [], []>} : vector<32x16xf32>, vector<16x128xf32>, vector<32x128xf32> -> vector<32x128xf32>
    %cst_43 = arith.constant dense<0.000000e+00> : vector<32x256xf32>
    %64 = tpu.matmul %63, %13, %cst_43 {dimension_numbers = #tpu.dot_dimension_numbers<[1], [0], [0], [1], [0, 0, 1, 1], [], []>} : vector<32x128xf32>, vector<128x256xf32>, vector<32x256xf32> -> vector<32x256xf32>
    %65 = vector.extract_strided_slice %64 {offsets = [0, 0], sizes = [32, 128], strides = [1, 1]} : vector<32x256xf32> to vector<32x128xf32>
    %66 = vector.extract_strided_slice %64 {offsets = [0, 128], sizes = [32, 128], strides = [1, 1]} : vector<32x256xf32> to vector<32x128xf32>
    %67 = arith.subf %65, %66 : vector<32x128xf32>
    %68 = arith.mulf %67, %7 : vector<32x128xf32>
    %69 = arith.addf %66, %68 : vector<32x128xf32>
    %c0_44 = arith.constant 0 : index
    %c0_45 = arith.constant 0 : index
    %c0_46 = arith.constant 0 : index
    %c0_47 = arith.constant 0 : index
    %70 = vector.load %arg11[%c0_44, %c0_45, %c0_46, %c0_47] : memref<1x2x32x128xf32, #tpu.memory_space<vmem>>, vector<1x1x32x128xf32>
    %71 = vector.shape_cast %70 : vector<1x1x32x128xf32> to vector<32x128xf32>
    %72 = vector.shape_cast %69 : vector<32x128xf32> to vector<1x1x32x128xf32>
    tpu.vector_store %arg11[%c0_44, %c0_45, %c0_46, %c0_47], %72 {strides = array<i32>} : memref<1x2x32x128xf32, #tpu.memory_space<vmem>>, vector<1x1x32x128xf32>,
    %c0_48 = arith.constant 0 : index
    %c256 = arith.constant 256 : index
    %c0_49 = arith.constant 0 : index
    %73 = vector.load %arg2[%c0_48, %c256, %c0_49] : memref<1x512x64xf32, #tpu.memory_space<vmem>>, vector<1x256x64xf32>
    %74 = vector.shape_cast %73 : vector<1x256x64xf32> to vector<256x64xf32>
    %cst_50 = arith.constant dense<0.000000e+00> : vector<256x32xf32>
    %75 = tpu.matmul %74, %8, %cst_50 {dimension_numbers = #tpu.dot_dimension_numbers<[1], [0], [0], [1], [0, 0, 1, 1], [], []>} : vector<256x64xf32>, vector<64x32xf32>, vector<256x32xf32> -> vector<256x32xf32>
    %cst_51 = arith.constant dense<0.000000e+00> : vector<32x128xf32>
    %76 = tpu.matmul %75, %9, %cst_51 {dimension_numbers = #tpu.dot_dimension_numbers<[0], [0], [1], [1], [0, 1, 1, 1], [], []>} : vector<256x32xf32>, vector<256x128xf32>, vector<32x128xf32> -> vector<32x128xf32>
    %77 = arith.mulf %76, %3 : vector<32x128xf32>
    %78 = arith.subf %76, %77 : vector<32x128xf32>
    %c1_i32_52 = arith.constant 1 : i32
    %79 = tpu.dynamic_rotate %77 by %c1_i32_52 dim 1 : vector<32x128xf32>, i32 -> vector<32x128xf32>
    %80 = arith.maximumf %77, %79 : vector<32x128xf32>
    %c127_i32_53 = arith.constant 127 : i32
    %81 = tpu.dynamic_rotate %77 by %c127_i32_53 dim 1 : vector<32x128xf32>, i32 -> vector<32x128xf32>
    %82 = arith.maximumf %80, %81 : vector<32x128xf32>
    %c2_i32_54 = arith.constant 2 : i32
    %83 = tpu.dynamic_rotate %77 by %c2_i32_54 dim 1 : vector<32x128xf32>, i32 -> vector<32x128xf32>
    %84 = arith.maximumf %82, %83 : vector<32x128xf32>
    %c126_i32_55 = arith.constant 126 : i32
    %85 = tpu.dynamic_rotate %77 by %c126_i32_55 dim 1 : vector<32x128xf32>, i32 -> vector<32x128xf32>
    %86 = arith.maximumf %84, %85 : vector<32x128xf32>
    %c1_i32_56 = arith.constant 1 : i32
    %87 = tpu.dynamic_rotate %78 by %c1_i32_56 dim 1 : vector<32x128xf32>, i32 -> vector<32x128xf32>
    %88 = arith.maximumf %78, %87 : vector<32x128xf32>
    %c127_i32_57 = arith.constant 127 : i32
    %89 = tpu.dynamic_rotate %78 by %c127_i32_57 dim 1 : vector<32x128xf32>, i32 -> vector<32x128xf32>
    %90 = arith.maximumf %88, %89 : vector<32x128xf32>
    %c2_i32_58 = arith.constant 2 : i32
    %91 = tpu.dynamic_rotate %78 by %c2_i32_58 dim 1 : vector<32x128xf32>, i32 -> vector<32x128xf32>
    %92 = arith.maximumf %90, %91 : vector<32x128xf32>
    %c126_i32_59 = arith.constant 126 : i32
    %93 = tpu.dynamic_rotate %78 by %c126_i32_59 dim 1 : vector<32x128xf32>, i32 -> vector<32x128xf32>
    %94 = arith.maximumf %92, %93 : vector<32x128xf32>
    %95 = tpu.concatenate %86, %94 in 1 : vector<32x128xf32>, vector<32x128xf32> -> vector<32x256xf32>
    %c1_i32_60 = arith.constant 1 : i32
    %96 = tpu.dynamic_rotate %95 by %c1_i32_60 dim 0 : vector<32x256xf32>, i32 -> vector<32x256xf32>
    %97 = arith.maximumf %95, %96 : vector<32x256xf32>
    %c31_i32_61 = arith.constant 31 : i32
    %98 = tpu.dynamic_rotate %95 by %c31_i32_61 dim 0 : vector<32x256xf32>, i32 -> vector<32x256xf32>
    %99 = arith.maximumf %97, %98 : vector<32x256xf32>
    %c2_i32_62 = arith.constant 2 : i32
    %100 = tpu.dynamic_rotate %95 by %c2_i32_62 dim 0 : vector<32x256xf32>, i32 -> vector<32x256xf32>
    %101 = arith.maximumf %99, %100 : vector<32x256xf32>
    %c30_i32_63 = arith.constant 30 : i32
    %102 = tpu.dynamic_rotate %95 by %c30_i32_63 dim 0 : vector<32x256xf32>, i32 -> vector<32x256xf32>
    %103 = arith.maximumf %101, %102 : vector<32x256xf32>
    %cst_64 = arith.constant dense<0.000000e+00> : vector<16x256xf32>
    %104 = tpu.matmul %10, %103, %cst_64 {dimension_numbers = #tpu.dot_dimension_numbers<[1], [0], [0], [1], [0, 0, 1, 1], [], []>} : vector<16x32xf32>, vector<32x256xf32>, vector<16x256xf32> -> vector<16x256xf32>
    %cst_65 = arith.constant dense<0.000000e+00> : vector<16x128xf32>
    %105 = tpu.matmul %104, %11, %cst_65 {dimension_numbers = #tpu.dot_dimension_numbers<[1], [0], [0], [1], [0, 0, 1, 1], [], []>} : vector<16x256xf32>, vector<256x128xf32>, vector<16x128xf32> -> vector<16x128xf32>
    %c1_i32_66 = arith.constant 1 : i32
    %106 = tpu.dynamic_rotate %105 by %c1_i32_66 dim 1 : vector<16x128xf32>, i32 -> vector<16x128xf32>
    %107 = arith.maximumf %105, %106 : vector<16x128xf32>
    %c127_i32_67 = arith.constant 127 : i32
    %108 = tpu.dynamic_rotate %105 by %c127_i32_67 dim 1 : vector<16x128xf32>, i32 -> vector<16x128xf32>
    %109 = arith.maximumf %107, %108 : vector<16x128xf32>
    %c2_i32_68 = arith.constant 2 : i32
    %110 = tpu.dynamic_rotate %105 by %c2_i32_68 dim 1 : vector<16x128xf32>, i32 -> vector<16x128xf32>
    %111 = arith.maximumf %109, %110 : vector<16x128xf32>
    %c126_i32_69 = arith.constant 126 : i32
    %112 = tpu.dynamic_rotate %105 by %c126_i32_69 dim 1 : vector<16x128xf32>, i32 -> vector<16x128xf32>
    %113 = arith.maximumf %111, %112 : vector<16x128xf32>
    %c1_i32_70 = arith.constant 1 : i32
    %114 = tpu.dynamic_rotate %113 by %c1_i32_70 dim 0 : vector<16x128xf32>, i32 -> vector<16x128xf32>
    %115 = arith.maximumf %113, %114 : vector<16x128xf32>
    %c15_i32_71 = arith.constant 15 : i32
    %116 = tpu.dynamic_rotate %113 by %c15_i32_71 dim 0 : vector<16x128xf32>, i32 -> vector<16x128xf32>
    %117 = arith.maximumf %115, %116 : vector<16x128xf32>
    %c2_i32_72 = arith.constant 2 : i32
    %118 = tpu.dynamic_rotate %113 by %c2_i32_72 dim 0 : vector<16x128xf32>, i32 -> vector<16x128xf32>
    %119 = arith.maximumf %117, %118 : vector<16x128xf32>
    %c14_i32_73 = arith.constant 14 : i32
    %120 = tpu.dynamic_rotate %113 by %c14_i32_73 dim 0 : vector<16x128xf32>, i32 -> vector<16x128xf32>
    %121 = arith.maximumf %119, %120 : vector<16x128xf32>
    %cst_74 = arith.constant dense<0.000000e+00> : vector<32x128xf32>
    %122 = tpu.matmul %12, %121, %cst_74 {dimension_numbers = #tpu.dot_dimension_numbers<[1], [0], [0], [1], [0, 0, 1, 1], [], []>} : vector<32x16xf32>, vector<16x128xf32>, vector<32x128xf32> -> vector<32x128xf32>
    %cst_75 = arith.constant dense<0.000000e+00> : vector<32x256xf32>
    %123 = tpu.matmul %122, %13, %cst_75 {dimension_numbers = #tpu.dot_dimension_numbers<[1], [0], [0], [1], [0, 0, 1, 1], [], []>} : vector<32x128xf32>, vector<128x256xf32>, vector<32x256xf32> -> vector<32x256xf32>
    %124 = vector.extract_strided_slice %123 {offsets = [0, 0], sizes = [32, 128], strides = [1, 1]} : vector<32x256xf32> to vector<32x128xf32>
    %125 = vector.extract_strided_slice %123 {offsets = [0, 128], sizes = [32, 128], strides = [1, 1]} : vector<32x256xf32> to vector<32x128xf32>
    %126 = arith.subf %124, %125 : vector<32x128xf32>
    %127 = arith.mulf %126, %7 : vector<32x128xf32>
    %128 = arith.addf %125, %127 : vector<32x128xf32>
    %c0_76 = arith.constant 0 : index
    %c1_77 = arith.constant 1 : index
    %c0_78 = arith.constant 0 : index
    %c0_79 = arith.constant 0 : index
    %129 = vector.load %arg11[%c0_76, %c1_77, %c0_78, %c0_79] : memref<1x2x32x128xf32, #tpu.memory_space<vmem>>, vector<1x1x32x128xf32>
    %130 = vector.shape_cast %129 : vector<1x1x32x128xf32> to vector<32x128xf32>
    %131 = vector.shape_cast %128 : vector<32x128xf32> to vector<1x1x32x128xf32>
    tpu.vector_store %arg11[%c0_76, %c1_77, %c0_78, %c0_79], %131 {strides = array<i32>} : memref<1x2x32x128xf32, #tpu.memory_space<vmem>>, vector<1x1x32x128xf32>,
    return
  }
  func.func @transform_0(%arg0: i32, %arg1: i32) -> (i32, i32, i32) {
    %c0_i32 = arith.constant 0 : i32
    %c0_i32_0 = arith.constant 0 : i32
    return %arg0, %arg1, %c0_i32 : i32, i32, i32
  }
  func.func @transform_1(%arg0: i32, %arg1: i32) -> (i32, i32, i32, i32) {
    %c0_i32 = arith.constant 0 : i32
    %c0_i32_0 = arith.constant 0 : i32
    %c0_i32_1 = arith.constant 0 : i32
    %c0_i32_2 = arith.constant 0 : i32
    return %c0_i32, %arg0, %c0_i32_0, %c0_i32_1 : i32, i32, i32, i32
  }
  func.func @transform_2(%arg0: i32, %arg1: i32) -> (i32, i32) {
    %c0_i32 = arith.constant 0 : i32
    %c0_i32_0 = arith.constant 0 : i32
    %c0_i32_1 = arith.constant 0 : i32
    return %c0_i32, %c0_i32_0 : i32, i32
  }
  func.func @transform_3(%arg0: i32, %arg1: i32) -> (i32, i32) {
    %c0_i32 = arith.constant 0 : i32
    %c0_i32_0 = arith.constant 0 : i32
    %c0_i32_1 = arith.constant 0 : i32
    return %c0_i32, %c0_i32_0 : i32, i32
  }
  func.func @transform_4(%arg0: i32, %arg1: i32) -> (i32, i32) {
    %c0_i32 = arith.constant 0 : i32
    %c0_i32_0 = arith.constant 0 : i32
    %c0_i32_1 = arith.constant 0 : i32
    return %c0_i32, %c0_i32_0 : i32, i32
  }
  func.func @transform_5(%arg0: i32, %arg1: i32) -> (i32, i32) {
    %c0_i32 = arith.constant 0 : i32
    %c0_i32_0 = arith.constant 0 : i32
    %c0_i32_1 = arith.constant 0 : i32
    return %c0_i32, %c0_i32_0 : i32, i32
  }
  func.func @transform_6(%arg0: i32, %arg1: i32) -> (i32, i32) {
    %c0_i32 = arith.constant 0 : i32
    %c0_i32_0 = arith.constant 0 : i32
    %c0_i32_1 = arith.constant 0 : i32
    return %c0_i32, %c0_i32_0 : i32, i32
  }
  func.func @transform_7(%arg0: i32, %arg1: i32) -> (i32, i32) {
    %c0_i32 = arith.constant 0 : i32
    %c0_i32_0 = arith.constant 0 : i32
    %c0_i32_1 = arith.constant 0 : i32
    return %c0_i32, %c0_i32_0 : i32, i32
  }
  func.func @transform_8(%arg0: i32, %arg1: i32) -> (i32, i32) {
    %c0_i32 = arith.constant 0 : i32
    %c0_i32_0 = arith.constant 0 : i32
    %c0_i32_1 = arith.constant 0 : i32
    return %c0_i32, %c0_i32_0 : i32, i32
  }
  func.func @transform_9(%arg0: i32, %arg1: i32) -> (i32, i32, i32, i32) {
    %c0_i32 = arith.constant 0 : i32
    %c0_i32_0 = arith.constant 0 : i32
    %c0_i32_1 = arith.constant 0 : i32
    return %arg0, %arg1, %c0_i32, %c0_i32_0 : i32, i32, i32, i32
  }
}

</mosaic_0001>

<llo_original>
// kernel: featmap_transfer.2
$region0: #{featmap_transfer.2}
  #allocation0 [shape = 'u32[]', space=smem, size = 0x4, offset = 0x4, fixed_abs, tag = 'smem constant byte address 0x4 - core index']
  #allocation1 [shape = 'u32[144,128]{1,0:T(1,128)}', space=vmem, size = 0x12000, scoped, tag = 'internal scratch']
  %s0 = inlined_call_operand.vmem [shape: f32[2,128,64], index: 0, kind: input, shape index: {}]
  %s1 = inlined_call_operand.vmem [shape: f32[64,32], index: 1, kind: input, shape index: {}]
  %s2 = inlined_call_operand.hbm [shape: f32[128,64], index: 2, kind: input, shape index: {}]
  %s3 = inlined_call_operand.vmem [shape: f32[2,2,32,32], index: 3, kind: output, shape index: {}]
  %s4 = sld [smem:[#allocation0]]
  $region49: #{featmap_transfer.2} parent=0
    _
  %s6 = ssub.s32 1, %s4
  %s7 = scalar_select 0, %s6, %s4
  $region1: #{featmap_transfer.2} parent=0
    #allocation2 [shape = 'u8[65536]{0}', space=vmem, size = 0x10000, scoped, tag = 'input window, operand 2, single buffered']
    #allocation3 [shape = 's32[2]{0}', space=sflag, size = 0x8, scoped, tag = 'scoped memory for featmap_transfer.2']
    %8 = vsyncpa [#allocation3], 0
    loop: start=0, step=1, limit=4
    $region2: #{featmap_transfer.2} parent=1 // loop_pre_header
      _
    $region3: #{featmap_transfer.2} parent=1 // loop_header
      %s10 = sphi 0, %s14
      %p11 = scmp.ge.s32.totalorder %s10, 4
      %s20 = sphi 0, %s22
      %s23 = sphi 0, %s20
      %s24 = sphi 0, %s23
      %s40 = sphi 0, %s24
      %s44 = sphi 0, %s44
      %s46 = sphi 0, %s44
      %s47 = sphi 0, %s46
      %s61 = sphi 0, %s47
      %s65 = sphi 0, %s65
      %s67 = sphi 0, %s65
      %s68 = sphi 0, %s67
      %s82 = sphi 0, %s68
      %s88 = sphi 0, %s90
      %s91 = sphi 0, %s88
      %s92 = sphi 0, %s91
      %s108 = sphi 0, %s92
    $region4: #{featmap_transfer.2} parent=1 // loop_header_branch
      %13 = sbr.rel (%p11) target = $region8
    $region5: #{featmap_transfer.2} parent=1 // loop_body
      %s15 = ssub.s32 %s10, 1
      %s16 = ssub.s32 %s10, 2
      %s17 = sadd.s32 %s10, 1
      %s18 = ssub.s32 %s10, %s17
      %p19 = scmp.eq.s32.totalorder %s18, 0
      %s21 = sadd.s32 %s20, 1
      %s22 = scalar_select %p19, %s20, %s21
      %p25 = pneg %p19
      %p26 = scmp.eq.s32.totalorder %s10, 1
      %p27 = por %p25, %p26
      %p28 = scmp.ne.s32.totalorder %s20, %s23
      %p29 = scmp.eq.s32.totalorder %s10, 0
      %p30 = por %p28, %p29
      %p31 = scmp.ne.s32.totalorder %s20, %s23
      %p32 = scmp.eq.s32.totalorder %s15, 1
      %p33 = por %p31, %p32
      %p34 = scmp.ne.s32.totalorder %s23, %s24
      %p35 = scmp.eq.s32.totalorder %s15, 0
      %p36 = por %p34, %p35
      %p37 = scmp.ne.s32.totalorder %s23, %s24
      %p38 = scmp.eq.s32.totalorder %s16, 1
      %p39 = por %p37, %p38
      %p41 = scmp.ne.s32.totalorder %s24, %s40
      %p42 = scmp.eq.s32.totalorder %s16, 0
      %p43 = por %p41, %p42
      %s45 = sadd.s32 %s44, 1
      %p48 = scmp.eq.s32.totalorder %s10, 1
      %p49 = scmp.ne.s32.totalorder %s44, %s46
      %p50 = scmp.eq.s32.totalorder %s10, 0
      %p51 = por %p49, %p50
      %p52 = scmp.ne.s32.totalorder %s44, %s46
      %p53 = scmp.eq.s32.totalorder %s15, 1
      %p54 = por %p52, %p53
      %p55 = scmp.ne.s32.totalorder %s46, %s47
      %p56 = scmp.eq.s32.totalorder %s15, 0
      %p57 = por %p55, %p56
      %p58 = scmp.ne.s32.totalorder %s46, %s47
      %p59 = scmp.eq.s32.totalorder %s16, 1
      %p60 = por %p58, %p59
      %p62 = scmp.ne.s32.totalorder %s47, %s61
      %p63 = scmp.eq.s32.totalorder %s16, 0
      %p64 = por %p62, %p63
      %s66 = sadd.s32 %s65, 1
      %p69 = scmp.eq.s32.totalorder %s10, 1
      %p70 = scmp.ne.s32.totalorder %s65, %s67
      %p71 = scmp.eq.s32.totalorder %s10, 0
      %p72 = por %p70, %p71
      %p73 = scmp.ne.s32.totalorder %s65, %s67
      %p74 = scmp.eq.s32.totalorder %s15, 1
      %p75 = por %p73, %p74
      %p76 = scmp.ne.s32.totalorder %s67, %s68
      %p77 = scmp.eq.s32.totalorder %s15, 0
      %p78 = por %p76, %p77
      %p79 = scmp.ne.s32.totalorder %s67, %s68
      %p80 = scmp.eq.s32.totalorder %s16, 1
      %p81 = por %p79, %p80
      %p83 = scmp.ne.s32.totalorder %s68, %s82
      %p84 = scmp.eq.s32.totalorder %s16, 0
      %p85 = por %p83, %p84
      %s86 = ssub.s32 %s10, %s17
      %p87 = scmp.eq.s32.totalorder %s86, 0
      %s89 = sadd.s32 %s88, 1
      %s90 = scalar_select %p87, %s88, %s89
      %p93 = pneg %p87
      %p94 = scmp.eq.s32.totalorder %s10, 1
      %p95 = por %p93, %p94
      %p96 = scmp.ne.s32.totalorder %s88, %s91
      %p97 = scmp.eq.s32.totalorder %s10, 0
      %p98 = por %p96, %p97
      %p99 = scmp.ne.s32.totalorder %s88, %s91
      %p100 = scmp.eq.s32.totalorder %s15, 1
      %p101 = por %p99, %p100
      %p102 = scmp.ne.s32.totalorder %s91, %s92
      %p103 = scmp.eq.s32.totalorder %s15, 0
      %p104 = por %p102, %p103
      %p105 = scmp.ne.s32.totalorder %s91, %s92
      %p106 = scmp.eq.s32.totalorder %s16, 1
      %p107 = por %p105, %p106
      %p109 = scmp.ne.s32.totalorder %s92, %s108
      %p110 = scmp.eq.s32.totalorder %s16, 0
      %p111 = por %p109, %p110
      %p112 = scmp.le.s32.totalorder 1, %s10
      %p113 = scmp.lt.s32.totalorder %s10, 3
      %p114 = pnand %p112, %p113
      %p115 = pneg %p114
      // Predicated region
      $region9: #{featmap_transfer.2} parent=5 // pred_check
        _
      $region10: #{featmap_transfer.2} parent=5 // pred_check_branch
        %117 = sbr.rel (%p114) target = $region12
      $region11: #{featmap_transfer.2} parent=5 // pred_region
        %s118 = ssub.s32 %s10, 1
        // Predicated region
        $region13: #{featmap_transfer.2} parent=11 // pred_check
          %p119 = pneg %p57
        $region14: #{featmap_transfer.2} parent=11 // pred_check_branch
          %121 = sbr.rel (%p119) target = $region16
        $region15: #{featmap_transfer.2} parent=11 // pred_region
          _
        $region16: #{featmap_transfer.2} parent=11 // pred_fallthru
          _
        // Predicated region
        $region17: #{featmap_transfer.2} parent=11 // pred_check
          %p122 = pneg %p78
        $region18: #{featmap_transfer.2} parent=11 // pred_check_branch
          %124 = sbr.rel (%p122) target = $region20
        $region19: #{featmap_transfer.2} parent=11 // pred_region
          %s126 = ssub.s32 2048, 2048
          %127 = vsyncadd [#allocation3], %s126
          %s128 = sshll.u32 [#allocation2], 4
          %s129 = int_to_ptr.vmem [resolvable:$true] %s128
          %134 = dma.hbm_to_vmem [thread:$0]  %s2, 2048, %s129, [#allocation3], 128, 128, 8
        $region20: #{featmap_transfer.2} parent=11 // pred_fallthru
          _
      $region12: #{featmap_transfer.2} parent=5 // pred_fallthru
        _
      %p135 = scmp.lt.s32.totalorder %s10, 2
      // Predicated region
      $region21: #{featmap_transfer.2} parent=5 // pred_check
        %p136 = pneg %p135
      $region22: #{featmap_transfer.2} parent=5 // pred_check_branch
        %138 = sbr.rel (%p136) target = $region24
      $region23: #{featmap_transfer.2} parent=5 // pred_region
        // Predicated region
        $region25: #{featmap_transfer.2} parent=23 // pred_check
          %p139 = pneg %p30
        $region26: #{featmap_transfer.2} parent=23 // pred_check_branch
          %141 = sbr.rel (%p139) target = $region28
        $region27: #{featmap_transfer.2} parent=23 // pred_region
          %p142 = scmp.lt.s32.totalorder %s10, 1
          %s143 = scalar_select %p142, %s10, 1
          %s144 = smul.addr %s143, 16
          %s145 = smul.addr %s144, 8
          %s146 = scalar_lea.vmem %s0, %s145
        $region28: #{featmap_transfer.2} parent=23 // pred_fallthru
          _
      $region24: #{featmap_transfer.2} parent=5 // pred_fallthru
        _
      %p147 = scmp.le.s32.totalorder 1, %s10
      %p148 = scmp.lt.s32.totalorder %s10, 3
      %p149 = pnand %p147, %p148
      %p150 = pneg %p149
      // Predicated region
      $region29: #{featmap_transfer.2} parent=5 // pred_check
        _
      $region30: #{featmap_transfer.2} parent=5 // pred_check_branch
        %152 = sbr.rel (%p149) target = $region32
      $region31: #{featmap_transfer.2} parent=5 // pred_region
        %s153 = ssub.s32 %s10, 1
        // Predicated region
        $region33: #{featmap_transfer.2} parent=31 // pred_check
          %p154 = pneg %p78
        $region34: #{featmap_transfer.2} parent=31 // pred_check_branch
          %156 = sbr.rel (%p154) target = $region36
        $region35: #{featmap_transfer.2} parent=31 // pred_region
          %157 = dma.done [#allocation3], 2048
        $region36: #{featmap_transfer.2} parent=31 // pred_fallthru
          _
        %p158 = scmp.lt.s32.totalorder %s15, 1
        %s159 = scalar_select %p158, %s15, 1
        %s160 = smul.addr %s159, 16
        %s161 = smul.addr %s160, 8
        %s162 = scalar_lea.vmem %s0, %s161
        %p163 = pneg %p36
        %p164 = pneg %p33
        %p165 = pneg %p57
        %p166 = pneg %p54
        %p167 = pneg %p78
        %p168 = pneg %p75
        %p169 = pneg %p104
        %p170 = pneg %p101
        %p171 = scmp.lt.s32.totalorder %s15, 1
        %s172 = scalar_select %p171, %s15, 1
        %s173 = smul.addr %s172, 8
        %s174 = smul.addr %s173, 8
        %s175 = scalar_lea.vmem %s3, %s174
        %p176 = scmp.lt.s32.totalorder %s15, 1
        %s177 = scalar_select %p176, %s15, 1
        %s178 = smul.addr %s177, 16
        %s179 = smul.addr %s178, 8
        %s180 = scalar_lea.vmem %s0, %s179
        %p181 = scmp.lt.s32.totalorder %s15, 1
        %s182 = scalar_select %p181, %s15, 1
        %s183 = smul.addr %s182, 8
        %s184 = smul.addr %s183, 8
        %s185 = scalar_lea.vmem %s3, %s184
        %v186 = vld [vmem:[%s180] sm:$0xff]
        %v187 = vld [vmem:[%s180 + $0x8] sm:$0xff]
        %v188 = vld [vmem:[%s180 + $0x10] sm:$0xff]
        %v189 = vld [vmem:[%s180 + $0x18] sm:$0xff]
        %v190 = vld [vmem:[%s180 + $0x20] sm:$0xff]
        %v191 = vld [vmem:[%s180 + $0x28] sm:$0xff]
        %v192 = vld [vmem:[%s180 + $0x30] sm:$0xff]
        %v193 = vld [vmem:[%s180 + $0x38] sm:$0xff]
        %v194 = vld [vmem:[%s180 + $0x40] sm:$0xff]
        %v195 = vld [vmem:[%s180 + $0x48] sm:$0xff]
        %v196 = vld [vmem:[%s180 + $0x50] sm:$0xff]
        %v197 = vld [vmem:[%s180 + $0x58] sm:$0xff]
        %v198 = vld [vmem:[%s180 + $0x60] sm:$0xff]
        %v199 = vld [vmem:[%s180 + $0x68] sm:$0xff]
        %v200 = vld [vmem:[%s180 + $0x70] sm:$0xff]
        %v201 = vld [vmem:[%s180 + $0x78] sm:$0xff]
        %v202 = vld [vmem:[%s1] sm:$0xff]
        %v203 = vld [vmem:[%s1 + $0x8] sm:$0xff]
        %v204 = vld [vmem:[%s1 + $0x10] sm:$0xff]
        %v205 = vld [vmem:[%s1 + $0x18] sm:$0xff]
        %v206 = vld [vmem:[%s1 + $0x20] sm:$0xff]
        %v207 = vld [vmem:[%s1 + $0x28] sm:$0xff]
        %v208 = vld [vmem:[%s1 + $0x30] sm:$0xff]
        %v209 = vld [vmem:[%s1 + $0x38] sm:$0xff]
        %vm210 = vcmask 523264
        %v212 = vsel %vm210, %v186, 0
        %v215 = vsel %vm210, %v187, 0
        %v218 = vsel %vm210, %v188, 0
        %v221 = vsel %vm210, %v189, 0
        %v224 = vsel %vm210, %v190, 0
        %v227 = vsel %vm210, %v191, 0
        %v230 = vsel %vm210, %v192, 0
        %v233 = vsel %vm210, %v193, 0
        %v236 = vsel %vm210, %v194, 0
        %v239 = vsel %vm210, %v195, 0
        %v242 = vsel %vm210, %v196, 0
        %v245 = vsel %vm210, %v197, 0
        %v248 = vsel %vm210, %v198, 0
        %v251 = vsel %vm210, %v199, 0
        %v254 = vsel %vm210, %v200, 0
        %v257 = vsel %vm210, %v201, 0
        %259 = vmatprep.subr.mxu0 0.0
        %260 = vmatpush1.msra.mxu0 0.0
        %261 = vmatprep.subr.mxu0 0.0
        %262 = vmatpush1.msra.mxu0 0.0
        %263 = vmatprep.subr.mxu0 0.0
        %264 = vmatpush1.msra.mxu0 0.0
        %265 = vmatprep.subr.mxu0 0.0
        %266 = vmatpush1.msra.mxu0 0.0
        %267 = vmatprep.subr.mxu0 0.0
        %268 = vmatpush1.msra.mxu0 0.0
        %269 = vmatprep.subr.mxu0 0.0
        %270 = vmatpush1.msra.mxu0 0.0
        %271 = vmatprep.subr.mxu0 0.0
        %272 = vmatpush1.msra.mxu0 0.0
        %273 = vmatprep.subr.mxu0 0.0
        %274 = vmatpush1.msra.mxu0 0.0
        %275 = vmatprep.subr.mxu0 0.0
        %276 = vmatpush1.msra.mxu0 %v209
        %277 = vmatprep.subr.mxu0 0.0
        %278 = vmatpush1.msra.mxu0 %v208
        %279 = vmatprep.subr.mxu0 0.0
        %280 = vmatpush1.msra.mxu0 %v207
        %281 = vmatprep.subr.mxu0 0.0
        %282 = vmatpush1.msra.mxu0 %v206
        %283 = vmatprep.subr.mxu0 0.0
        %284 = vmatpush1.msra.mxu0 %v205
        %285 = vmatprep.subr.mxu0 0.0
        %286 = vmatpush1.msra.mxu0 %v204
        %287 = vmatprep.subr.mxu0 0.0
        %288 = vmatpush1.msra.mxu0 %v203
        %289 = vmatprep.subr.mxu0 0.0
        %290 = vmatpush1.msra.mxu0 %v202
        %291 = vmatprep.subr.mxu0 0.0
        %292 = vmatpush2.msra.mxu0 0.0
        %293 = vmatprep.subr.mxu0 0.0
        %294 = vmatpush2.msra.mxu0 0.0
        %295 = vmatprep.subr.mxu0 0.0
        %296 = vmatpush2.msra.mxu0 0.0
        %297 = vmatprep.subr.mxu0 0.0
        %298 = vmatpush2.msra.mxu0 0.0
        %299 = vmatprep.subr.mxu0 0.0
        %300 = vmatpush2.msra.mxu0 0.0
        %301 = vmatprep.subr.mxu0 0.0
        %302 = vmatpush2.msra.mxu0 0.0
        %303 = vmatprep.subr.mxu0 0.0
        %304 = vmatpush2.msra.mxu0 0.0
        %305 = vmatprep.subr.mxu0 0.0
        %306 = vmatpush2.msra.mxu0 0.0
        %307 = vmatprep.subr.mxu0 0.0
        %308 = vmatpush2.msra.mxu0 0.0
        %309 = vmatprep.subr.mxu0 0.0
        %310 = vmatpush2.msra.mxu0 0.0
        %311 = vmatprep.subr.mxu0 0.0
        %312 = vmatpush2.msra.mxu0 0.0
        %313 = vmatprep.subr.mxu0 0.0
        %314 = vmatpush2.msra.mxu0 0.0
        %315 = vmatprep.subr.mxu0 0.0
        %316 = vmatpush2.msra.mxu0 0.0
        %317 = vmatprep.subr.mxu0 0.0
        %318 = vmatpush2.msra.mxu0 0.0
        %319 = vmatprep.subr.mxu0 0.0
        %320 = vmatpush2.msra.mxu0 0.0
        %321 = vmatprep.subr.mxu0 0.0
        %322 = vmatpush2.msra.mxu0 0.0
        %323 = vmatprep.mubr.f32.mxu0 0.0
        %324 = vmatmul.mubr.f32.gmra.mxu0 %v212
        %v325 = vpop.f32.mrf.mxu0
        %v326 = vadd.f32 0.0, %v325
        %v327 = vpop.f32.mrf.mxu0
        %328 = vmatprep.mubr.f32.mxu0 0.0
        %329 = vmatmul.mubr.f32.gmra.mxu0 %v215
        %v330 = vpop.f32.mrf.mxu0
        %v331 = vadd.f32 0.0, %v330
        %v332 = vpop.f32.mrf.mxu0
        %333 = vmatprep.mubr.f32.mxu0 0.0
        %334 = vmatmul.mubr.f32.gmra.mxu0 %v218
        %v335 = vpop.f32.mrf.mxu0
        %v336 = vadd.f32 0.0, %v335
        %v337 = vpop.f32.mrf.mxu0
        %338 = vmatprep.mubr.f32.mxu0 0.0
        %339 = vmatmul.mubr.f32.gmra.mxu0 %v221
        %v340 = vpop.f32.mrf.mxu0
        %v341 = vadd.f32 0.0, %v340
        %v342 = vpop.f32.mrf.mxu0
        %343 = vmatprep.mubr.f32.mxu0 0.0
        %344 = vmatmul.mubr.f32.gmra.mxu0 %v224
        %v345 = vpop.f32.mrf.mxu0
        %v346 = vadd.f32 0.0, %v345
        %v347 = vpop.f32.mrf.mxu0
        %348 = vmatprep.mubr.f32.mxu0 0.0
        %349 = vmatmul.mubr.f32.gmra.mxu0 %v227
        %v350 = vpop.f32.mrf.mxu0
        %v351 = vadd.f32 0.0, %v350
        %v352 = vpop.f32.mrf.mxu0
        %353 = vmatprep.mubr.f32.mxu0 0.0
        %354 = vmatmul.mubr.f32.gmra.mxu0 %v230
        %v355 = vpop.f32.mrf.mxu0
        %v356 = vadd.f32 0.0, %v355
        %v357 = vpop.f32.mrf.mxu0
        %358 = vmatprep.mubr.f32.mxu0 0.0
        %359 = vmatmul.mubr.f32.gmra.mxu0 %v233
        %v360 = vpop.f32.mrf.mxu0
        %v361 = vadd.f32 0.0, %v360
        %v362 = vpop.f32.mrf.mxu0
        %363 = vmatprep.mubr.f32.mxu0 0.0
        %364 = vmatmul.mubr.f32.gmra.mxu0 %v236
        %v365 = vpop.f32.mrf.mxu0
        %v366 = vadd.f32 0.0, %v365
        %v367 = vpop.f32.mrf.mxu0
        %368 = vmatprep.mubr.f32.mxu0 0.0
        %369 = vmatmul.mubr.f32.gmra.mxu0 %v239
        %v370 = vpop.f32.mrf.mxu0
        %v371 = vadd.f32 0.0, %v370
        %v372 = vpop.f32.mrf.mxu0
        %373 = vmatprep.mubr.f32.mxu0 0.0
        %374 = vmatmul.mubr.f32.gmra.mxu0 %v242
        %v375 = vpop.f32.mrf.mxu0
        %v376 = vadd.f32 0.0, %v375
        %v377 = vpop.f32.mrf.mxu0
        %378 = vmatprep.mubr.f32.mxu0 0.0
        %379 = vmatmul.mubr.f32.gmra.mxu0 %v245
        %v380 = vpop.f32.mrf.mxu0
        %v381 = vadd.f32 0.0, %v380
        %v382 = vpop.f32.mrf.mxu0
        %383 = vmatprep.mubr.f32.mxu0 0.0
        %384 = vmatmul.mubr.f32.gmra.mxu0 %v248
        %v385 = vpop.f32.mrf.mxu0
        %v386 = vadd.f32 0.0, %v385
        %v387 = vpop.f32.mrf.mxu0
        %388 = vmatprep.mubr.f32.mxu0 0.0
        %389 = vmatmul.mubr.f32.gmra.mxu0 %v251
        %v390 = vpop.f32.mrf.mxu0
        %v391 = vadd.f32 0.0, %v390
        %v392 = vpop.f32.mrf.mxu0
        %393 = vmatprep.mubr.f32.mxu0 0.0
        %394 = vmatmul.mubr.f32.gmra.mxu0 %v254
        %v395 = vpop.f32.mrf.mxu0
        %v396 = vadd.f32 0.0, %v395
        %v397 = vpop.f32.mrf.mxu0
        %398 = vmatprep.mubr.f32.mxu0 0.0
        %399 = vmatmul.mubr.f32.gmra.mxu0 %v257
        %v400 = vpop.f32.mrf.mxu0
        %v401 = vadd.f32 0.0, %v400
        %v402 = vpop.f32.mrf.mxu0
        %403 = vdwg.mxu0
        %v404 = vld [vmem:[#allocation2] sm:$0xff]
        %v405 = vld [vmem:[#allocation2 + $0x8] sm:$0xff]
        %v406 = vld [vmem:[#allocation2 + $0x10] sm:$0xff]
        %v407 = vld [vmem:[#allocation2 + $0x18] sm:$0xff]
        %v408 = vld [vmem:[#allocation2 + $0x20] sm:$0xff]
        %v409 = vld [vmem:[#allocation2 + $0x28] sm:$0xff]
        %v410 = vld [vmem:[#allocation2 + $0x30] sm:$0xff]
        %v411 = vld [vmem:[#allocation2 + $0x38] sm:$0xff]
        %v412 = vld [vmem:[#allocation2 + $0x40] sm:$0xff]
        %v413 = vld [vmem:[#allocation2 + $0x48] sm:$0xff]
        %v414 = vld [vmem:[#allocation2 + $0x50] sm:$0xff]
        %v415 = vld [vmem:[#allocation2 + $0x58] sm:$0xff]
        %v416 = vld [vmem:[#allocation2 + $0x60] sm:$0xff]
        %v417 = vld [vmem:[#allocation2 + $0x68] sm:$0xff]
        %v418 = vld [vmem:[#allocation2 + $0x70] sm:$0xff]
        %v419 = vld [vmem:[#allocation2 + $0x78] sm:$0xff]
        %420 = vxpose.xlu0.b32.start [1/16] %v326, 128
        %421 = vxpose.xlu0.b32.cont [2/16] %v331, 128
        %422 = vxpose.xlu0.b32.cont [3/16] %v336, 128
        %423 = vxpose.xlu0.b32.cont [4/16] %v341, 128
        %424 = vxpose.xlu0.b32.cont [5/16] %v346, 128
        %425 = vxpose.xlu0.b32.cont [6/16] %v351, 128
        %426 = vxpose.xlu0.b32.cont [7/16] %v356, 128
        %427 = vxpose.xlu0.b32.cont [8/16] %v361, 128
        %428 = vxpose.xlu0.b32.cont [9/16] %v366, 128
        %429 = vxpose.xlu0.b32.cont [10/16] %v371, 128
        %430 = vxpose.xlu0.b32.cont [11/16] %v376, 128
        %431 = vxpose.xlu0.b32.cont [12/16] %v381, 128
        %432 = vxpose.xlu0.b32.cont [13/16] %v386, 128
        %433 = vxpose.xlu0.b32.cont [14/16] %v391, 128
        %434 = vxpose.xlu0.b32.cont [15/16] %v396, 128
        %435 = vxpose.xlu0.b32.end [16/16] %v401, 128
        %v436 = vpop.trf.xlu0
        %v437 = vpop.trf.xlu0
        %v438 = vpop.trf.xlu0
        %v439 = vpop.trf.xlu0
        %v440 = vpop.trf.xlu0
        %v441 = vpop.trf.xlu0
        %v442 = vpop.trf.xlu0
        %v443 = vpop.trf.xlu0
        %v444 = vpop.trf.xlu0
        %v445 = vpop.trf.xlu0
        %v446 = vpop.trf.xlu0
        %v447 = vpop.trf.xlu0
        %v448 = vpop.trf.xlu0
        %v449 = vpop.trf.xlu0
        %v450 = vpop.trf.xlu0
        %v451 = vpop.trf.xlu0
        %452 = vmatprep.subr.mxu0 0.0
        %453 = vmatpush1.msra.mxu0 %v419
        %454 = vmatprep.subr.mxu0 0.0
        %455 = vmatpush1.msra.mxu0 %v418
        %456 = vmatprep.subr.mxu0 0.0
        %457 = vmatpush1.msra.mxu0 %v417
        %458 = vmatprep.subr.mxu0 0.0
        %459 = vmatpush1.msra.mxu0 %v416
        %460 = vmatprep.subr.mxu0 0.0
        %461 = vmatpush1.msra.mxu0 %v415
        %462 = vmatprep.subr.mxu0 0.0
        %463 = vmatpush1.msra.mxu0 %v414
        %464 = vmatprep.subr.mxu0 0.0
        %465 = vmatpush1.msra.mxu0 %v413
        %466 = vmatprep.subr.mxu0 0.0
        %467 = vmatpush1.msra.mxu0 %v412
        %468 = vmatprep.subr.mxu0 0.0
        %469 = vmatpush1.msra.mxu0 %v411
        %470 = vmatprep.subr.mxu0 0.0
        %471 = vmatpush1.msra.mxu0 %v410
        %472 = vmatprep.subr.mxu0 0.0
        %473 = vmatpush1.msra.mxu0 %v409
        %474 = vmatprep.subr.mxu0 0.0
        %475 = vmatpush1.msra.mxu0 %v408
        %476 = vmatprep.subr.mxu0 0.0
        %477 = vmatpush1.msra.mxu0 %v407
        %478 = vmatprep.subr.mxu0 0.0
        %479 = vmatpush1.msra.mxu0 %v406
        %480 = vmatprep.subr.mxu0 0.0
        %481 = vmatpush1.msra.mxu0 %v405
        %482 = vmatprep.subr.mxu0 0.0
        %483 = vmatpush1.msra.mxu0 %v404
        %484 = vmatprep.subr.mxu0 0.0
        %485 = vmatpush2.msra.mxu0 0.0
        %486 = vmatprep.subr.mxu0 0.0
        %487 = vmatpush2.msra.mxu0 0.0
        %488 = vmatprep.subr.mxu0 0.0
        %489 = vmatpush2.msra.mxu0 0.0
        %490 = vmatprep.subr.mxu0 0.0
        %491 = vmatpush2.msra.mxu0 0.0
        %492 = vmatprep.subr.mxu0 0.0
        %493 = vmatpush2.msra.mxu0 0.0
        %494 = vmatprep.subr.mxu0 0.0
        %495 = vmatpush2.msra.mxu0 0.0
        %496 = vmatprep.subr.mxu0 0.0
        %497 = vmatpush2.msra.mxu0 0.0
        %498 = vmatprep.subr.mxu0 0.0
        %499 = vmatpush2.msra.mxu0 0.0
        %500 = vmatprep.subr.mxu0 0.0
        %501 = vmatpush2.msra.mxu0 0.0
        %502 = vmatprep.subr.mxu0 0.0
        %503 = vmatpush2.msra.mxu0 0.0
        %504 = vmatprep.subr.mxu0 0.0
        %505 = vmatpush2.msra.mxu0 0.0
        %506 = vmatprep.subr.mxu0 0.0
        %507 = vmatpush2.msra.mxu0 0.0
        %508 = vmatprep.subr.mxu0 0.0
        %509 = vmatpush2.msra.mxu0 0.0
        %510 = vmatprep.subr.mxu0 0.0
        %511 = vmatpush2.msra.mxu0 0.0
        %512 = vmatprep.subr.mxu0 0.0
        %513 = vmatpush2.msra.mxu0 0.0
        %514 = vmatprep.subr.mxu0 0.0
        %515 = vmatpush2.msra.mxu0 0.0
        %516 = vmatprep.mubr.f32.mxu0 0.0
        %517 = vmatmul.mubr.f32.gmra.mxu0 %v436
        %v518 = vpop.f32.mrf.mxu0
        %v519 = vadd.f32 0.0, %v518
        %v520 = vpop.f32.mrf.mxu0
        %521 = vmatprep.mubr.f32.mxu0 0.0
        %522 = vmatmul.mubr.f32.gmra.mxu0 %v437
        %v523 = vpop.f32.mrf.mxu0
        %v524 = vadd.f32 0.0, %v523
        %v525 = vpop.f32.mrf.mxu0
        %526 = vmatprep.mubr.f32.mxu0 0.0
        %527 = vmatmul.mubr.f32.gmra.mxu0 %v438
        %v528 = vpop.f32.mrf.mxu0
        %v529 = vadd.f32 0.0, %v528
        %v530 = vpop.f32.mrf.mxu0
        %531 = vmatprep.mubr.f32.mxu0 0.0
        %532 = vmatmul.mubr.f32.gmra.mxu0 %v439
        %v533 = vpop.f32.mrf.mxu0
        %v534 = vadd.f32 0.0, %v533
        %v535 = vpop.f32.mrf.mxu0
        %536 = vdwg.mxu0
        %v537 = vsel %vm210, %v519, inf
        %v538 = vsel %vm210, %v524, inf
        %v539 = vsel %vm210, %v529, inf
        %v540 = vsel %vm210, %v534, inf
        %v541 = vmin.f32 %v537, %v538
        %v542 = vmin.f32 %v539, %v540
        %v543 = vmin.f32 %v541, %v542
        %544 = vmin.xlane.f32.xlu0 %v543
        %v545 = vpop.xlane.xlu0 %544
        %v546 = vrot.slane %v545, 4
        %v547 = vmin.f32 %v545, %v546
        %v548 = vrot.slane %v547, 2
        %v549 = vmin.f32 %v547, %v548
        %v550 = vrot.slane %v549, 1
        %v551 = vmin.f32 %v549, %v550
        %s552 = vtos %v551
        %v553 = vstv %s552
        %v554 = vsel %vm210, %v519, -inf
        %v555 = vsel %vm210, %v524, -inf
        %v556 = vsel %vm210, %v529, -inf
        %v557 = vsel %vm210, %v534, -inf
        %v558 = vmax.f32 %v554, %v555
        %v559 = vmax.f32 %v556, %v557
        %v560 = vmax.f32 %v558, %v559
        %561 = vmax.xlane.f32.xlu0 %v560
        %v562 = vpop.xlane.xlu0 %561
        %v563 = vrot.slane %v562, 4
        %v564 = vmax.f32 %v562, %v563
        %v565 = vrot.slane %v564, 2
        %v566 = vmax.f32 %v564, %v565
        %v567 = vrot.slane %v566, 1
        %v568 = vmax.f32 %v566, %v567
        %s569 = vtos %v568
        %v570 = vstv %s569
        %v571 = vsub.f32 %v519, %v553
        %v572 = vsub.f32 %v524, %v553
        %v573 = vsub.f32 %v529, %v553
        %v574 = vsub.f32 %v534, %v553
        %v575 = vsub.f32 %v570, %v553
        %v576 = vmax.f32 %v575, 1e-12
        %v577 = vrcp.pop %v576
        %v578 = vmul.f32 %v571, %v577
        %v579 = vmul.f32 %v572, %v577
        %v580 = vmul.f32 %v573, %v577
        %v581 = vmul.f32 %v574, %v577
        %vm582 = vcmask 261120
        %583 = vst.msk [vmem:[%s185] sm:$0xff] %vm582, %v578
        %584 = vst.msk [vmem:[%s185 + $0x8] sm:$0xff] %vm582, %v579
        %585 = vst.msk [vmem:[%s185 + $0x10] sm:$0xff] %vm582, %v580
        %586 = vst.msk [vmem:[%s185 + $0x18] sm:$0xff] %vm582, %v581
        %591 = vrot.lane.b32.xlu0 %v578, 96
        %v592 = vpop.permute.xlu0 %591
        %593 = vrot.lane.b32.xlu0 %v579, 96
        %v594 = vpop.permute.xlu0 %593
        %595 = vrot.lane.b32.xlu0 %v580, 96
        %v596 = vpop.permute.xlu0 %595
        %597 = vrot.lane.b32.xlu0 %v581, 96
        %v598 = vpop.permute.xlu0 %597
        %s603 = scalar_lea.vmem %s185, 32
        %604 = vst.msk [vmem:[%s603] sm:$0xff] %vm582, %v592
        %605 = vst.msk [vmem:[%s603 + $0x8] sm:$0xff] %vm582, %v594
        %606 = vst.msk [vmem:[%s603 + $0x10] sm:$0xff] %vm582, %v596
        %607 = vst.msk [vmem:[%s603 + $0x18] sm:$0xff] %vm582, %v598
        %p608 = scmp.lt.s32.totalorder %s15, 1
        %s609 = scalar_select %p608, %s15, 1
        %s610 = smul.addr %s609, 8
        %s611 = smul.addr %s610, 8
        %s612 = scalar_lea.vmem %s3, %s611
        // Predicated region
        $region37: #{featmap_transfer.2} parent=31 // pred_check
          %p613 = pneg %p101
        $region38: #{featmap_transfer.2} parent=31 // pred_check_branch
          %615 = sbr.rel (%p613) target = $region40
        $region39: #{featmap_transfer.2} parent=31 // pred_region
          _
        $region40: #{featmap_transfer.2} parent=31 // pred_fallthru
          _
      $region32: #{featmap_transfer.2} parent=5 // pred_fallthru
        _
      %p616 = scmp.le.s32.totalorder 2, %s10
      // Predicated region
      $region41: #{featmap_transfer.2} parent=5 // pred_check
        %p617 = pneg %p616
      $region42: #{featmap_transfer.2} parent=5 // pred_check_branch
        %619 = sbr.rel (%p617) target = $region44
      $region43: #{featmap_transfer.2} parent=5 // pred_region
        %s620 = ssub.s32 %s10, 2
        // Predicated region
        $region45: #{featmap_transfer.2} parent=43 // pred_check
          %p621 = pneg %p107
        $region46: #{featmap_transfer.2} parent=43 // pred_check_branch
          %623 = sbr.rel (%p621) target = $region48
        $region47: #{featmap_transfer.2} parent=43 // pred_region
          %p624 = scmp.lt.s32.totalorder %s16, 1
          %s625 = scalar_select %p624, %s16, 1
          %s626 = smul.addr %s625, 8
          %s627 = smul.addr %s626, 8
          %s628 = scalar_lea.vmem %s3, %s627
        $region48: #{featmap_transfer.2} parent=43 // pred_fallthru
          _
      $region44: #{featmap_transfer.2} parent=5 // pred_fallthru
        _
    $region6: #{featmap_transfer.2} parent=1 // loop_footer
      %s14 = sadd.s32 1, %s10
    $region7: #{featmap_transfer.2} parent=1 // loop_footer_branch
      %9 = sbr.rel target = $region3
    $region8: #{featmap_transfer.2} parent=1 // loop_exit
      _
    %629 = vsyncpa [#allocation3], 1
    %s630 = scalar_lea.sflag [#allocation3], 1
    %631 = vsyncpa %s630, 1

// kernel: featmap_transfer.3
$region0: #{featmap_transfer.3}
  #allocation0 [shape = 'u32[]', space=smem, size = 0x4, offset = 0x4, fixed_abs, tag = 'smem constant byte address 0x4 - core index']
  #allocation1 [shape = 'u32[144,128]{1,0:T(1,128)}', space=vmem, size = 0x12000, scoped, tag = 'internal scratch']
  %s0 = inlined_call_operand.vmem [shape: f32[2,512,64], index: 0, kind: input, shape index: {}]
  %s1 = inlined_call_operand.vmem [shape: f32[2,2,32,32], index: 1, kind: input, shape index: {}]
  %s2 = inlined_call_operand.vmem [shape: f32[64,32], index: 2, kind: input, shape index: {}]
  %s3 = inlined_call_operand.hbm [shape: f32[256,128], index: 3, kind: input, shape index: {}]
  %s4 = inlined_call_operand.hbm [shape: f32[32,128], index: 4, kind: input, shape index: {}]
  %s5 = inlined_call_operand.hbm [shape: f32[16,32], index: 5, kind: input, shape index: {}]
  %s6 = inlined_call_operand.hbm [shape: f32[256,128], index: 6, kind: input, shape index: {}]
  %s7 = inlined_call_operand.hbm [shape: f32[32,16], index: 7, kind: input, shape index: {}]
  %s8 = inlined_call_operand.hbm [shape: f32[128,256], index: 8, kind: input, shape index: {}]
  %s9 = inlined_call_operand.vmem [shape: f32[2,2,32,128], index: 9, kind: output, shape index: {}]
  %s10 = sld [smem:[#allocation0]]
  $region131: #{featmap_transfer.3} parent=0
    _
  %s12 = ssub.s32 1, %s10
  %s13 = scalar_select 0, %s12, %s10
  $region1: #{featmap_transfer.3} parent=0
    #allocation2 [shape = 'u8[65536]{0}', space=vmem, size = 0x10000, scoped, tag = 'input window, operand 1']
    #allocation3 [shape = 'u8[131072]{0}', space=vmem, size = 0x20000, scoped, tag = 'input window, operand 3, single buffered']
    #allocation4 [shape = 's32[2]{0}', space=sflag, size = 0x8, scoped, tag = 'scoped memory for featmap_transfer.3']
    #allocation5 [shape = 'u8[16384]{0}', space=vmem, size = 0x4000, scoped, tag = 'input window, operand 4, single buffered']
    #allocation6 [shape = 's32[1]{0}', space=sflag, size = 0x4, scoped, tag = 'scoped memory for featmap_transfer.3']
    #allocation7 [shape = 'u8[8192]{0}', space=vmem, size = 0x2000, scoped, tag = 'input window, operand 5, single buffered']
    #allocation8 [shape = 'u8[131072]{0}', space=vmem, size = 0x20000, scoped, tag = 'input window, operand 6, single buffered']
    #allocation9 [shape = 's32[1]{0}', space=sflag, size = 0x4, scoped, tag = 'scoped memory for featmap_transfer.3']
    #allocation10 [shape = 'u8[16384]{0}', space=vmem, size = 0x4000, scoped, tag = 'input window, operand 7, single buffered']
    #allocation11 [shape = 'u8[131072]{0}', space=vmem, size = 0x20000, scoped, tag = 'input window, operand 8, single buffered']
    #allocation12 [shape = 's32[1]{0}', space=sflag, size = 0x4, scoped, tag = 'scoped memory for featmap_transfer.3']
    %14 = vsyncpa [#allocation4], 0
    %15 = vsyncpa [#allocation6], 0
    %16 = vsyncpa [#allocation9], 0
    %17 = vsyncpa [#allocation12], 0
    loop: start=0, step=1, limit=4
    $region2: #{featmap_transfer.3} parent=1 // loop_pre_header
      _
    $region3: #{featmap_transfer.3} parent=1 // loop_header
      %s19 = sphi 0, %s23
      %p20 = scmp.ge.s32.totalorder %s19, 4
      %s26 = sphi 0, %s38
      %s27 = sphi 0, %s34
      %s28 = sphi 0, %s26
      %s29 = sphi 0, %s27
      %s30 = sphi 0, %s28
      %s31 = sphi 0, %s29
      %s43 = sphi 0, %s45
      %s46 = sphi 0, %s43
      %s47 = sphi 0, %s46
      %s63 = sphi 0, %s47
      %s69 = sphi 0, %s71
      %s72 = sphi 0, %s69
      %s73 = sphi 0, %s72
      %s89 = sphi 0, %s73
      %s93 = sphi 0, %s93
      %s95 = sphi 0, %s93
      %s96 = sphi 0, %s95
      %s110 = sphi 0, %s96
      %s114 = sphi 0, %s114
      %s116 = sphi 0, %s114
      %s117 = sphi 0, %s116
      %s131 = sphi 0, %s117
      %s135 = sphi 0, %s135
      %s137 = sphi 0, %s135
      %s138 = sphi 0, %s137
      %s152 = sphi 0, %s138
      %s156 = sphi 0, %s156
      %s158 = sphi 0, %s156
      %s159 = sphi 0, %s158
      %s173 = sphi 0, %s159
      %s177 = sphi 0, %s177
      %s179 = sphi 0, %s177
      %s180 = sphi 0, %s179
      %s194 = sphi 0, %s180
      %s198 = sphi 0, %s198
      %s200 = sphi 0, %s198
      %s201 = sphi 0, %s200
      %s215 = sphi 0, %s201
      %s219 = sphi 0, %s219
      %s221 = sphi 0, %s219
      %s222 = sphi 0, %s221
      %s236 = sphi 0, %s222
      %s244 = sphi 0, %s246
      %s247 = sphi 0, %s244
      %s248 = sphi 0, %s247
      %s264 = sphi 0, %s248
    $region4: #{featmap_transfer.3} parent=1 // loop_header_branch
      %22 = sbr.rel (%p20) target = $region8
    $region5: #{featmap_transfer.3} parent=1 // loop_body
      %s24 = ssub.s32 %s19, 1
      %s25 = ssub.s32 %s19, 2
      %s32 = sadd.s32 1, %s27
      %p33 = scmp.ge.s32.totalorder %s32, 1
      %s34 = scalar_select %p33, 0, %s32
      %s35 = sadd.s32 1, %s26
      %s36 = scalar_select %p33, %s35, %s26
      %p37 = scmp.ge.s32.totalorder %s36, 2
      %s38 = scalar_select %p37, 0, %s36
      %s39 = ssub.s32 %s26, %s38
      %s40 = ssub.s32 %s27, %s34
      %s41 = sor.u32 %s39, %s40
      %p42 = scmp.eq.s32.totalorder %s41, 0
      %s44 = sadd.s32 %s43, 1
      %s45 = scalar_select %p42, %s43, %s44
      %p48 = pneg %p42
      %p49 = scmp.eq.s32.totalorder %s19, 1
      %p50 = por %p48, %p49
      %p51 = scmp.ne.s32.totalorder %s43, %s46
      %p52 = scmp.eq.s32.totalorder %s19, 0
      %p53 = por %p51, %p52
      %p54 = scmp.ne.s32.totalorder %s43, %s46
      %p55 = scmp.eq.s32.totalorder %s24, 1
      %p56 = por %p54, %p55
      %p57 = scmp.ne.s32.totalorder %s46, %s47
      %p58 = scmp.eq.s32.totalorder %s24, 0
      %p59 = por %p57, %p58
      %p60 = scmp.ne.s32.totalorder %s46, %s47
      %p61 = scmp.eq.s32.totalorder %s25, 1
      %p62 = por %p60, %p61
      %p64 = scmp.ne.s32.totalorder %s47, %s63
      %p65 = scmp.eq.s32.totalorder %s25, 0
      %p66 = por %p64, %p65
      %s67 = ssub.s32 %s26, %s38
      %p68 = scmp.eq.s32.totalorder %s67, 0
      %s70 = sadd.s32 %s69, 1
      %s71 = scalar_select %p68, %s69, %s70
      %p74 = pneg %p68
      %p75 = scmp.eq.s32.totalorder %s19, 1
      %p76 = por %p74, %p75
      %p77 = scmp.ne.s32.totalorder %s69, %s72
      %p78 = scmp.eq.s32.totalorder %s19, 0
      %p79 = por %p77, %p78
      %p80 = scmp.ne.s32.totalorder %s69, %s72
      %p81 = scmp.eq.s32.totalorder %s24, 1
      %p82 = por %p80, %p81
      %p83 = scmp.ne.s32.totalorder %s72, %s73
      %p84 = scmp.eq.s32.totalorder %s24, 0
      %p85 = por %p83, %p84
      %p86 = scmp.ne.s32.totalorder %s72, %s73
      %p87 = scmp.eq.s32.totalorder %s25, 1
      %p88 = por %p86, %p87
      %p90 = scmp.ne.s32.totalorder %s73, %s89
      %p91 = scmp.eq.s32.totalorder %s25, 0
      %p92 = por %p90, %p91
      %s94 = sadd.s32 %s93, 1
      %p97 = scmp.eq.s32.totalorder %s19, 1
      %p98 = scmp.ne.s32.totalorder %s93, %s95
      %p99 = scmp.eq.s32.totalorder %s19, 0
      %p100 = por %p98, %p99
      %p101 = scmp.ne.s32.totalorder %s93, %s95
      %p102 = scmp.eq.s32.totalorder %s24, 1
      %p103 = por %p101, %p102
      %p104 = scmp.ne.s32.totalorder %s95, %s96
      %p105 = scmp.eq.s32.totalorder %s24, 0
      %p106 = por %p104, %p105
      %p107 = scmp.ne.s32.totalorder %s95, %s96
      %p108 = scmp.eq.s32.totalorder %s25, 1
      %p109 = por %p107, %p108
      %p111 = scmp.ne.s32.totalorder %s96, %s110
      %p112 = scmp.eq.s32.totalorder %s25, 0
      %p113 = por %p111, %p112
      %s115 = sadd.s32 %s114, 1
      %p118 = scmp.eq.s32.totalorder %s19, 1
      %p119 = scmp.ne.s32.totalorder %s114, %s116
      %p120 = scmp.eq.s32.totalorder %s19, 0
      %p121 = por %p119, %p120
      %p122 = scmp.ne.s32.totalorder %s114, %s116
      %p123 = scmp.eq.s32.totalorder %s24, 1
      %p124 = por %p122, %p123
      %p125 = scmp.ne.s32.totalorder %s116, %s117
      %p126 = scmp.eq.s32.totalorder %s24, 0
      %p127 = por %p125, %p126
      %p128 = scmp.ne.s32.totalorder %s116, %s117
      %p129 = scmp.eq.s32.totalorder %s25, 1
      %p130 = por %p128, %p129
      %p132 = scmp.ne.s32.totalorder %s117, %s131
      %p133 = scmp.eq.s32.totalorder %s25, 0
      %p134 = por %p132, %p133
      %s136 = sadd.s32 %s135, 1
      %p139 = scmp.eq.s32.totalorder %s19, 1
      %p140 = scmp.ne.s32.totalorder %s135, %s137
      %p141 = scmp.eq.s32.totalorder %s19, 0
      %p142 = por %p140, %p141
      %p143 = scmp.ne.s32.totalorder %s135, %s137
      %p144 = scmp.eq.s32.totalorder %s24, 1
      %p145 = por %p143, %p144
      %p146 = scmp.ne.s32.totalorder %s137, %s138
      %p147 = scmp.eq.s32.totalorder %s24, 0
      %p148 = por %p146, %p147
      %p149 = scmp.ne.s32.totalorder %s137, %s138
      %p150 = scmp.eq.s32.totalorder %s25, 1
      %p151 = por %p149, %p150
      %p153 = scmp.ne.s32.totalorder %s138, %s152
      %p154 = scmp.eq.s32.totalorder %s25, 0
      %p155 = por %p153, %p154
      %s157 = sadd.s32 %s156, 1
      %p160 = scmp.eq.s32.totalorder %s19, 1
      %p161 = scmp.ne.s32.totalorder %s156, %s158
      %p162 = scmp.eq.s32.totalorder %s19, 0
      %p163 = por %p161, %p162
      %p164 = scmp.ne.s32.totalorder %s156, %s158
      %p165 = scmp.eq.s32.totalorder %s24, 1
      %p166 = por %p164, %p165
      %p167 = scmp.ne.s32.totalorder %s158, %s159
      %p168 = scmp.eq.s32.totalorder %s24, 0
      %p169 = por %p167, %p168
      %p170 = scmp.ne.s32.totalorder %s158, %s159
      %p171 = scmp.eq.s32.totalorder %s25, 1
      %p172 = por %p170, %p171
      %p174 = scmp.ne.s32.totalorder %s159, %s173
      %p175 = scmp.eq.s32.totalorder %s25, 0
      %p176 = por %p174, %p175
      %s178 = sadd.s32 %s177, 1
      %p181 = scmp.eq.s32.totalorder %s19, 1
      %p182 = scmp.ne.s32.totalorder %s177, %s179
      %p183 = scmp.eq.s32.totalorder %s19, 0
      %p184 = por %p182, %p183
      %p185 = scmp.ne.s32.totalorder %s177, %s179
      %p186 = scmp.eq.s32.totalorder %s24, 1
      %p187 = por %p185, %p186
      %p188 = scmp.ne.s32.totalorder %s179, %s180
      %p189 = scmp.eq.s32.totalorder %s24, 0
      %p190 = por %p188, %p189
      %p191 = scmp.ne.s32.totalorder %s179, %s180
      %p192 = scmp.eq.s32.totalorder %s25, 1
      %p193 = por %p191, %p192
      %p195 = scmp.ne.s32.totalorder %s180, %s194
      %p196 = scmp.eq.s32.totalorder %s25, 0
      %p197 = por %p195, %p196
      %s199 = sadd.s32 %s198, 1
      %p202 = scmp.eq.s32.totalorder %s19, 1
      %p203 = scmp.ne.s32.totalorder %s198, %s200
      %p204 = scmp.eq.s32.totalorder %s19, 0
      %p205 = por %p203, %p204
      %p206 = scmp.ne.s32.totalorder %s198, %s200
      %p207 = scmp.eq.s32.totalorder %s24, 1
      %p208 = por %p206, %p207
      %p209 = scmp.ne.s32.totalorder %s200, %s201
      %p210 = scmp.eq.s32.totalorder %s24, 0
      %p211 = por %p209, %p210
      %p212 = scmp.ne.s32.totalorder %s200, %s201
      %p213 = scmp.eq.s32.totalorder %s25, 1
      %p214 = por %p212, %p213
      %p216 = scmp.ne.s32.totalorder %s201, %s215
      %p217 = scmp.eq.s32.totalorder %s25, 0
      %p218 = por %p216, %p217
      %s220 = sadd.s32 %s219, 1
      %p223 = scmp.eq.s32.totalorder %s19, 1
      %p224 = scmp.ne.s32.totalorder %s219, %s221
      %p225 = scmp.eq.s32.totalorder %s19, 0
      %p226 = por %p224, %p225
      %p227 = scmp.ne.s32.totalorder %s219, %s221
      %p228 = scmp.eq.s32.totalorder %s24, 1
      %p229 = por %p227, %p228
      %p230 = scmp.ne.s32.totalorder %s221, %s222
      %p231 = scmp.eq.s32.totalorder %s24, 0
      %p232 = por %p230, %p231
      %p233 = scmp.ne.s32.totalorder %s221, %s222
      %p234 = scmp.eq.s32.totalorder %s25, 1
      %p235 = por %p233, %p234
      %p237 = scmp.ne.s32.totalorder %s222, %s236
      %p238 = scmp.eq.s32.totalorder %s25, 0
      %p239 = por %p237, %p238
      %s240 = ssub.s32 %s26, %s38
      %s241 = ssub.s32 %s27, %s34
      %s242 = sor.u32 %s240, %s241
      %p243 = scmp.eq.s32.totalorder %s242, 0
      %s245 = sadd.s32 %s244, 1
      %s246 = scalar_select %p243, %s244, %s245
      %p249 = pneg %p243
      %p250 = scmp.eq.s32.totalorder %s19, 1
      %p251 = por %p249, %p250
      %p252 = scmp.ne.s32.totalorder %s244, %s247
      %p253 = scmp.eq.s32.totalorder %s19, 0
      %p254 = por %p252, %p253
      %p255 = scmp.ne.s32.totalorder %s244, %s247
      %p256 = scmp.eq.s32.totalorder %s24, 1
      %p257 = por %p255, %p256
      %p258 = scmp.ne.s32.totalorder %s247, %s248
      %p259 = scmp.eq.s32.totalorder %s24, 0
      %p260 = por %p258, %p259
      %p261 = scmp.ne.s32.totalorder %s247, %s248
      %p262 = scmp.eq.s32.totalorder %s25, 1
      %p263 = por %p261, %p262
      %p265 = scmp.ne.s32.totalorder %s248, %s264
      %p266 = scmp.eq.s32.totalorder %s25, 0
      %p267 = por %p265, %p266
      %p268 = scmp.le.s32.totalorder 1, %s19
      %p269 = scmp.lt.s32.totalorder %s19, 3
      %p270 = pnand %p268, %p269
      %p271 = pneg %p270
      // Predicated region
      $region9: #{featmap_transfer.3} parent=5 // pred_check
        _
      $region10: #{featmap_transfer.3} parent=5 // pred_check_branch
        %273 = sbr.rel (%p270) target = $region12
      $region11: #{featmap_transfer.3} parent=5 // pred_region
        %s274 = ssub.s32 %s19, 1
        // Predicated region
        $region13: #{featmap_transfer.3} parent=11 // pred_check
          %p275 = pneg %p106
        $region14: #{featmap_transfer.3} parent=11 // pred_check_branch
          %277 = sbr.rel (%p275) target = $region16
        $region15: #{featmap_transfer.3} parent=11 // pred_region
          _
        $region16: #{featmap_transfer.3} parent=11 // pred_fallthru
          _
        // Predicated region
        $region17: #{featmap_transfer.3} parent=11 // pred_check
          %p278 = pneg %p127
        $region18: #{featmap_transfer.3} parent=11 // pred_check_branch
          %280 = sbr.rel (%p278) target = $region20
        $region19: #{featmap_transfer.3} parent=11 // pred_region
          %s282 = ssub.s32 4096, 4096
          %283 = vsyncadd [#allocation4], %s282
          %s284 = sshll.u32 [#allocation3], 4
          %s285 = int_to_ptr.vmem [resolvable:$true] %s284
          %290 = dma.hbm_to_vmem [thread:$0]  %s3, 4096, %s285, [#allocation4], 128, 128, 8
        $region20: #{featmap_transfer.3} parent=11 // pred_fallthru
          _
        // Predicated region
        $region21: #{featmap_transfer.3} parent=11 // pred_check
          %p291 = pneg %p148
        $region22: #{featmap_transfer.3} parent=11 // pred_check_branch
          %293 = sbr.rel (%p291) target = $region24
        $region23: #{featmap_transfer.3} parent=11 // pred_region
          %s295 = ssub.s32 512, 512
          %296 = vsyncadd [#allocation6], %s295
          %s297 = sshll.u32 [#allocation5], 4
          %s298 = int_to_ptr.vmem [resolvable:$true] %s297
          %303 = dma.hbm_to_vmem [thread:$0]  %s4, 512, %s298, [#allocation6], 128, 128, 8
        $region24: #{featmap_transfer.3} parent=11 // pred_fallthru
          _
        // Predicated region
        $region25: #{featmap_transfer.3} parent=11 // pred_check
          %p304 = pneg %p169
        $region26: #{featmap_transfer.3} parent=11 // pred_check_branch
          %306 = sbr.rel (%p304) target = $region28
        $region27: #{featmap_transfer.3} parent=11 // pred_region
          %s308 = ssub.s32 256, 256
          %309 = vsyncadd [#allocation6], %s308
          %s310 = sshll.u32 [#allocation7], 4
          %s311 = int_to_ptr.vmem [resolvable:$true] %s310
          %316 = dma.hbm_to_vmem [thread:$0]  %s5, 256, %s311, [#allocation6], 128, 128, 8
        $region28: #{featmap_transfer.3} parent=11 // pred_fallthru
          _
        // Predicated region
        $region29: #{featmap_transfer.3} parent=11 // pred_check
          %p317 = pneg %p190
        $region30: #{featmap_transfer.3} parent=11 // pred_check_branch
          %319 = sbr.rel (%p317) target = $region32
        $region31: #{featmap_transfer.3} parent=11 // pred_region
          %s321 = ssub.s32 4096, 4096
          %322 = vsyncadd [#allocation9], %s321
          %s323 = sshll.u32 [#allocation8], 4
          %s324 = int_to_ptr.vmem [resolvable:$true] %s323
          %329 = dma.hbm_to_vmem [thread:$0]  %s6, 4096, %s324, [#allocation9], 128, 128, 8
        $region32: #{featmap_transfer.3} parent=11 // pred_fallthru
          _
        // Predicated region
        $region33: #{featmap_transfer.3} parent=11 // pred_check
          %p330 = pneg %p211
        $region34: #{featmap_transfer.3} parent=11 // pred_check_branch
          %332 = sbr.rel (%p330) target = $region36
        $region35: #{featmap_transfer.3} parent=11 // pred_region
          %s334 = ssub.s32 512, 512
          %335 = vsyncadd [#allocation9], %s334
          %s336 = sshll.u32 [#allocation10], 4
          %s337 = int_to_ptr.vmem [resolvable:$true] %s336
          %342 = dma.hbm_to_vmem [thread:$0]  %s7, 512, %s337, [#allocation9], 128, 128, 8
        $region36: #{featmap_transfer.3} parent=11 // pred_fallthru
          _
        // Predicated region
        $region37: #{featmap_transfer.3} parent=11 // pred_check
          %p343 = pneg %p232
        $region38: #{featmap_transfer.3} parent=11 // pred_check_branch
          %345 = sbr.rel (%p343) target = $region40
        $region39: #{featmap_transfer.3} parent=11 // pred_region
          %s347 = ssub.s32 4096, 4096
          %348 = vsyncadd [#allocation12], %s347
          %s349 = sshll.u32 [#allocation11], 4
          %s350 = int_to_ptr.vmem [resolvable:$true] %s349
          %355 = dma.hbm_to_vmem [thread:$0]  %s8, 4096, %s350, [#allocation12], 256, 256, 16
        $region40: #{featmap_transfer.3} parent=11 // pred_fallthru
          _
      $region12: #{featmap_transfer.3} parent=5 // pred_fallthru
        _
      %p356 = scmp.lt.s32.totalorder %s19, 2
      // Predicated region
      $region41: #{featmap_transfer.3} parent=5 // pred_check
        %p357 = pneg %p356
      $region42: #{featmap_transfer.3} parent=5 // pred_check_branch
        %359 = sbr.rel (%p357) target = $region44
      $region43: #{featmap_transfer.3} parent=5 // pred_region
        // Predicated region
        $region45: #{featmap_transfer.3} parent=43 // pred_check
          %p360 = pneg %p53
        $region46: #{featmap_transfer.3} parent=43 // pred_check_branch
          %362 = sbr.rel (%p360) target = $region48
        $region47: #{featmap_transfer.3} parent=43 // pred_region
          %s363 = smul.u32 64, %s27
          %p364 = scmp.lt.s32.totalorder %s26, 1
          %s365 = scalar_select %p364, %s26, 1
          %p366 = scmp.lt.s32.totalorder %s363, 63
          %s367 = scalar_select %p366, %s363, 63
          %s368 = smul.addr %s365, 64
          %s369 = sadd.s32 %s367, %s368
          %s370 = smul.addr %s369, 8
          %s371 = scalar_lea.vmem %s0, %s370
          %s372 = smul.u32 64, %s27
        $region48: #{featmap_transfer.3} parent=43 // pred_fallthru
          _
        // Predicated region
        $region49: #{featmap_transfer.3} parent=43 // pred_check
          %p373 = pneg %p79
        $region50: #{featmap_transfer.3} parent=43 // pred_check_branch
          %375 = sbr.rel (%p373) target = $region52
        $region51: #{featmap_transfer.3} parent=43 // pred_region
          %s376 = sand.u32 %s69, 1
          %s377 = sand.u32 %s69, 1
          %s378 = smul.addr %s377, 64
          %s379 = scalar_lea.vmem [#allocation2], %s378
          %s380 = smul.addr %s26, 4
          %s381 = smul.addr %s380, 8
          %s382 = scalar_lea.vmem %s1, %s381
          // Predicated region
          $region53: #{featmap_transfer.3} parent=51 // pred_check
            _
          $region54: #{featmap_transfer.3} parent=51 // pred_check_branch
            %384 = sbr.rel (0) target = $region56
          $region55: #{featmap_transfer.3} parent=51 // pred_region
            // Predicated region
            $region57: #{featmap_transfer.3} parent=55 // pred_check
              _
            $region58: #{featmap_transfer.3} parent=55 // pred_check_branch
              %386 = sbr.rel (0) target = $region60
            $region59: #{featmap_transfer.3} parent=55 // pred_region
              // Predicated region
              $region72: #{featmap_transfer.3} parent=59 // pred_check
                _
              $region73: #{featmap_transfer.3} parent=59 // pred_check_branch
                %416 = sbr.rel (0) target = $region75
              $region74: #{featmap_transfer.3} parent=59 // pred_region
                loop: start=0, step=1, limit=1
                $region76: #{featmap_transfer.3} parent=74 // loop_pre_header
                  _
                $region77: #{featmap_transfer.3} parent=74 // loop_header
                  %s418 = sphi 0, %s422
                  %p419 = scmp.ge.s32.totalorder %s418, 1
                  %s423 = sphi %s382, %s382
                  %s424 = sphi %s379, %s379
                $region78: #{featmap_transfer.3} parent=74 // loop_header_branch
                  %421 = sbr.rel (%p419) target = $region82
                $region79: #{featmap_transfer.3} parent=74 // loop_body
                  %v425 = vld [vmem:[%s423] sm:$0xff]
                  %426 = vst [vmem:[%s424] sm:$0xff] %v425
                  %v427 = vld [vmem:[%s423 + $0x8] sm:$0xff]
                  %428 = vst [vmem:[%s424 + $0x8] sm:$0xff] %v427
                  %v429 = vld [vmem:[%s423 + $0x10] sm:$0xff]
                  %430 = vst [vmem:[%s424 + $0x10] sm:$0xff] %v429
                  %v431 = vld [vmem:[%s423 + $0x18] sm:$0xff]
                  %432 = vst [vmem:[%s424 + $0x18] sm:$0xff] %v431
                  %v433 = vld [vmem:[%s423 + $0x40] sm:$0xff]
                  %434 = vst [vmem:[%s424 + $0x20] sm:$0xff] %v433
                  %v435 = vld [vmem:[%s423 + $0x48] sm:$0xff]
                  %436 = vst [vmem:[%s424 + $0x28] sm:$0xff] %v435
                  %v437 = vld [vmem:[%s423 + $0x50] sm:$0xff]
                  %438 = vst [vmem:[%s424 + $0x30] sm:$0xff] %v437
                  %v439 = vld [vmem:[%s423 + $0x58] sm:$0xff]
                  %440 = vst [vmem:[%s424 + $0x38] sm:$0xff] %v439
                $region80: #{featmap_transfer.3} parent=74 // loop_footer
                  %s422 = sadd.s32 1, %s418
                $region81: #{featmap_transfer.3} parent=74 // loop_footer_branch
                  %417 = sbr.rel target = $region77
                $region82: #{featmap_transfer.3} parent=74 // loop_exit
                  _
              $region75: #{featmap_transfer.3} parent=59 // pred_fallthru
                _
              // Predicated region
              $region83: #{featmap_transfer.3} parent=59 // pred_check
                _
              $region84: #{featmap_transfer.3} parent=59 // pred_check_branch
                %442 = sbr.rel target = $region86
              $region85: #{featmap_transfer.3} parent=59 // pred_region
                _
              $region86: #{featmap_transfer.3} parent=59 // pred_fallthru
                _
            $region60: #{featmap_transfer.3} parent=55 // pred_fallthru
              _
            // Predicated region
            $region61: #{featmap_transfer.3} parent=55 // pred_check
              _
            $region62: #{featmap_transfer.3} parent=55 // pred_check_branch
              %388 = sbr.rel target = $region64
            $region63: #{featmap_transfer.3} parent=55 // pred_region
              %s390 = ssub.s32 256, 1
              loop: start=0, step=1, limit=1
              $region65: #{featmap_transfer.3} parent=63 // loop_pre_header
                _
              $region66: #{featmap_transfer.3} parent=63 // loop_header
                %s392 = sphi 0, %s396
                %p393 = scmp.ge.s32.totalorder %s392, 1
                %s397 = sphi %s382, %s382
                %s398 = sphi %s379, %s379
              $region67: #{featmap_transfer.3} parent=63 // loop_header_branch
                %395 = sbr.rel (%p393) target = $region71
              $region68: #{featmap_transfer.3} parent=63 // loop_body
                %v399 = vld [vmem:[%s397] sm:%s390]
                %400 = vst [vmem:[%s398] sm:%s390] %v399
                %v401 = vld [vmem:[%s397 + $0x8] sm:%s390]
                %402 = vst [vmem:[%s398 + $0x8] sm:%s390] %v401
                %v403 = vld [vmem:[%s397 + $0x10] sm:%s390]
                %404 = vst [vmem:[%s398 + $0x10] sm:%s390] %v403
                %v405 = vld [vmem:[%s397 + $0x18] sm:%s390]
                %406 = vst [vmem:[%s398 + $0x18] sm:%s390] %v405
                %v407 = vld [vmem:[%s397 + $0x40] sm:%s390]
                %408 = vst [vmem:[%s398 + $0x20] sm:%s390] %v407
                %v409 = vld [vmem:[%s397 + $0x48] sm:%s390]
                %410 = vst [vmem:[%s398 + $0x28] sm:%s390] %v409
                %v411 = vld [vmem:[%s397 + $0x50] sm:%s390]
                %412 = vst [vmem:[%s398 + $0x30] sm:%s390] %v411
                %v413 = vld [vmem:[%s397 + $0x58] sm:%s390]
                %414 = vst [vmem:[%s398 + $0x38] sm:%s390] %v413
              $region69: #{featmap_transfer.3} parent=63 // loop_footer
                %s396 = sadd.s32 1, %s392
              $region70: #{featmap_transfer.3} parent=63 // loop_footer_branch
                %391 = sbr.rel target = $region66
              $region71: #{featmap_transfer.3} parent=63 // loop_exit
                _
            $region64: #{featmap_transfer.3} parent=55 // pred_fallthru
              _
          $region56: #{featmap_transfer.3} parent=51 // pred_fallthru
            _
          %443 = vnop
        $region52: #{featmap_transfer.3} parent=43 // pred_fallthru
          _
      $region44: #{featmap_transfer.3} parent=5 // pred_fallthru
        _
      %p444 = scmp.le.s32.totalorder 1, %s19
      %p445 = scmp.lt.s32.totalorder %s19, 3
      %p446 = pnand %p444, %p445
      %p447 = pneg %p446
      // Predicated region
      $region87: #{featmap_transfer.3} parent=5 // pred_check
        _
      $region88: #{featmap_transfer.3} parent=5 // pred_check_branch
        %449 = sbr.rel (%p446) target = $region90
      $region89: #{featmap_transfer.3} parent=5 // pred_region
        %s450 = ssub.s32 %s19, 1
        %s451 = sand.u32 %s72, 1
        %s452 = sand.u32 %s72, 1
        %s453 = smul.addr %s452, 64
        %s454 = scalar_lea.vmem [#allocation2], %s453
        // Predicated region
        $region91: #{featmap_transfer.3} parent=89 // pred_check
          %p455 = pneg %p85
        $region92: #{featmap_transfer.3} parent=89 // pred_check_branch
          %457 = sbr.rel (%p455) target = $region94
        $region93: #{featmap_transfer.3} parent=89 // pred_region
          _
        $region94: #{featmap_transfer.3} parent=89 // pred_fallthru
          _
        // Predicated region
        $region95: #{featmap_transfer.3} parent=89 // pred_check
          %p458 = pneg %p127
        $region96: #{featmap_transfer.3} parent=89 // pred_check_branch
          %460 = sbr.rel (%p458) target = $region98
        $region97: #{featmap_transfer.3} parent=89 // pred_region
          %461 = dma.done [#allocation4], 4096
        $region98: #{featmap_transfer.3} parent=89 // pred_fallthru
          _
        // Predicated region
        $region99: #{featmap_transfer.3} parent=89 // pred_check
          %p462 = pneg %p148
        $region100: #{featmap_transfer.3} parent=89 // pred_check_branch
          %464 = sbr.rel (%p462) target = $region102
        $region101: #{featmap_transfer.3} parent=89 // pred_region
          %465 = dma.done [#allocation6], 512
        $region102: #{featmap_transfer.3} parent=89 // pred_fallthru
          _
        // Predicated region
        $region103: #{featmap_transfer.3} parent=89 // pred_check
          %p466 = pneg %p169
        $region104: #{featmap_transfer.3} parent=89 // pred_check_branch
          %468 = sbr.rel (%p466) target = $region106
        $region105: #{featmap_transfer.3} parent=89 // pred_region
          %469 = dma.done [#allocation6], 256
        $region106: #{featmap_transfer.3} parent=89 // pred_fallthru
          _
        // Predicated region
        $region107: #{featmap_transfer.3} parent=89 // pred_check
          %p470 = pneg %p190
        $region108: #{featmap_transfer.3} parent=89 // pred_check_branch
          %472 = sbr.rel (%p470) target = $region110
        $region109: #{featmap_transfer.3} parent=89 // pred_region
          %473 = dma.done [#allocation9], 4096
        $region110: #{featmap_transfer.3} parent=89 // pred_fallthru
          _
        // Predicated region
        $region111: #{featmap_transfer.3} parent=89 // pred_check
          %p474 = pneg %p211
        $region112: #{featmap_transfer.3} parent=89 // pred_check_branch
          %476 = sbr.rel (%p474) target = $region114
        $region113: #{featmap_transfer.3} parent=89 // pred_region
          %477 = dma.done [#allocation9], 512
        $region114: #{featmap_transfer.3} parent=89 // pred_fallthru
          _
        // Predicated region
        $region115: #{featmap_transfer.3} parent=89 // pred_check
          %p478 = pneg %p232
        $region116: #{featmap_transfer.3} parent=89 // pred_check_branch
          %480 = sbr.rel (%p478) target = $region118
        $region117: #{featmap_transfer.3} parent=89 // pred_region
          %481 = dma.done [#allocation12], 4096
        $region118: #{featmap_transfer.3} parent=89 // pred_fallthru
          _
        %s482 = smul.u32 64, %s29
        %p483 = scmp.lt.s32.totalorder %s28, 1
        %s484 = scalar_select %p483, %s28, 1
        %p485 = scmp.lt.s32.totalorder %s482, 63
        %s486 = scalar_select %p485, %s482, 63
        %s487 = smul.addr %s484, 64
        %s488 = sadd.s32 %s486, %s487
        %s489 = smul.addr %s488, 8
        %s490 = scalar_lea.vmem %s0, %s489
        %p491 = pneg %p59
        %p492 = pneg %p56
        %s493 = sand.u32 %s72, 1
        %s494 = sand.u32 %s72, 1
        %s495 = smul.addr %s494, 64
        %s496 = scalar_lea.vmem [#allocation2], %s495
        %p497 = pneg %p85
        %p498 = pneg %p82
        %p499 = pneg %p106
        %p500 = pneg %p103
        %p501 = pneg %p127
        %p502 = pneg %p124
        %p503 = pneg %p148
        %p504 = pneg %p145
        %p505 = pneg %p169
        %p506 = pneg %p166
        %p507 = pneg %p190
        %p508 = pneg %p187
        %p509 = pneg %p211
        %p510 = pneg %p208
        %p511 = pneg %p232
        %p512 = pneg %p229
        %p513 = pneg %p260
        %p514 = pneg %p257
        %s515 = smul.u32 2, %s29
        %p516 = scmp.lt.s32.totalorder %s28, 1
        %s517 = scalar_select %p516, %s28, 1
        %p518 = scmp.lt.s32.totalorder %s515, 1
        %s519 = scalar_select %p518, %s515, 1
        %s520 = smul.addr %s519, 4
        %s521 = smul.addr %s517, 8
        %s522 = sadd.s32 %s520, %s521
        %s523 = smul.addr %s522, 8
        %s524 = scalar_lea.vmem %s9, %s523
        %s525 = smul.u32 64, %s29
        %p526 = scmp.lt.s32.totalorder %s28, 1
        %s527 = scalar_select %p526, %s28, 1
        %p528 = scmp.lt.s32.totalorder %s525, 63
        %s529 = scalar_select %p528, %s525, 63
        %s530 = smul.addr %s527, 64
        %s531 = sadd.s32 %s529, %s530
        %s532 = smul.addr %s531, 8
        %s533 = scalar_lea.vmem %s0, %s532
        %s534 = smul.u32 64, %s29
        %s535 = smul.u32 2, %s29
        %p536 = scmp.lt.s32.totalorder %s28, 1
        %s537 = scalar_select %p536, %s28, 1
        %p538 = scmp.lt.s32.totalorder %s535, 1
        %s539 = scalar_select %p538, %s535, 1
        %s540 = smul.addr %s539, 4
        %s541 = smul.addr %s537, 8
        %s542 = sadd.s32 %s540, %s541
        %s543 = smul.addr %s542, 8
        %s544 = scalar_lea.vmem %s9, %s543
        %s545 = smul.u32 2, %s29
        %v546 = vld [vmem:[%s454] sm:$0xff]
        %v547 = vld [vmem:[%s454 + $0x8] sm:$0xff]
        %v548 = vld [vmem:[%s454 + $0x10] sm:$0xff]
        %v549 = vld [vmem:[%s454 + $0x18] sm:$0xff]
        %v550 = vld [vmem:[#allocation5] sm:$0xff]
        %v551 = vld [vmem:[#allocation5 + $0x8] sm:$0xff]
        %v552 = vld [vmem:[#allocation5 + $0x10] sm:$0xff]
        %v553 = vld [vmem:[#allocation5 + $0x18] sm:$0xff]
        %vm554 = vcmask 261120
        %v556 = vsel %vm554, %v546, 0
        %v559 = vsel %vm554, %v547, 0
        %v562 = vsel %vm554, %v548, 0
        %v565 = vsel %vm554, %v549, 0
        %567 = vmatprep.subr.mxu0 0.0
        %568 = vmatpush1.msra.mxu0 0.0
        %569 = vmatprep.subr.mxu0 0.0
        %570 = vmatpush1.msra.mxu0 0.0
        %571 = vmatprep.subr.mxu0 0.0
        %572 = vmatpush1.msra.mxu0 0.0
        %573 = vmatprep.subr.mxu0 0.0
        %574 = vmatpush1.msra.mxu0 0.0
        %575 = vmatprep.subr.mxu0 0.0
        %576 = vmatpush1.msra.mxu0 0.0
        %577 = vmatprep.subr.mxu0 0.0
        %578 = vmatpush1.msra.mxu0 0.0
        %579 = vmatprep.subr.mxu0 0.0
        %580 = vmatpush1.msra.mxu0 0.0
        %581 = vmatprep.subr.mxu0 0.0
        %582 = vmatpush1.msra.mxu0 0.0
        %583 = vmatprep.subr.mxu0 0.0
        %584 = vmatpush1.msra.mxu0 0.0
        %585 = vmatprep.subr.mxu0 0.0
        %586 = vmatpush1.msra.mxu0 0.0
        %587 = vmatprep.subr.mxu0 0.0
        %588 = vmatpush1.msra.mxu0 0.0
        %589 = vmatprep.subr.mxu0 0.0
        %590 = vmatpush1.msra.mxu0 0.0
        %591 = vmatprep.subr.mxu0 0.0
        %592 = vmatpush1.msra.mxu0 %v553
        %593 = vmatprep.subr.mxu0 0.0
        %594 = vmatpush1.msra.mxu0 %v552
        %595 = vmatprep.subr.mxu0 0.0
        %596 = vmatpush1.msra.mxu0 %v551
        %597 = vmatprep.subr.mxu0 0.0
        %598 = vmatpush1.msra.mxu0 %v550
        %599 = vmatprep.subr.mxu0 0.0
        %600 = vmatpush2.msra.mxu0 0.0
        %601 = vmatprep.subr.mxu0 0.0
        %602 = vmatpush2.msra.mxu0 0.0
        %603 = vmatprep.subr.mxu0 0.0
        %604 = vmatpush2.msra.mxu0 0.0
        %605 = vmatprep.subr.mxu0 0.0
        %606 = vmatpush2.msra.mxu0 0.0
        %607 = vmatprep.subr.mxu0 0.0
        %608 = vmatpush2.msra.mxu0 0.0
        %609 = vmatprep.subr.mxu0 0.0
        %610 = vmatpush2.msra.mxu0 0.0
        %611 = vmatprep.subr.mxu0 0.0
        %612 = vmatpush2.msra.mxu0 0.0
        %613 = vmatprep.subr.mxu0 0.0
        %614 = vmatpush2.msra.mxu0 0.0
        %615 = vmatprep.subr.mxu0 0.0
        %616 = vmatpush2.msra.mxu0 0.0
        %617 = vmatprep.subr.mxu0 0.0
        %618 = vmatpush2.msra.mxu0 0.0
        %619 = vmatprep.subr.mxu0 0.0
        %620 = vmatpush2.msra.mxu0 0.0
        %621 = vmatprep.subr.mxu0 0.0
        %622 = vmatpush2.msra.mxu0 0.0
        %623 = vmatprep.subr.mxu0 0.0
        %624 = vmatpush2.msra.mxu0 0.0
        %625 = vmatprep.subr.mxu0 0.0
        %626 = vmatpush2.msra.mxu0 0.0
        %627 = vmatprep.subr.mxu0 0.0
        %628 = vmatpush2.msra.mxu0 0.0
        %629 = vmatprep.subr.mxu0 0.0
        %630 = vmatpush2.msra.mxu0 0.0
        %631 = vmatprep.mubr.f32.mxu0 0.0
        %632 = vmatmul.mubr.f32.gmra.mxu0 %v556
        %v633 = vpop.f32.mrf.mxu0
        %v634 = vadd.f32 0.0, %v633
        %v635 = vpop.f32.mrf.mxu0
        %636 = vmatprep.mubr.f32.mxu0 0.0
        %637 = vmatmul.mubr.f32.gmra.mxu0 %v559
        %v638 = vpop.f32.mrf.mxu0
        %v639 = vadd.f32 0.0, %v638
        %v640 = vpop.f32.mrf.mxu0
        %641 = vmatprep.mubr.f32.mxu0 0.0
        %642 = vmatmul.mubr.f32.gmra.mxu0 %v562
        %v643 = vpop.f32.mrf.mxu0
        %v644 = vadd.f32 0.0, %v643
        %v645 = vpop.f32.mrf.mxu0
        %646 = vmatprep.mubr.f32.mxu0 0.0
        %647 = vmatmul.mubr.f32.gmra.mxu0 %v565
        %v648 = vpop.f32.mrf.mxu0
        %v649 = vadd.f32 0.0, %v648
        %v650 = vpop.f32.mrf.mxu0
        %651 = vdwg.mxu0
        %s652 = scalar_lea.vmem %s454, 32 [#allocation2]
        %v653 = vld [vmem:[%s652] sm:$0xff]
        %v654 = vld [vmem:[%s652 + $0x8] sm:$0xff]
        %v655 = vld [vmem:[%s652 + $0x10] sm:$0xff]
        %v656 = vld [vmem:[%s652 + $0x18] sm:$0xff]
        %v658 = vsel %vm554, %v653, 0
        %v661 = vsel %vm554, %v654, 0
        %v664 = vsel %vm554, %v655, 0
        %v667 = vsel %vm554, %v656, 0
        %669 = vmatprep.subr.mxu0 0.0
        %670 = vmatpush1.msra.mxu0 0.0
        %671 = vmatprep.subr.mxu0 0.0
        %672 = vmatpush1.msra.mxu0 0.0
        %673 = vmatprep.subr.mxu0 0.0
        %674 = vmatpush1.msra.mxu0 0.0
        %675 = vmatprep.subr.mxu0 0.0
        %676 = vmatpush1.msra.mxu0 0.0
        %677 = vmatprep.subr.mxu0 0.0
        %678 = vmatpush1.msra.mxu0 0.0
        %679 = vmatprep.subr.mxu0 0.0
        %680 = vmatpush1.msra.mxu0 0.0
        %681 = vmatprep.subr.mxu0 0.0
        %682 = vmatpush1.msra.mxu0 0.0
        %683 = vmatprep.subr.mxu0 0.0
        %684 = vmatpush1.msra.mxu0 0.0
        %685 = vmatprep.subr.mxu0 0.0
        %686 = vmatpush1.msra.mxu0 0.0
        %687 = vmatprep.subr.mxu0 0.0
        %688 = vmatpush1.msra.mxu0 0.0
        %689 = vmatprep.subr.mxu0 0.0
        %690 = vmatpush1.msra.mxu0 0.0
        %691 = vmatprep.subr.mxu0 0.0
        %692 = vmatpush1.msra.mxu0 0.0
        %693 = vmatprep.subr.mxu0 0.0
        %694 = vmatpush1.msra.mxu0 %v553
        %695 = vmatprep.subr.mxu0 0.0
        %696 = vmatpush1.msra.mxu0 %v552
        %697 = vmatprep.subr.mxu0 0.0
        %698 = vmatpush1.msra.mxu0 %v551
        %699 = vmatprep.subr.mxu0 0.0
        %700 = vmatpush1.msra.mxu0 %v550
        %701 = vmatprep.subr.mxu0 0.0
        %702 = vmatpush2.msra.mxu0 0.0
        %703 = vmatprep.subr.mxu0 0.0
        %704 = vmatpush2.msra.mxu0 0.0
        %705 = vmatprep.subr.mxu0 0.0
        %706 = vmatpush2.msra.mxu0 0.0
        %707 = vmatprep.subr.mxu0 0.0
        %708 = vmatpush2.msra.mxu0 0.0
        %709 = vmatprep.subr.mxu0 0.0
        %710 = vmatpush2.msra.mxu0 0.0
        %711 = vmatprep.subr.mxu0 0.0
        %712 = vmatpush2.msra.mxu0 0.0
        %713 = vmatprep.subr.mxu0 0.0
        %714 = vmatpush2.msra.mxu0 0.0
        %715 = vmatprep.subr.mxu0 0.0
        %716 = vmatpush2.msra.mxu0 0.0
        %717 = vmatprep.subr.mxu0 0.0
        %718 = vmatpush2.msra.mxu0 0.0
        %719 = vmatprep.subr.mxu0 0.0
        %720 = vmatpush2.msra.mxu0 0.0
        %721 = vmatprep.subr.mxu0 0.0
        %722 = vmatpush2.msra.mxu0 0.0
        %723 = vmatprep.subr.mxu0 0.0
        %724 = vmatpush2.msra.mxu0 0.0
        %725 = vmatprep.subr.mxu0 0.0
        %726 = vmatpush2.msra.mxu0 0.0
        %727 = vmatprep.subr.mxu0 0.0
        %728 = vmatpush2.msra.mxu0 0.0
        %729 = vmatprep.subr.mxu0 0.0
        %730 = vmatpush2.msra.mxu0 0.0
        %731 = vmatprep.subr.mxu0 0.0
        %732 = vmatpush2.msra.mxu0 0.0
        %733 = vmatprep.mubr.f32.mxu0 0.0
        %734 = vmatmul.mubr.f32.gmra.mxu0 %v658
        %v735 = vpop.f32.mrf.mxu0
        %v736 = vadd.f32 0.0, %v735
        %v737 = vpop.f32.mrf.mxu0
        %738 = vmatprep.mubr.f32.mxu0 0.0
        %739 = vmatmul.mubr.f32.gmra.mxu0 %v661
        %v740 = vpop.f32.mrf.mxu0
        %v741 = vadd.f32 0.0, %v740
        %v742 = vpop.f32.mrf.mxu0
        %743 = vmatprep.mubr.f32.mxu0 0.0
        %744 = vmatmul.mubr.f32.gmra.mxu0 %v664
        %v745 = vpop.f32.mrf.mxu0
        %v746 = vadd.f32 0.0, %v745
        %v747 = vpop.f32.mrf.mxu0
        %748 = vmatprep.mubr.f32.mxu0 0.0
        %749 = vmatmul.mubr.f32.gmra.mxu0 %v667
        %v750 = vpop.f32.mrf.mxu0
        %v751 = vadd.f32 0.0, %v750
        %v752 = vpop.f32.mrf.mxu0
        %753 = vdwg.mxu0
        %v754 = vld [vmem:[%s2] sm:$0xff]
        %v755 = vld [vmem:[%s2 + $0x8] sm:$0xff]
        %v756 = vld [vmem:[%s2 + $0x10] sm:$0xff]
        %v757 = vld [vmem:[%s2 + $0x18] sm:$0xff]
        %v758 = vld [vmem:[%s2 + $0x20] sm:$0xff]
        %v759 = vld [vmem:[%s2 + $0x28] sm:$0xff]
        %v760 = vld [vmem:[%s2 + $0x30] sm:$0xff]
        %v761 = vld [vmem:[%s2 + $0x38] sm:$0xff]
        %v762 = vld [vmem:[#allocation3] sm:$0xff]
        %v763 = vld [vmem:[#allocation3 + $0x8] sm:$0xff]
        %v764 = vld [vmem:[#allocation3 + $0x10] sm:$0xff]
        %v765 = vld [vmem:[#allocation3 + $0x18] sm:$0xff]
        %v766 = vld [vmem:[#allocation3 + $0x20] sm:$0xff]
        %v767 = vld [vmem:[#allocation3 + $0x28] sm:$0xff]
        %v768 = vld [vmem:[#allocation3 + $0x30] sm:$0xff]
        %v769 = vld [vmem:[#allocation3 + $0x38] sm:$0xff]
        %v770 = vld [vmem:[#allocation3 + $0x40] sm:$0xff]
        %v771 = vld [vmem:[#allocation3 + $0x48] sm:$0xff]
        %v772 = vld [vmem:[#allocation3 + $0x50] sm:$0xff]
        %v773 = vld [vmem:[#allocation3 + $0x58] sm:$0xff]
        %v774 = vld [vmem:[#allocation3 + $0x60] sm:$0xff]
        %v775 = vld [vmem:[#allocation3 + $0x68] sm:$0xff]
        %v776 = vld [vmem:[#allocation3 + $0x70] sm:$0xff]
        %v777 = vld [vmem:[#allocation3 + $0x78] sm:$0xff]
        %v778 = vld [vmem:[#allocation3 + $0x80] sm:$0xff]
        %v779 = vld [vmem:[#allocation3 + $0x88] sm:$0xff]
        %v780 = vld [vmem:[#allocation3 + $0x90] sm:$0xff]
        %v781 = vld [vmem:[#allocation3 + $0x98] sm:$0xff]
        %v782 = vld [vmem:[#allocation3 + $0xa0] sm:$0xff]
        %v783 = vld [vmem:[#allocation3 + $0xa8] sm:$0xff]
        %v784 = vld [vmem:[#allocation3 + $0xb0] sm:$0xff]
        %v785 = vld [vmem:[#allocation3 + $0xb8] sm:$0xff]
        %v786 = vld [vmem:[#allocation3 + $0xc0] sm:$0xff]
        %v787 = vld [vmem:[#allocation3 + $0xc8] sm:$0xff]
        %v788 = vld [vmem:[#allocation3 + $0xd0] sm:$0xff]
        %v789 = vld [vmem:[#allocation3 + $0xd8] sm:$0xff]
        %v790 = vld [vmem:[#allocation3 + $0xe0] sm:$0xff]
        %v791 = vld [vmem:[#allocation3 + $0xe8] sm:$0xff]
        %v792 = vld [vmem:[#allocation3 + $0xf0] sm:$0xff]
        %v793 = vld [vmem:[#allocation3 + $0xf8] sm:$0xff]
        %v794 = vld [vmem:[#allocation7] sm:$0xff]
        %v795 = vld [vmem:[#allocation7 + $0x8] sm:$0xff]
        %v796 = vld [vmem:[#allocation8] sm:$0xff]
        %v797 = vld [vmem:[#allocation8 + $0x8] sm:$0xff]
        %v798 = vld [vmem:[#allocation8 + $0x10] sm:$0xff]
        %v799 = vld [vmem:[#allocation8 + $0x18] sm:$0xff]
        %v800 = vld [vmem:[#allocation8 + $0x20] sm:$0xff]
        %v801 = vld [vmem:[#allocation8 + $0x28] sm:$0xff]
        %v802 = vld [vmem:[#allocation8 + $0x30] sm:$0xff]
        %v803 = vld [vmem:[#allocation8 + $0x38] sm:$0xff]
        %v804 = vld [vmem:[#allocation8 + $0x40] sm:$0xff]
        %v805 = vld [vmem:[#allocation8 + $0x48] sm:$0xff]
        %v806 = vld [vmem:[#allocation8 + $0x50] sm:$0xff]
        %v807 = vld [vmem:[#allocation8 + $0x58] sm:$0xff]
        %v808 = vld [vmem:[#allocation8 + $0x60] sm:$0xff]
        %v809 = vld [vmem:[#allocation8 + $0x68] sm:$0xff]
        %v810 = vld [vmem:[#allocation8 + $0x70] sm:$0xff]
        %v811 = vld [vmem:[#allocation8 + $0x78] sm:$0xff]
        %v812 = vld [vmem:[#allocation8 + $0x80] sm:$0xff]
        %v813 = vld [vmem:[#allocation8 + $0x88] sm:$0xff]
        %v814 = vld [vmem:[#allocation8 + $0x90] sm:$0xff]
        %v815 = vld [vmem:[#allocation8 + $0x98] sm:$0xff]
        %v816 = vld [vmem:[#allocation8 + $0xa0] sm:$0xff]
        %v817 = vld [vmem:[#allocation8 + $0xa8] sm:$0xff]
        %v818 = vld [vmem:[#allocation8 + $0xb0] sm:$0xff]
        %v819 = vld [vmem:[#allocation8 + $0xb8] sm:$0xff]
        %v820 = vld [vmem:[#allocation8 + $0xc0] sm:$0xff]
        %v821 = vld [vmem:[#allocation8 + $0xc8] sm:$0xff]
        %v822 = vld [vmem:[#allocation8 + $0xd0] sm:$0xff]
        %v823 = vld [vmem:[#allocation8 + $0xd8] sm:$0xff]
        %v824 = vld [vmem:[#allocation8 + $0xe0] sm:$0xff]
        %v825 = vld [vmem:[#allocation8 + $0xe8] sm:$0xff]
        %v826 = vld [vmem:[#allocation8 + $0xf0] sm:$0xff]
        %v827 = vld [vmem:[#allocation8 + $0xf8] sm:$0xff]
        %v828 = vld [vmem:[#allocation10] sm:$0xff]
        %v829 = vld [vmem:[#allocation10 + $0x8] sm:$0xff]
        %v830 = vld [vmem:[#allocation10 + $0x10] sm:$0xff]
        %v831 = vld [vmem:[#allocation10 + $0x18] sm:$0xff]
        %v832 = vld [vmem:[#allocation11] sm:$0xff]
        %v833 = vld [vmem:[#allocation11 + $0x8] sm:$0xff]
        %v834 = vld [vmem:[#allocation11 + $0x10] sm:$0xff]
        %v835 = vld [vmem:[#allocation11 + $0x18] sm:$0xff]
        %v836 = vld [vmem:[#allocation11 + $0x20] sm:$0xff]
        %v837 = vld [vmem:[#allocation11 + $0x28] sm:$0xff]
        %v838 = vld [vmem:[#allocation11 + $0x30] sm:$0xff]
        %v839 = vld [vmem:[#allocation11 + $0x38] sm:$0xff]
        %v840 = vld [vmem:[#allocation11 + $0x40] sm:$0xff]
        %v841 = vld [vmem:[#allocation11 + $0x48] sm:$0xff]
        %v842 = vld [vmem:[#allocation11 + $0x50] sm:$0xff]
        %v843 = vld [vmem:[#allocation11 + $0x58] sm:$0xff]
        %v844 = vld [vmem:[#allocation11 + $0x60] sm:$0xff]
        %v845 = vld [vmem:[#allocation11 + $0x68] sm:$0xff]
        %v846 = vld [vmem:[#allocation11 + $0x70] sm:$0xff]
        %v847 = vld [vmem:[#allocation11 + $0x78] sm:$0xff]
        %v848 = vld [vmem:[#allocation11 + $0x80] sm:$0xff]
        %v849 = vld [vmem:[#allocation11 + $0x88] sm:$0xff]
        %v850 = vld [vmem:[#allocation11 + $0x90] sm:$0xff]
        %v851 = vld [vmem:[#allocation11 + $0x98] sm:$0xff]
        %v852 = vld [vmem:[#allocation11 + $0xa0] sm:$0xff]
        %v853 = vld [vmem:[#allocation11 + $0xa8] sm:$0xff]
        %v854 = vld [vmem:[#allocation11 + $0xb0] sm:$0xff]
        %v855 = vld [vmem:[#allocation11 + $0xb8] sm:$0xff]
        %v856 = vld [vmem:[#allocation11 + $0xc0] sm:$0xff]
        %v857 = vld [vmem:[#allocation11 + $0xc8] sm:$0xff]
        %v858 = vld [vmem:[#allocation11 + $0xd0] sm:$0xff]
        %v859 = vld [vmem:[#allocation11 + $0xd8] sm:$0xff]
        %v860 = vld [vmem:[#allocation11 + $0xe0] sm:$0xff]
        %v861 = vld [vmem:[#allocation11 + $0xe8] sm:$0xff]
        %v862 = vld [vmem:[#allocation11 + $0xf0] sm:$0xff]
        %v863 = vld [vmem:[#allocation11 + $0xf8] sm:$0xff]
        %v864 = vld [vmem:[%s533] sm:$0xff]
        %v865 = vld [vmem:[%s533 + $0x8] sm:$0xff]
        %v866 = vld [vmem:[%s533 + $0x10] sm:$0xff]
        %v867 = vld [vmem:[%s533 + $0x18] sm:$0xff]
        %v868 = vld [vmem:[%s533 + $0x20] sm:$0xff]
        %v869 = vld [vmem:[%s533 + $0x28] sm:$0xff]
        %v870 = vld [vmem:[%s533 + $0x30] sm:$0xff]
        %v871 = vld [vmem:[%s533 + $0x38] sm:$0xff]
        %v872 = vld [vmem:[%s533 + $0x40] sm:$0xff]
        %v873 = vld [vmem:[%s533 + $0x48] sm:$0xff]
        %v874 = vld [vmem:[%s533 + $0x50] sm:$0xff]
        %v875 = vld [vmem:[%s533 + $0x58] sm:$0xff]
        %v876 = vld [vmem:[%s533 + $0x60] sm:$0xff]
        %v877 = vld [vmem:[%s533 + $0x68] sm:$0xff]
        %v878 = vld [vmem:[%s533 + $0x70] sm:$0xff]
        %v879 = vld [vmem:[%s533 + $0x78] sm:$0xff]
        %v880 = vld [vmem:[%s533 + $0x80] sm:$0xff]
        %v881 = vld [vmem:[%s533 + $0x88] sm:$0xff]
        %v882 = vld [vmem:[%s533 + $0x90] sm:$0xff]
        %v883 = vld [vmem:[%s533 + $0x98] sm:$0xff]
        %v884 = vld [vmem:[%s533 + $0xa0] sm:$0xff]
        %v885 = vld [vmem:[%s533 + $0xa8] sm:$0xff]
        %v886 = vld [vmem:[%s533 + $0xb0] sm:$0xff]
        %v887 = vld [vmem:[%s533 + $0xb8] sm:$0xff]
        %v888 = vld [vmem:[%s533 + $0xc0] sm:$0xff]
        %v889 = vld [vmem:[%s533 + $0xc8] sm:$0xff]
        %v890 = vld [vmem:[%s533 + $0xd0] sm:$0xff]
        %v891 = vld [vmem:[%s533 + $0xd8] sm:$0xff]
        %v892 = vld [vmem:[%s533 + $0xe0] sm:$0xff]
        %v893 = vld [vmem:[%s533 + $0xe8] sm:$0xff]
        %v894 = vld [vmem:[%s533 + $0xf0] sm:$0xff]
        %v895 = vld [vmem:[%s533 + $0xf8] sm:$0xff]
        %vm896 = vcmask 523264
        %v898 = vsel %vm896, %v864, 0
        %v901 = vsel %vm896, %v865, 0
        %v904 = vsel %vm896, %v866, 0
        %v907 = vsel %vm896, %v867, 0
        %v910 = vsel %vm896, %v868, 0
        %v913 = vsel %vm896, %v869, 0
        %v916 = vsel %vm896, %v870, 0
        %v919 = vsel %vm896, %v871, 0
        %v922 = vsel %vm896, %v872, 0
        %v925 = vsel %vm896, %v873, 0
        %v928 = vsel %vm896, %v874, 0
        %v931 = vsel %vm896, %v875, 0
        %v934 = vsel %vm896, %v876, 0
        %v937 = vsel %vm896, %v877, 0
        %v940 = vsel %vm896, %v878, 0
        %v943 = vsel %vm896, %v879, 0
        %v946 = vsel %vm896, %v880, 0
        %v949 = vsel %vm896, %v881, 0
        %v952 = vsel %vm896, %v882, 0
        %v955 = vsel %vm896, %v883, 0
        %v958 = vsel %vm896, %v884, 0
        %v961 = vsel %vm896, %v885, 0
        %v964 = vsel %vm896, %v886, 0
        %v967 = vsel %vm896, %v887, 0
        %v970 = vsel %vm896, %v888, 0
        %v973 = vsel %vm896, %v889, 0
        %v976 = vsel %vm896, %v890, 0
        %v979 = vsel %vm896, %v891, 0
        %v982 = vsel %vm896, %v892, 0
        %v985 = vsel %vm896, %v893, 0
        %v988 = vsel %vm896, %v894, 0
        %v991 = vsel %vm896, %v895, 0
        %993 = vmatprep.subr.mxu0 0.0
        %994 = vmatpush1.msra.mxu0 0.0
        %995 = vmatprep.subr.mxu0 0.0
        %996 = vmatpush1.msra.mxu0 0.0
        %997 = vmatprep.subr.mxu0 0.0
        %998 = vmatpush1.msra.mxu0 0.0
        %999 = vmatprep.subr.mxu0 0.0
        %1000 = vmatpush1.msra.mxu0 0.0
        %1001 = vmatprep.subr.mxu0 0.0
        %1002 = vmatpush1.msra.mxu0 0.0
        %1003 = vmatprep.subr.mxu0 0.0
        %1004 = vmatpush1.msra.mxu0 0.0
        %1005 = vmatprep.subr.mxu0 0.0
        %1006 = vmatpush1.msra.mxu0 0.0
        %1007 = vmatprep.subr.mxu0 0.0
        %1008 = vmatpush1.msra.mxu0 0.0
        %1009 = vmatprep.subr.mxu0 0.0
        %1010 = vmatpush1.msra.mxu0 %v761
        %1011 = vmatprep.subr.mxu0 0.0
        %1012 = vmatpush1.msra.mxu0 %v760
        %1013 = vmatprep.subr.mxu0 0.0
        %1014 = vmatpush1.msra.mxu0 %v759
        %1015 = vmatprep.subr.mxu0 0.0
        %1016 = vmatpush1.msra.mxu0 %v758
        %1017 = vmatprep.subr.mxu0 0.0
        %1018 = vmatpush1.msra.mxu0 %v757
        %1019 = vmatprep.subr.mxu0 0.0
        %1020 = vmatpush1.msra.mxu0 %v756
        %1021 = vmatprep.subr.mxu0 0.0
        %1022 = vmatpush1.msra.mxu0 %v755
        %1023 = vmatprep.subr.mxu0 0.0
        %1024 = vmatpush1.msra.mxu0 %v754
        %1025 = vmatprep.subr.mxu0 0.0
        %1026 = vmatpush2.msra.mxu0 0.0
        %1027 = vmatprep.subr.mxu0 0.0
        %1028 = vmatpush2.msra.mxu0 0.0
        %1029 = vmatprep.subr.mxu0 0.0
        %1030 = vmatpush2.msra.mxu0 0.0
        %1031 = vmatprep.subr.mxu0 0.0
        %1032 = vmatpush2.msra.mxu0 0.0
        %1033 = vmatprep.subr.mxu0 0.0
        %1034 = vmatpush2.msra.mxu0 0.0
        %1035 = vmatprep.subr.mxu0 0.0
        %1036 = vmatpush2.msra.mxu0 0.0
        %1037 = vmatprep.subr.mxu0 0.0
        %1038 = vmatpush2.msra.mxu0 0.0
        %1039 = vmatprep.subr.mxu0 0.0
        %1040 = vmatpush2.msra.mxu0 0.0
        %1041 = vmatprep.subr.mxu0 0.0
        %1042 = vmatpush2.msra.mxu0 0.0
        %1043 = vmatprep.subr.mxu0 0.0
        %1044 = vmatpush2.msra.mxu0 0.0
        %1045 = vmatprep.subr.mxu0 0.0
        %1046 = vmatpush2.msra.mxu0 0.0
        %1047 = vmatprep.subr.mxu0 0.0
        %1048 = vmatpush2.msra.mxu0 0.0
        %1049 = vmatprep.subr.mxu0 0.0
        %1050 = vmatpush2.msra.mxu0 0.0
        %1051 = vmatprep.subr.mxu0 0.0
        %1052 = vmatpush2.msra.mxu0 0.0
        %1053 = vmatprep.subr.mxu0 0.0
        %1054 = vmatpush2.msra.mxu0 0.0
        %1055 = vmatprep.subr.mxu0 0.0
        %1056 = vmatpush2.msra.mxu0 0.0
        %1057 = vmatprep.mubr.f32.mxu0 0.0
        %1058 = vmatmul.mubr.f32.gmra.mxu0 %v898
        %v1059 = vpop.f32.mrf.mxu0
        %v1060 = vadd.f32 0.0, %v1059
        %v1061 = vpop.f32.mrf.mxu0
        %1062 = vmatprep.mubr.f32.mxu0 0.0
        %1063 = vmatmul.mubr.f32.gmra.mxu0 %v901
        %v1064 = vpop.f32.mrf.mxu0
        %v1065 = vadd.f32 0.0, %v1064
        %v1066 = vpop.f32.mrf.mxu0
        %1067 = vmatprep.mubr.f32.mxu0 0.0
        %1068 = vmatmul.mubr.f32.gmra.mxu0 %v904
        %v1069 = vpop.f32.mrf.mxu0
        %v1070 = vadd.f32 0.0, %v1069
        %v1071 = vpop.f32.mrf.mxu0
        %1072 = vmatprep.mubr.f32.mxu0 0.0
        %1073 = vmatmul.mubr.f32.gmra.mxu0 %v907
        %v1074 = vpop.f32.mrf.mxu0
        %v1075 = vadd.f32 0.0, %v1074
        %v1076 = vpop.f32.mrf.mxu0
        %1077 = vmatprep.mubr.f32.mxu0 0.0
        %1078 = vmatmul.mubr.f32.gmra.mxu0 %v910
        %v1079 = vpop.f32.mrf.mxu0
        %v1080 = vadd.f32 0.0, %v1079
        %v1081 = vpop.f32.mrf.mxu0
        %1082 = vmatprep.mubr.f32.mxu0 0.0
        %1083 = vmatmul.mubr.f32.gmra.mxu0 %v913
        %v1084 = vpop.f32.mrf.mxu0
        %v1085 = vadd.f32 0.0, %v1084
        %v1086 = vpop.f32.mrf.mxu0
        %1087 = vmatprep.mubr.f32.mxu0 0.0
        %1088 = vmatmul.mubr.f32.gmra.mxu0 %v916
        %v1089 = vpop.f32.mrf.mxu0
        %v1090 = vadd.f32 0.0, %v1089
        %v1091 = vpop.f32.mrf.mxu0
        %1092 = vmatprep.mubr.f32.mxu0 0.0
        %1093 = vmatmul.mubr.f32.gmra.mxu0 %v919
        %v1094 = vpop.f32.mrf.mxu0
        %v1095 = vadd.f32 0.0, %v1094
        %v1096 = vpop.f32.mrf.mxu0
        %1097 = vmatprep.mubr.f32.mxu0 0.0
        %1098 = vmatmul.mubr.f32.gmra.mxu0 %v922
        %v1099 = vpop.f32.mrf.mxu0
        %v1100 = vadd.f32 0.0, %v1099
        %v1101 = vpop.f32.mrf.mxu0
        %1102 = vmatprep.mubr.f32.mxu0 0.0
        %1103 = vmatmul.mubr.f32.gmra.mxu0 %v925
        %v1104 = vpop.f32.mrf.mxu0
        %v1105 = vadd.f32 0.0, %v1104
        %v1106 = vpop.f32.mrf.mxu0
        %1107 = vmatprep.mubr.f32.mxu0 0.0
        %1108 = vmatmul.mubr.f32.gmra.mxu0 %v928
        %v1109 = vpop.f32.mrf.mxu0
        %v1110 = vadd.f32 0.0, %v1109
        %v1111 = vpop.f32.mrf.mxu0
        %1112 = vmatprep.mubr.f32.mxu0 0.0
        %1113 = vmatmul.mubr.f32.gmra.mxu0 %v931
        %v1114 = vpop.f32.mrf.mxu0
        %v1115 = vadd.f32 0.0, %v1114
        %v1116 = vpop.f32.mrf.mxu0
        %1117 = vmatprep.mubr.f32.mxu0 0.0
        %1118 = vmatmul.mubr.f32.gmra.mxu0 %v934
        %v1119 = vpop.f32.mrf.mxu0
        %v1120 = vadd.f32 0.0, %v1119
        %v1121 = vpop.f32.mrf.mxu0
        %1122 = vmatprep.mubr.f32.mxu0 0.0
        %1123 = vmatmul.mubr.f32.gmra.mxu0 %v937
        %v1124 = vpop.f32.mrf.mxu0
        %v1125 = vadd.f32 0.0, %v1124
        %v1126 = vpop.f32.mrf.mxu0
        %1127 = vmatprep.mubr.f32.mxu0 0.0
        %1128 = vmatmul.mubr.f32.gmra.mxu0 %v940
        %v1129 = vpop.f32.mrf.mxu0
        %v1130 = vadd.f32 0.0, %v1129
        %v1131 = vpop.f32.mrf.mxu0
        %1132 = vmatprep.mubr.f32.mxu0 0.0
        %1133 = vmatmul.mubr.f32.gmra.mxu0 %v943
        %v1134 = vpop.f32.mrf.mxu0
        %v1135 = vadd.f32 0.0, %v1134
        %v1136 = vpop.f32.mrf.mxu0
        %1137 = vmatprep.mubr.f32.mxu0 0.0
        %1138 = vmatmul.mubr.f32.gmra.mxu0 %v946
        %v1139 = vpop.f32.mrf.mxu0
        %v1140 = vadd.f32 0.0, %v1139
        %v1141 = vpop.f32.mrf.mxu0
        %1142 = vmatprep.mubr.f32.mxu0 0.0
        %1143 = vmatmul.mubr.f32.gmra.mxu0 %v949
        %v1144 = vpop.f32.mrf.mxu0
        %v1145 = vadd.f32 0.0, %v1144
        %v1146 = vpop.f32.mrf.mxu0
        %1147 = vmatprep.mubr.f32.mxu0 0.0
        %1148 = vmatmul.mubr.f32.gmra.mxu0 %v952
        %v1149 = vpop.f32.mrf.mxu0
        %v1150 = vadd.f32 0.0, %v1149
        %v1151 = vpop.f32.mrf.mxu0
        %1152 = vmatprep.mubr.f32.mxu0 0.0
        %1153 = vmatmul.mubr.f32.gmra.mxu0 %v955
        %v1154 = vpop.f32.mrf.mxu0
        %v1155 = vadd.f32 0.0, %v1154
        %v1156 = vpop.f32.mrf.mxu0
        %1157 = vmatprep.mubr.f32.mxu0 0.0
        %1158 = vmatmul.mubr.f32.gmra.mxu0 %v958
        %v1159 = vpop.f32.mrf.mxu0
        %v1160 = vadd.f32 0.0, %v1159
        %v1161 = vpop.f32.mrf.mxu0
        %1162 = vmatprep.mubr.f32.mxu0 0.0
        %1163 = vmatmul.mubr.f32.gmra.mxu0 %v961
        %v1164 = vpop.f32.mrf.mxu0
        %v1165 = vadd.f32 0.0, %v1164
        %v1166 = vpop.f32.mrf.mxu0
        %1167 = vmatprep.mubr.f32.mxu0 0.0
        %1168 = vmatmul.mubr.f32.gmra.mxu0 %v964
        %v1169 = vpop.f32.mrf.mxu0
        %v1170 = vadd.f32 0.0, %v1169
        %v1171 = vpop.f32.mrf.mxu0
        %1172 = vmatprep.mubr.f32.mxu0 0.0
        %1173 = vmatmul.mubr.f32.gmra.mxu0 %v967
        %v1174 = vpop.f32.mrf.mxu0
        %v1175 = vadd.f32 0.0, %v1174
        %v1176 = vpop.f32.mrf.mxu0
        %1177 = vmatprep.mubr.f32.mxu0 0.0
        %1178 = vmatmul.mubr.f32.gmra.mxu0 %v970
        %v1179 = vpop.f32.mrf.mxu0
        %v1180 = vadd.f32 0.0, %v1179
        %v1181 = vpop.f32.mrf.mxu0
        %1182 = vmatprep.mubr.f32.mxu0 0.0
        %1183 = vmatmul.mubr.f32.gmra.mxu0 %v973
        %v1184 = vpop.f32.mrf.mxu0
        %v1185 = vadd.f32 0.0, %v1184
        %v1186 = vpop.f32.mrf.mxu0
        %1187 = vmatprep.mubr.f32.mxu0 0.0
        %1188 = vmatmul.mubr.f32.gmra.mxu0 %v976
        %v1189 = vpop.f32.mrf.mxu0
        %v1190 = vadd.f32 0.0, %v1189
        %v1191 = vpop.f32.mrf.mxu0
        %1192 = vmatprep.mubr.f32.mxu0 0.0
        %1193 = vmatmul.mubr.f32.gmra.mxu0 %v979
        %v1194 = vpop.f32.mrf.mxu0
        %v1195 = vadd.f32 0.0, %v1194
        %v1196 = vpop.f32.mrf.mxu0
        %1197 = vmatprep.mubr.f32.mxu0 0.0
        %1198 = vmatmul.mubr.f32.gmra.mxu0 %v982
        %v1199 = vpop.f32.mrf.mxu0
        %v1200 = vadd.f32 0.0, %v1199
        %v1201 = vpop.f32.mrf.mxu0
        %1202 = vmatprep.mubr.f32.mxu0 0.0
        %1203 = vmatmul.mubr.f32.gmra.mxu0 %v985
        %v1204 = vpop.f32.mrf.mxu0
        %v1205 = vadd.f32 0.0, %v1204
        %v1206 = vpop.f32.mrf.mxu0
        %1207 = vmatprep.mubr.f32.mxu0 0.0
        %1208 = vmatmul.mubr.f32.gmra.mxu0 %v988
        %v1209 = vpop.f32.mrf.mxu0
        %v1210 = vadd.f32 0.0, %v1209
        %v1211 = vpop.f32.mrf.mxu0
        %1212 = vmatprep.mubr.f32.mxu0 0.0
        %1213 = vmatmul.mubr.f32.gmra.mxu0 %v991
        %v1214 = vpop.f32.mrf.mxu0
        %v1215 = vadd.f32 0.0, %v1214
        %v1216 = vpop.f32.mrf.mxu0
        %1217 = vdwg.mxu0
        %1218 = vxpose.xlu0.b32.start [1/16] %v1060, 128
        %1219 = vxpose.xlu0.b32.cont [2/16] %v1065, 128
        %1220 = vxpose.xlu0.b32.cont [3/16] %v1070, 128
        %1221 = vxpose.xlu0.b32.cont [4/16] %v1075, 128
        %1222 = vxpose.xlu0.b32.cont [5/16] %v1080, 128
        %1223 = vxpose.xlu0.b32.cont [6/16] %v1085, 128
        %1224 = vxpose.xlu0.b32.cont [7/16] %v1090, 128
        %1225 = vxpose.xlu0.b32.cont [8/16] %v1095, 128
        %1226 = vxpose.xlu0.b32.cont [9/16] %v1100, 128
        %1227 = vxpose.xlu0.b32.cont [10/16] %v1105, 128
        %1228 = vxpose.xlu0.b32.cont [11/16] %v1110, 128
        %1229 = vxpose.xlu0.b32.cont [12/16] %v1115, 128
        %1230 = vxpose.xlu0.b32.cont [13/16] %v1120, 128
        %1231 = vxpose.xlu0.b32.cont [14/16] %v1125, 128
        %1232 = vxpose.xlu0.b32.cont [15/16] %v1130, 128
        %1233 = vxpose.xlu0.b32.end [16/16] %v1135, 128
        %v1234 = vpop.trf.xlu0
        %v1235 = vpop.trf.xlu0
        %v1236 = vpop.trf.xlu0
        %v1237 = vpop.trf.xlu0
        %v1238 = vpop.trf.xlu0
        %v1239 = vpop.trf.xlu0
        %v1240 = vpop.trf.xlu0
        %v1241 = vpop.trf.xlu0
        %v1242 = vpop.trf.xlu0
        %v1243 = vpop.trf.xlu0
        %v1244 = vpop.trf.xlu0
        %v1245 = vpop.trf.xlu0
        %v1246 = vpop.trf.xlu0
        %v1247 = vpop.trf.xlu0
        %v1248 = vpop.trf.xlu0
        %v1249 = vpop.trf.xlu0
        %1250 = vxpose.xlu0.b32.start [1/16] %v1140, 128
        %1251 = vxpose.xlu0.b32.cont [2/16] %v1145, 128
        %1252 = vxpose.xlu0.b32.cont [3/16] %v1150, 128
        %1253 = vxpose.xlu0.b32.cont [4/16] %v1155, 128
        %1254 = vxpose.xlu0.b32.cont [5/16] %v1160, 128
        %1255 = vxpose.xlu0.b32.cont [6/16] %v1165, 128
        %1256 = vxpose.xlu0.b32.cont [7/16] %v1170, 128
        %1257 = vxpose.xlu0.b32.cont [8/16] %v1175, 128
        %1258 = vxpose.xlu0.b32.cont [9/16] %v1180, 128
        %1259 = vxpose.xlu0.b32.cont [10/16] %v1185, 128
        %1260 = vxpose.xlu0.b32.cont [11/16] %v1190, 128
        %1261 = vxpose.xlu0.b32.cont [12/16] %v1195, 128
        %1262 = vxpose.xlu0.b32.cont [13/16] %v1200, 128
        %1263 = vxpose.xlu0.b32.cont [14/16] %v1205, 128
        %1264 = vxpose.xlu0.b32.cont [15/16] %v1210, 128
        %1265 = vxpose.xlu0.b32.end [16/16] %v1215, 128
        %v1266 = vpop.trf.xlu0
        %v1267 = vpop.trf.xlu0
        %v1268 = vpop.trf.xlu0
        %v1269 = vpop.trf.xlu0
        %v1270 = vpop.trf.xlu0
        %v1271 = vpop.trf.xlu0
        %v1272 = vpop.trf.xlu0
        %v1273 = vpop.trf.xlu0
        %v1274 = vpop.trf.xlu0
        %v1275 = vpop.trf.xlu0
        %v1276 = vpop.trf.xlu0
        %v1277 = vpop.trf.xlu0
        %v1278 = vpop.trf.xlu0
        %v1279 = vpop.trf.xlu0
        %v1280 = vpop.trf.xlu0
        %v1281 = vpop.trf.xlu0
        %1282 = vmatprep.subr.mxu0 0.0
        %1283 = vmatpush1.msra.mxu0 %v777
        %1284 = vmatprep.subr.mxu0 0.0
        %1285 = vmatpush1.msra.mxu0 %v776
        %1286 = vmatprep.subr.mxu0 0.0
        %1287 = vmatpush1.msra.mxu0 %v775
        %1288 = vmatprep.subr.mxu0 0.0
        %1289 = vmatpush1.msra.mxu0 %v774
        %1290 = vmatprep.subr.mxu0 0.0
        %1291 = vmatpush1.msra.mxu0 %v773
        %1292 = vmatprep.subr.mxu0 0.0
        %1293 = vmatpush1.msra.mxu0 %v772
        %1294 = vmatprep.subr.mxu0 0.0
        %1295 = vmatpush1.msra.mxu0 %v771
        %1296 = vmatprep.subr.mxu0 0.0
        %1297 = vmatpush1.msra.mxu0 %v770
        %1298 = vmatprep.subr.mxu0 0.0
        %1299 = vmatpush1.msra.mxu0 %v769
        %1300 = vmatprep.subr.mxu0 0.0
        %1301 = vmatpush1.msra.mxu0 %v768
        %1302 = vmatprep.subr.mxu0 0.0
        %1303 = vmatpush1.msra.mxu0 %v767
        %1304 = vmatprep.subr.mxu0 0.0
        %1305 = vmatpush1.msra.mxu0 %v766
        %1306 = vmatprep.subr.mxu0 0.0
        %1307 = vmatpush1.msra.mxu0 %v765
        %1308 = vmatprep.subr.mxu0 0.0
        %1309 = vmatpush1.msra.mxu0 %v764
        %1310 = vmatprep.subr.mxu0 0.0
        %1311 = vmatpush1.msra.mxu0 %v763
        %1312 = vmatprep.subr.mxu0 0.0
        %1313 = vmatpush1.msra.mxu0 %v762
        %1314 = vmatprep.subr.mxu0 0.0
        %1315 = vmatpush2.msra.mxu0 %v793
        %1316 = vmatprep.subr.mxu0 0.0
        %1317 = vmatpush2.msra.mxu0 %v792
        %1318 = vmatprep.subr.mxu0 0.0
        %1319 = vmatpush2.msra.mxu0 %v791
        %1320 = vmatprep.subr.mxu0 0.0
        %1321 = vmatpush2.msra.mxu0 %v790
        %1322 = vmatprep.subr.mxu0 0.0
        %1323 = vmatpush2.msra.mxu0 %v789
        %1324 = vmatprep.subr.mxu0 0.0
        %1325 = vmatpush2.msra.mxu0 %v788
        %1326 = vmatprep.subr.mxu0 0.0
        %1327 = vmatpush2.msra.mxu0 %v787
        %1328 = vmatprep.subr.mxu0 0.0
        %1329 = vmatpush2.msra.mxu0 %v786
        %1330 = vmatprep.subr.mxu0 0.0
        %1331 = vmatpush2.msra.mxu0 %v785
        %1332 = vmatprep.subr.mxu0 0.0
        %1333 = vmatpush2.msra.mxu0 %v784
        %1334 = vmatprep.subr.mxu0 0.0
        %1335 = vmatpush2.msra.mxu0 %v783
        %1336 = vmatprep.subr.mxu0 0.0
        %1337 = vmatpush2.msra.mxu0 %v782
        %1338 = vmatprep.subr.mxu0 0.0
        %1339 = vmatpush2.msra.mxu0 %v781
        %1340 = vmatprep.subr.mxu0 0.0
        %1341 = vmatpush2.msra.mxu0 %v780
        %1342 = vmatprep.subr.mxu0 0.0
        %1343 = vmatpush2.msra.mxu0 %v779
        %1344 = vmatprep.subr.mxu0 0.0
        %1345 = vmatpush2.msra.mxu0 %v778
        %1346 = vmatprep.mubr.f32.mxu0 %v1266
        %1347 = vmatmul.mubr.f32.gmra.mxu0 %v1234
        %v1348 = vpop.f32.mrf.mxu0
        %v1349 = vadd.f32 0.0, %v1348
        %v1350 = vpop.f32.mrf.mxu0
        %1351 = vmatprep.mubr.f32.mxu0 %v1267
        %1352 = vmatmul.mubr.f32.gmra.mxu0 %v1235
        %v1353 = vpop.f32.mrf.mxu0
        %v1354 = vadd.f32 0.0, %v1353
        %v1355 = vpop.f32.mrf.mxu0
        %1356 = vmatprep.mubr.f32.mxu0 %v1268
        %1357 = vmatmul.mubr.f32.gmra.mxu0 %v1236
        %v1358 = vpop.f32.mrf.mxu0
        %v1359 = vadd.f32 0.0, %v1358
        %v1360 = vpop.f32.mrf.mxu0
        %1361 = vmatprep.mubr.f32.mxu0 %v1269
        %1362 = vmatmul.mubr.f32.gmra.mxu0 %v1237
        %v1363 = vpop.f32.mrf.mxu0
        %v1364 = vadd.f32 0.0, %v1363
        %v1365 = vpop.f32.mrf.mxu0
        %1366 = vdwg.mxu0
        %v1367 = vmul.f32 %v1349, %v634
        %v1368 = vmul.f32 %v1354, %v639
        %v1369 = vmul.f32 %v1359, %v644
        %v1370 = vmul.f32 %v1364, %v649
        %v1371 = vsub.f32 %v1349, %v1367
        %v1372 = vsub.f32 %v1354, %v1368
        %v1373 = vsub.f32 %v1359, %v1369
        %v1374 = vsub.f32 %v1364, %v1370
        %1375 = vrot.lane.b32.xlu0 %v1367, 1
        %v1376 = vpop.permute.xlu0 %1375
        %1377 = vrot.lane.b32.xlu0 %v1368, 1
        %v1378 = vpop.permute.xlu0 %1377
        %1379 = vrot.lane.b32.xlu0 %v1369, 1
        %v1380 = vpop.permute.xlu0 %1379
        %1381 = vrot.lane.b32.xlu0 %v1370, 1
        %v1382 = vpop.permute.xlu0 %1381
        %v1383 = vmax.f32 %v1367, %v1376
        %v1384 = vmax.f32 %v1368, %v1378
        %v1385 = vmax.f32 %v1369, %v1380
        %v1386 = vmax.f32 %v1370, %v1382
        %1387 = vrot.lane.b32.xlu0 %v1367, 127
        %v1388 = vpop.permute.xlu0 %1387
        %1389 = vrot.lane.b32.xlu0 %v1368, 127
        %v1390 = vpop.permute.xlu0 %1389
        %1391 = vrot.lane.b32.xlu0 %v1369, 127
        %v1392 = vpop.permute.xlu0 %1391
        %1393 = vrot.lane.b32.xlu0 %v1370, 127
        %v1394 = vpop.permute.xlu0 %1393
        %v1395 = vmax.f32 %v1383, %v1388
        %v1396 = vmax.f32 %v1384, %v1390
        %v1397 = vmax.f32 %v1385, %v1392
        %v1398 = vmax.f32 %v1386, %v1394
        %1399 = vrot.lane.b32.xlu0 %v1367, 2
        %v1400 = vpop.permute.xlu0 %1399
        %1401 = vrot.lane.b32.xlu0 %v1368, 2
        %v1402 = vpop.permute.xlu0 %1401
        %1403 = vrot.lane.b32.xlu0 %v1369, 2
        %v1404 = vpop.permute.xlu0 %1403
        %1405 = vrot.lane.b32.xlu0 %v1370, 2
        %v1406 = vpop.permute.xlu0 %1405
        %v1407 = vmax.f32 %v1395, %v1400
        %v1408 = vmax.f32 %v1396, %v1402
        %v1409 = vmax.f32 %v1397, %v1404
        %v1410 = vmax.f32 %v1398, %v1406
        %1411 = vrot.lane.b32.xlu0 %v1367, 126
        %v1412 = vpop.permute.xlu0 %1411
        %1413 = vrot.lane.b32.xlu0 %v1368, 126
        %v1414 = vpop.permute.xlu0 %1413
        %1415 = vrot.lane.b32.xlu0 %v1369, 126
        %v1416 = vpop.permute.xlu0 %1415
        %1417 = vrot.lane.b32.xlu0 %v1370, 126
        %v1418 = vpop.permute.xlu0 %1417
        %v1419 = vmax.f32 %v1407, %v1412
        %v1420 = vmax.f32 %v1408, %v1414
        %v1421 = vmax.f32 %v1409, %v1416
        %v1422 = vmax.f32 %v1410, %v1418
        %1423 = vrot.lane.b32.xlu0 %v1371, 1
        %v1424 = vpop.permute.xlu0 %1423
        %1425 = vrot.lane.b32.xlu0 %v1372, 1
        %v1426 = vpop.permute.xlu0 %1425
        %1427 = vrot.lane.b32.xlu0 %v1373, 1
        %v1428 = vpop.permute.xlu0 %1427
        %1429 = vrot.lane.b32.xlu0 %v1374, 1
        %v1430 = vpop.permute.xlu0 %1429
        %v1431 = vmax.f32 %v1371, %v1424
        %v1432 = vmax.f32 %v1372, %v1426
        %v1433 = vmax.f32 %v1373, %v1428
        %v1434 = vmax.f32 %v1374, %v1430
        %1435 = vrot.lane.b32.xlu0 %v1371, 127
        %v1436 = vpop.permute.xlu0 %1435
        %1437 = vrot.lane.b32.xlu0 %v1372, 127
        %v1438 = vpop.permute.xlu0 %1437
        %1439 = vrot.lane.b32.xlu0 %v1373, 127
        %v1440 = vpop.permute.xlu0 %1439
        %1441 = vrot.lane.b32.xlu0 %v1374, 127
        %v1442 = vpop.permute.xlu0 %1441
        %v1443 = vmax.f32 %v1431, %v1436
        %v1444 = vmax.f32 %v1432, %v1438
        %v1445 = vmax.f32 %v1433, %v1440
        %v1446 = vmax.f32 %v1434, %v1442
        %1447 = vrot.lane.b32.xlu0 %v1371, 2
        %v1448 = vpop.permute.xlu0 %1447
        %1449 = vrot.lane.b32.xlu0 %v1372, 2
        %v1450 = vpop.permute.xlu0 %1449
        %1451 = vrot.lane.b32.xlu0 %v1373, 2
        %v1452 = vpop.permute.xlu0 %1451
        %1453 = vrot.lane.b32.xlu0 %v1374, 2
        %v1454 = vpop.permute.xlu0 %1453
        %v1455 = vmax.f32 %v1443, %v1448
        %v1456 = vmax.f32 %v1444, %v1450
        %v1457 = vmax.f32 %v1445, %v1452
        %v1458 = vmax.f32 %v1446, %v1454
        %1459 = vrot.lane.b32.xlu0 %v1371, 126
        %v1460 = vpop.permute.xlu0 %1459
        %1461 = vrot.lane.b32.xlu0 %v1372, 126
        %v1462 = vpop.permute.xlu0 %1461
        %1463 = vrot.lane.b32.xlu0 %v1373, 126
        %v1464 = vpop.permute.xlu0 %1463
        %1465 = vrot.lane.b32.xlu0 %v1374, 126
        %v1466 = vpop.permute.xlu0 %1465
        %v1467 = vmax.f32 %v1455, %v1460
        %v1468 = vmax.f32 %v1456, %v1462
        %v1469 = vmax.f32 %v1457, %v1464
        %v1470 = vmax.f32 %v1458, %v1466
        %v1471 = vrot.slane %v1419, 7
        %v1472 = vrot.slane %v1467, 7
        %v1473 = vrot.slane %v1420, 7
        %v1474 = vrot.slane %v1468, 7
        %v1475 = vrot.slane %v1421, 7
        %v1476 = vrot.slane %v1469, 7
        %v1477 = vrot.slane %v1422, 7
        %v1478 = vrot.slane %v1470, 7
        %v1479 = vlaneseq
        %v1480 = vshrl.u32 %v1479, 7
        %vm1481 = vcmp.lt.s32.totalorder %v1480, 1
        %v1482 = vsel %vm1481, %v1475, %v1477
        %v1483 = vsel %vm1481, %v1476, %v1478
        %v1484 = vsel %vm1481, %v1473, %v1475
        %v1485 = vsel %vm1481, %v1474, %v1476
        %v1486 = vsel %vm1481, %v1471, %v1473
        %v1487 = vsel %vm1481, %v1472, %v1474
        %v1488 = vsel %vm1481, %v1477, %v1471
        %v1489 = vsel %vm1481, %v1478, %v1472
        %v1490 = vmax.f32 %v1419, %v1488
        %v1491 = vmax.f32 %v1467, %v1489
        %v1492 = vmax.f32 %v1420, %v1486
        %v1493 = vmax.f32 %v1468, %v1487
        %v1494 = vmax.f32 %v1421, %v1484
        %v1495 = vmax.f32 %v1469, %v1485
        %v1496 = vmax.f32 %v1422, %v1482
        %v1497 = vmax.f32 %v1470, %v1483
        %v1498 = vrot.slane %v1419, 1
        %v1499 = vrot.slane %v1467, 1
        %v1500 = vrot.slane %v1420, 1
        %v1501 = vrot.slane %v1468, 1
        %v1502 = vrot.slane %v1421, 1
        %v1503 = vrot.slane %v1469, 1
        %v1504 = vrot.slane %v1422, 1
        %v1505 = vrot.slane %v1470, 1
        %vm1506 = vcmp.lt.s32.totalorder %v1480, 7
        %v1507 = vsel %vm1506, %v1502, %v1504
        %v1508 = vsel %vm1506, %v1503, %v1505
        %v1509 = vsel %vm1506, %v1500, %v1502
        %v1510 = vsel %vm1506, %v1501, %v1503
        %v1511 = vsel %vm1506, %v1498, %v1500
        %v1512 = vsel %vm1506, %v1499, %v1501
        %v1513 = vsel %vm1506, %v1504, %v1498
        %v1514 = vsel %vm1506, %v1505, %v1499
        %v1515 = vmax.f32 %v1490, %v1511
        %v1516 = vmax.f32 %v1491, %v1512
        %v1517 = vmax.f32 %v1492, %v1509
        %v1518 = vmax.f32 %v1493, %v1510
        %v1519 = vmax.f32 %v1494, %v1507
        %v1520 = vmax.f32 %v1495, %v1508
        %v1521 = vmax.f32 %v1496, %v1513
        %v1522 = vmax.f32 %v1497, %v1514
        %v1523 = vrot.slane %v1419, 6
        %v1524 = vrot.slane %v1467, 6
        %v1525 = vrot.slane %v1420, 6
        %v1526 = vrot.slane %v1468, 6
        %v1527 = vrot.slane %v1421, 6
        %v1528 = vrot.slane %v1469, 6
        %v1529 = vrot.slane %v1422, 6
        %v1530 = vrot.slane %v1470, 6
        %vm1531 = vcmp.lt.s32.totalorder %v1480, 2
        %v1532 = vsel %vm1531, %v1527, %v1529
        %v1533 = vsel %vm1531, %v1528, %v1530
        %v1534 = vsel %vm1531, %v1525, %v1527
        %v1535 = vsel %vm1531, %v1526, %v1528
        %v1536 = vsel %vm1531, %v1523, %v1525
        %v1537 = vsel %vm1531, %v1524, %v1526
        %v1538 = vsel %vm1531, %v1529, %v1523
        %v1539 = vsel %vm1531, %v1530, %v1524
        %v1540 = vmax.f32 %v1515, %v1538
        %v1541 = vmax.f32 %v1516, %v1539
        %v1542 = vmax.f32 %v1517, %v1536
        %v1543 = vmax.f32 %v1518, %v1537
        %v1544 = vmax.f32 %v1519, %v1534
        %v1545 = vmax.f32 %v1520, %v1535
        %v1546 = vmax.f32 %v1521, %v1532
        %v1547 = vmax.f32 %v1522, %v1533
        %v1548 = vrot.slane %v1419, 2
        %v1549 = vrot.slane %v1467, 2
        %v1550 = vrot.slane %v1420, 2
        %v1551 = vrot.slane %v1468, 2
        %v1552 = vrot.slane %v1421, 2
        %v1553 = vrot.slane %v1469, 2
        %v1554 = vrot.slane %v1422, 2
        %v1555 = vrot.slane %v1470, 2
        %vm1556 = vcmp.lt.s32.totalorder %v1480, 6
        %v1557 = vsel %vm1556, %v1552, %v1554
        %v1558 = vsel %vm1556, %v1553, %v1555
        %v1559 = vsel %vm1556, %v1550, %v1552
        %v1560 = vsel %vm1556, %v1551, %v1553
        %v1561 = vsel %vm1556, %v1548, %v1550
        %v1562 = vsel %vm1556, %v1549, %v1551
        %v1563 = vsel %vm1556, %v1554, %v1548
        %v1564 = vsel %vm1556, %v1555, %v1549
        %v1565 = vmax.f32 %v1540, %v1561
        %v1566 = vmax.f32 %v1541, %v1562
        %v1567 = vmax.f32 %v1542, %v1559
        %v1568 = vmax.f32 %v1543, %v1560
        %v1569 = vmax.f32 %v1544, %v1557
        %v1570 = vmax.f32 %v1545, %v1558
        %v1571 = vmax.f32 %v1546, %v1563
        %v1572 = vmax.f32 %v1547, %v1564
        %v1574 = vsel %vm554, %v794, 0
        %v1577 = vsel %vm554, %v795, 0
        %1579 = vmatprep.subr.mxu0 0.0
        %1580 = vmatpush1.msra.mxu0 0.0
        %1581 = vmatprep.subr.mxu0 0.0
        %1582 = vmatpush1.msra.mxu0 0.0
        %1583 = vmatprep.subr.mxu0 0.0
        %1584 = vmatpush1.msra.mxu0 0.0
        %1585 = vmatprep.subr.mxu0 0.0
        %1586 = vmatpush1.msra.mxu0 0.0
        %1587 = vmatprep.subr.mxu0 0.0
        %1588 = vmatpush1.msra.mxu0 0.0
        %1589 = vmatprep.subr.mxu0 0.0
        %1590 = vmatpush1.msra.mxu0 0.0
        %1591 = vmatprep.subr.mxu0 0.0
        %1592 = vmatpush1.msra.mxu0 0.0
        %1593 = vmatprep.subr.mxu0 0.0
        %1594 = vmatpush1.msra.mxu0 0.0
        %1595 = vmatprep.subr.mxu0 0.0
        %1596 = vmatpush1.msra.mxu0 0.0
        %1597 = vmatprep.subr.mxu0 0.0
        %1598 = vmatpush1.msra.mxu0 0.0
        %1599 = vmatprep.subr.mxu0 0.0
        %1600 = vmatpush1.msra.mxu0 0.0
        %1601 = vmatprep.subr.mxu0 0.0
        %1602 = vmatpush1.msra.mxu0 0.0
        %1603 = vmatprep.subr.mxu0 %v1572
        %1604 = vmatpush1.msra.mxu0 %v1571
        %1605 = vmatprep.subr.mxu0 %v1570
        %1606 = vmatpush1.msra.mxu0 %v1569
        %1607 = vmatprep.subr.mxu0 %v1568
        %1608 = vmatpush1.msra.mxu0 %v1567
        %1609 = vmatprep.subr.mxu0 %v1566
        %1610 = vmatpush1.msra.mxu0 %v1565
        %1611 = vmatprep.subr.mxu0 0.0
        %1612 = vmatpush2.msra.mxu0 0.0
        %1613 = vmatprep.subr.mxu0 0.0
        %1614 = vmatpush2.msra.mxu0 0.0
        %1615 = vmatprep.subr.mxu0 0.0
        %1616 = vmatpush2.msra.mxu0 0.0
        %1617 = vmatprep.subr.mxu0 0.0
        %1618 = vmatpush2.msra.mxu0 0.0
        %1619 = vmatprep.subr.mxu0 0.0
        %1620 = vmatpush2.msra.mxu0 0.0
        %1621 = vmatprep.subr.mxu0 0.0
        %1622 = vmatpush2.msra.mxu0 0.0
        %1623 = vmatprep.subr.mxu0 0.0
        %1624 = vmatpush2.msra.mxu0 0.0
        %1625 = vmatprep.subr.mxu0 0.0
        %1626 = vmatpush2.msra.mxu0 0.0
        %1627 = vmatprep.subr.mxu0 0.0
        %1628 = vmatpush2.msra.mxu0 0.0
        %1629 = vmatprep.subr.mxu0 0.0
        %1630 = vmatpush2.msra.mxu0 0.0
        %1631 = vmatprep.subr.mxu0 0.0
        %1632 = vmatpush2.msra.mxu0 0.0
        %1633 = vmatprep.subr.mxu0 0.0
        %1634 = vmatpush2.msra.mxu0 0.0
        %1635 = vmatprep.subr.mxu0 0.0
        %1636 = vmatpush2.msra.mxu0 0.0
        %1637 = vmatprep.subr.mxu0 0.0
        %1638 = vmatpush2.msra.mxu0 0.0
        %1639 = vmatprep.subr.mxu0 0.0
        %1640 = vmatpush2.msra.mxu0 0.0
        %1641 = vmatprep.subr.mxu0 0.0
        %1642 = vmatpush2.msra.mxu0 0.0
        %1643 = vmatprep.mubr.f32.mxu0 0.0
        %1644 = vmatmul.mubr.f32.gmra.mxu0 %v1574
        %v1645 = vpop.f32.mrf.mxu0
        %v1646 = vadd.f32 0.0, %v1645
        %v1647 = vpop.f32.mrf.mxu0
        %v1648 = vadd.f32 0.0, %v1647
        %1649 = vmatprep.mubr.f32.mxu0 0.0
        %1650 = vmatmul.mubr.f32.gmra.mxu0 %v1577
        %v1651 = vpop.f32.mrf.mxu0
        %v1652 = vadd.f32 0.0, %v1651
        %v1653 = vpop.f32.mrf.mxu0
        %v1654 = vadd.f32 0.0, %v1653
        %1655 = vdwg.mxu0
        %1656 = vmatprep.subr.mxu0 0.0
        %1657 = vmatpush1.msra.mxu0 %v811
        %1658 = vmatprep.subr.mxu0 0.0
        %1659 = vmatpush1.msra.mxu0 %v810
        %1660 = vmatprep.subr.mxu0 0.0
        %1661 = vmatpush1.msra.mxu0 %v809
        %1662 = vmatprep.subr.mxu0 0.0
        %1663 = vmatpush1.msra.mxu0 %v808
        %1664 = vmatprep.subr.mxu0 0.0
        %1665 = vmatpush1.msra.mxu0 %v807
        %1666 = vmatprep.subr.mxu0 0.0
        %1667 = vmatpush1.msra.mxu0 %v806
        %1668 = vmatprep.subr.mxu0 0.0
        %1669 = vmatpush1.msra.mxu0 %v805
        %1670 = vmatprep.subr.mxu0 0.0
        %1671 = vmatpush1.msra.mxu0 %v804
        %1672 = vmatprep.subr.mxu0 0.0
        %1673 = vmatpush1.msra.mxu0 %v803
        %1674 = vmatprep.subr.mxu0 0.0
        %1675 = vmatpush1.msra.mxu0 %v802
        %1676 = vmatprep.subr.mxu0 0.0
        %1677 = vmatpush1.msra.mxu0 %v801
        %1678 = vmatprep.subr.mxu0 0.0
        %1679 = vmatpush1.msra.mxu0 %v800
        %1680 = vmatprep.subr.mxu0 0.0
        %1681 = vmatpush1.msra.mxu0 %v799
        %1682 = vmatprep.subr.mxu0 0.0
        %1683 = vmatpush1.msra.mxu0 %v798
        %1684 = vmatprep.subr.mxu0 0.0
        %1685 = vmatpush1.msra.mxu0 %v797
        %1686 = vmatprep.subr.mxu0 0.0
        %1687 = vmatpush1.msra.mxu0 %v796
        %1688 = vmatprep.subr.mxu0 0.0
        %1689 = vmatpush2.msra.mxu0 %v827
        %1690 = vmatprep.subr.mxu0 0.0
        %1691 = vmatpush2.msra.mxu0 %v826
        %1692 = vmatprep.subr.mxu0 0.0
        %1693 = vmatpush2.msra.mxu0 %v825
        %1694 = vmatprep.subr.mxu0 0.0
        %1695 = vmatpush2.msra.mxu0 %v824
        %1696 = vmatprep.subr.mxu0 0.0
        %1697 = vmatpush2.msra.mxu0 %v823
        %1698 = vmatprep.subr.mxu0 0.0
        %1699 = vmatpush2.msra.mxu0 %v822
        %1700 = vmatprep.subr.mxu0 0.0
        %1701 = vmatpush2.msra.mxu0 %v821
        %1702 = vmatprep.subr.mxu0 0.0
        %1703 = vmatpush2.msra.mxu0 %v820
        %1704 = vmatprep.subr.mxu0 0.0
        %1705 = vmatpush2.msra.mxu0 %v819
        %1706 = vmatprep.subr.mxu0 0.0
        %1707 = vmatpush2.msra.mxu0 %v818
        %1708 = vmatprep.subr.mxu0 0.0
        %1709 = vmatpush2.msra.mxu0 %v817
        %1710 = vmatprep.subr.mxu0 0.0
        %1711 = vmatpush2.msra.mxu0 %v816
        %1712 = vmatprep.subr.mxu0 0.0
        %1713 = vmatpush2.msra.mxu0 %v815
        %1714 = vmatprep.subr.mxu0 0.0
        %1715 = vmatpush2.msra.mxu0 %v814
        %1716 = vmatprep.subr.mxu0 0.0
        %1717 = vmatpush2.msra.mxu0 %v813
        %1718 = vmatprep.subr.mxu0 0.0
        %1719 = vmatpush2.msra.mxu0 %v812
        %1720 = vmatprep.mubr.f32.mxu0 %v1648
        %1721 = vmatmul.mubr.f32.gmra.mxu0 %v1646
        %v1722 = vpop.f32.mrf.mxu0
        %v1723 = vadd.f32 0.0, %v1722
        %v1724 = vpop.f32.mrf.mxu0
        %1725 = vmatprep.mubr.f32.mxu0 %v1654
        %1726 = vmatmul.mubr.f32.gmra.mxu0 %v1652
        %v1727 = vpop.f32.mrf.mxu0
        %v1728 = vadd.f32 0.0, %v1727
        %v1729 = vpop.f32.mrf.mxu0
        %1730 = vdwg.mxu0
        %1731 = vrot.lane.b32.xlu0 %v1723, 1
        %v1732 = vpop.permute.xlu0 %1731
        %1733 = vrot.lane.b32.xlu0 %v1728, 1
        %v1734 = vpop.permute.xlu0 %1733
        %v1735 = vmax.f32 %v1723, %v1732
        %v1736 = vmax.f32 %v1728, %v1734
        %1737 = vrot.lane.b32.xlu0 %v1723, 127
        %v1738 = vpop.permute.xlu0 %1737
        %1739 = vrot.lane.b32.xlu0 %v1728, 127
        %v1740 = vpop.permute.xlu0 %1739
        %v1741 = vmax.f32 %v1735, %v1738
        %v1742 = vmax.f32 %v1736, %v1740
        %1743 = vrot.lane.b32.xlu0 %v1723, 2
        %v1744 = vpop.permute.xlu0 %1743
        %1745 = vrot.lane.b32.xlu0 %v1728, 2
        %v1746 = vpop.permute.xlu0 %1745
        %v1747 = vmax.f32 %v1741, %v1744
        %v1748 = vmax.f32 %v1742, %v1746
        %1749 = vrot.lane.b32.xlu0 %v1723, 126
        %v1750 = vpop.permute.xlu0 %1749
        %1751 = vrot.lane.b32.xlu0 %v1728, 126
        %v1752 = vpop.permute.xlu0 %1751
        %v1753 = vmax.f32 %v1747, %v1750
        %v1754 = vmax.f32 %v1748, %v1752
        %v1755 = vrot.slane %v1753, 7
        %v1756 = vrot.slane %v1754, 7
        %v1757 = vsel %vm1481, %v1755, %v1756
        %v1758 = vsel %vm1481, %v1756, %v1755
        %v1759 = vmax.f32 %v1753, %v1758
        %v1760 = vmax.f32 %v1754, %v1757
        %v1761 = vrot.slane %v1753, 1
        %v1762 = vrot.slane %v1754, 1
        %v1763 = vsel %vm1506, %v1761, %v1762
        %v1764 = vsel %vm1506, %v1762, %v1761
        %v1765 = vmax.f32 %v1759, %v1763
        %v1766 = vmax.f32 %v1760, %v1764
        %v1767 = vrot.slane %v1753, 6
        %v1768 = vrot.slane %v1754, 6
        %v1769 = vsel %vm1531, %v1767, %v1768
        %v1770 = vsel %vm1531, %v1768, %v1767
        %v1771 = vmax.f32 %v1765, %v1770
        %v1772 = vmax.f32 %v1766, %v1769
        %v1773 = vrot.slane %v1753, 2
        %v1774 = vrot.slane %v1754, 2
        %v1775 = vsel %vm1556, %v1773, %v1774
        %v1776 = vsel %vm1556, %v1774, %v1773
        %v1777 = vmax.f32 %v1771, %v1775
        %v1778 = vmax.f32 %v1772, %v1776
        %vm1779 = vcmask 130048
        %v1781 = vsel %vm1779, %v828, 0
        %v1784 = vsel %vm1779, %v829, 0
        %v1787 = vsel %vm1779, %v830, 0
        %v1790 = vsel %vm1779, %v831, 0
        %1792 = vmatprep.subr.mxu0 0.0
        %1793 = vmatpush1.msra.mxu0 0.0
        %1794 = vmatprep.subr.mxu0 0.0
        %1795 = vmatpush1.msra.mxu0 0.0
        %1796 = vmatprep.subr.mxu0 0.0
        %1797 = vmatpush1.msra.mxu0 0.0
        %1798 = vmatprep.subr.mxu0 0.0
        %1799 = vmatpush1.msra.mxu0 0.0
        %1800 = vmatprep.subr.mxu0 0.0
        %1801 = vmatpush1.msra.mxu0 0.0
        %1802 = vmatprep.subr.mxu0 0.0
        %1803 = vmatpush1.msra.mxu0 0.0
        %1804 = vmatprep.subr.mxu0 0.0
        %1805 = vmatpush1.msra.mxu0 0.0
        %1806 = vmatprep.subr.mxu0 0.0
        %1807 = vmatpush1.msra.mxu0 0.0
        %1808 = vmatprep.subr.mxu0 0.0
        %1809 = vmatpush1.msra.mxu0 0.0
        %1810 = vmatprep.subr.mxu0 0.0
        %1811 = vmatpush1.msra.mxu0 0.0
        %1812 = vmatprep.subr.mxu0 0.0
        %1813 = vmatpush1.msra.mxu0 0.0
        %1814 = vmatprep.subr.mxu0 0.0
        %1815 = vmatpush1.msra.mxu0 0.0
        %1816 = vmatprep.subr.mxu0 0.0
        %1817 = vmatpush1.msra.mxu0 0.0
        %1818 = vmatprep.subr.mxu0 0.0
        %1819 = vmatpush1.msra.mxu0 0.0
        %1820 = vmatprep.subr.mxu0 0.0
        %1821 = vmatpush1.msra.mxu0 %v1778
        %1822 = vmatprep.subr.mxu0 0.0
        %1823 = vmatpush1.msra.mxu0 %v1777
        %1824 = vmatprep.subr.mxu0 0.0
        %1825 = vmatpush2.msra.mxu0 0.0
        %1826 = vmatprep.subr.mxu0 0.0
        %1827 = vmatpush2.msra.mxu0 0.0
        %1828 = vmatprep.subr.mxu0 0.0
        %1829 = vmatpush2.msra.mxu0 0.0
        %1830 = vmatprep.subr.mxu0 0.0
        %1831 = vmatpush2.msra.mxu0 0.0
        %1832 = vmatprep.subr.mxu0 0.0
        %1833 = vmatpush2.msra.mxu0 0.0
        %1834 = vmatprep.subr.mxu0 0.0
        %1835 = vmatpush2.msra.mxu0 0.0
        %1836 = vmatprep.subr.mxu0 0.0
        %1837 = vmatpush2.msra.mxu0 0.0
        %1838 = vmatprep.subr.mxu0 0.0
        %1839 = vmatpush2.msra.mxu0 0.0
        %1840 = vmatprep.subr.mxu0 0.0
        %1841 = vmatpush2.msra.mxu0 0.0
        %1842 = vmatprep.subr.mxu0 0.0
        %1843 = vmatpush2.msra.mxu0 0.0
        %1844 = vmatprep.subr.mxu0 0.0
        %1845 = vmatpush2.msra.mxu0 0.0
        %1846 = vmatprep.subr.mxu0 0.0
        %1847 = vmatpush2.msra.mxu0 0.0
        %1848 = vmatprep.subr.mxu0 0.0
        %1849 = vmatpush2.msra.mxu0 0.0
        %1850 = vmatprep.subr.mxu0 0.0
        %1851 = vmatpush2.msra.mxu0 0.0
        %1852 = vmatprep.subr.mxu0 0.0
        %1853 = vmatpush2.msra.mxu0 0.0
        %1854 = vmatprep.subr.mxu0 0.0
        %1855 = vmatpush2.msra.mxu0 0.0
        %1856 = vmatprep.mubr.f32.mxu0 0.0
        %1857 = vmatmul.mubr.f32.gmra.mxu0 %v1781
        %v1858 = vpop.f32.mrf.mxu0
        %v1859 = vadd.f32 0.0, %v1858
        %v1860 = vpop.f32.mrf.mxu0
        %1861 = vmatprep.mubr.f32.mxu0 0.0
        %1862 = vmatmul.mubr.f32.gmra.mxu0 %v1784
        %v1863 = vpop.f32.mrf.mxu0
        %v1864 = vadd.f32 0.0, %v1863
        %v1865 = vpop.f32.mrf.mxu0
        %1866 = vmatprep.mubr.f32.mxu0 0.0
        %1867 = vmatmul.mubr.f32.gmra.mxu0 %v1787
        %v1868 = vpop.f32.mrf.mxu0
        %v1869 = vadd.f32 0.0, %v1868
        %v1870 = vpop.f32.mrf.mxu0
        %1871 = vmatprep.mubr.f32.mxu0 0.0
        %1872 = vmatmul.mubr.f32.gmra.mxu0 %v1790
        %v1873 = vpop.f32.mrf.mxu0
        %v1874 = vadd.f32 0.0, %v1873
        %v1875 = vpop.f32.mrf.mxu0
        %1876 = vdwg.mxu0
        %1877 = vmatprep.subr.mxu0 %v863
        %1878 = vmatpush1.msra.mxu0 %v862
        %1879 = vmatprep.subr.mxu0 %v861
        %1880 = vmatpush1.msra.mxu0 %v860
        %1881 = vmatprep.subr.mxu0 %v859
        %1882 = vmatpush1.msra.mxu0 %v858
        %1883 = vmatprep.subr.mxu0 %v857
        %1884 = vmatpush1.msra.mxu0 %v856
        %1885 = vmatprep.subr.mxu0 %v855
        %1886 = vmatpush1.msra.mxu0 %v854
        %1887 = vmatprep.subr.mxu0 %v853
        %1888 = vmatpush1.msra.mxu0 %v852
        %1889 = vmatprep.subr.mxu0 %v851
        %1890 = vmatpush1.msra.mxu0 %v850
        %1891 = vmatprep.subr.mxu0 %v849
        %1892 = vmatpush1.msra.mxu0 %v848
        %1893 = vmatprep.subr.mxu0 %v847
        %1894 = vmatpush1.msra.mxu0 %v846
        %1895 = vmatprep.subr.mxu0 %v845
        %1896 = vmatpush1.msra.mxu0 %v844
        %1897 = vmatprep.subr.mxu0 %v843
        %1898 = vmatpush1.msra.mxu0 %v842
        %1899 = vmatprep.subr.mxu0 %v841
        %1900 = vmatpush1.msra.mxu0 %v840
        %1901 = vmatprep.subr.mxu0 %v839
        %1902 = vmatpush1.msra.mxu0 %v838
        %1903 = vmatprep.subr.mxu0 %v837
        %1904 = vmatpush1.msra.mxu0 %v836
        %1905 = vmatprep.subr.mxu0 %v835
        %1906 = vmatpush1.msra.mxu0 %v834
        %1907 = vmatprep.subr.mxu0 %v833
        %1908 = vmatpush1.msra.mxu0 %v832
        %1909 = vmatprep.subr.mxu0 0.0
        %1910 = vmatpush2.msra.mxu0 0.0
        %1911 = vmatprep.subr.mxu0 0.0
        %1912 = vmatpush2.msra.mxu0 0.0
        %1913 = vmatprep.subr.mxu0 0.0
        %1914 = vmatpush2.msra.mxu0 0.0
        %1915 = vmatprep.subr.mxu0 0.0
        %1916 = vmatpush2.msra.mxu0 0.0
        %1917 = vmatprep.subr.mxu0 0.0
        %1918 = vmatpush2.msra.mxu0 0.0
        %1919 = vmatprep.subr.mxu0 0.0
        %1920 = vmatpush2.msra.mxu0 0.0
        %1921 = vmatprep.subr.mxu0 0.0
        %1922 = vmatpush2.msra.mxu0 0.0
        %1923 = vmatprep.subr.mxu0 0.0
        %1924 = vmatpush2.msra.mxu0 0.0
        %1925 = vmatprep.subr.mxu0 0.0
        %1926 = vmatpush2.msra.mxu0 0.0
        %1927 = vmatprep.subr.mxu0 0.0
        %1928 = vmatpush2.msra.mxu0 0.0
        %1929 = vmatprep.subr.mxu0 0.0
        %1930 = vmatpush2.msra.mxu0 0.0
        %1931 = vmatprep.subr.mxu0 0.0
        %1932 = vmatpush2.msra.mxu0 0.0
        %1933 = vmatprep.subr.mxu0 0.0
        %1934 = vmatpush2.msra.mxu0 0.0
        %1935 = vmatprep.subr.mxu0 0.0
        %1936 = vmatpush2.msra.mxu0 0.0
        %1937 = vmatprep.subr.mxu0 0.0
        %1938 = vmatpush2.msra.mxu0 0.0
        %1939 = vmatprep.subr.mxu0 0.0
        %1940 = vmatpush2.msra.mxu0 0.0
        %1941 = vmatprep.mubr.f32.mxu0 0.0
        %1942 = vmatmul.mubr.f32.gmra.mxu0 %v1859
        %v1943 = vpop.f32.mrf.mxu0
        %v1944 = vadd.f32 0.0, %v1943
        %v1945 = vpop.f32.mrf.mxu0
        %v1946 = vadd.f32 0.0, %v1945
        %1947 = vmatprep.mubr.f32.mxu0 0.0
        %1948 = vmatmul.mubr.f32.gmra.mxu0 %v1864
        %v1949 = vpop.f32.mrf.mxu0
        %v1950 = vadd.f32 0.0, %v1949
        %v1951 = vpop.f32.mrf.mxu0
        %v1952 = vadd.f32 0.0, %v1951
        %1953 = vmatprep.mubr.f32.mxu0 0.0
        %1954 = vmatmul.mubr.f32.gmra.mxu0 %v1869
        %v1955 = vpop.f32.mrf.mxu0
        %v1956 = vadd.f32 0.0, %v1955
        %v1957 = vpop.f32.mrf.mxu0
        %v1958 = vadd.f32 0.0, %v1957
        %1959 = vmatprep.mubr.f32.mxu0 0.0
        %1960 = vmatmul.mubr.f32.gmra.mxu0 %v1874
        %v1961 = vpop.f32.mrf.mxu0
        %v1962 = vadd.f32 0.0, %v1961
        %v1963 = vpop.f32.mrf.mxu0
        %v1964 = vadd.f32 0.0, %v1963
        %1965 = vdwg.mxu0
        %v1966 = vsub.f32 %v1944, %v1946
        %v1967 = vsub.f32 %v1950, %v1952
        %v1968 = vsub.f32 %v1956, %v1958
        %v1969 = vsub.f32 %v1962, %v1964
        %v1970 = vmul.f32 %v1966, %v736
        %v1971 = vmul.f32 %v1967, %v741
        %v1972 = vmul.f32 %v1968, %v746
        %v1973 = vmul.f32 %v1969, %v751
        %v1974 = vadd.f32 %v1946, %v1970
        %v1975 = vadd.f32 %v1952, %v1971
        %v1976 = vadd.f32 %v1958, %v1972
        %v1977 = vadd.f32 %v1964, %v1973
        %1978 = vst [vmem:[%s544] sm:$0xff] %v1974
        %1979 = vst [vmem:[%s544 + $0x8] sm:$0xff] %v1975
        %1980 = vst [vmem:[%s544 + $0x10] sm:$0xff] %v1976
        %1981 = vst [vmem:[%s544 + $0x18] sm:$0xff] %v1977
        %v1982 = vld [vmem:[%s533 + $0x100] sm:$0xff]
        %v1983 = vld [vmem:[%s533 + $0x108] sm:$0xff]
        %v1984 = vld [vmem:[%s533 + $0x110] sm:$0xff]
        %v1985 = vld [vmem:[%s533 + $0x118] sm:$0xff]
        %v1986 = vld [vmem:[%s533 + $0x120] sm:$0xff]
        %v1987 = vld [vmem:[%s533 + $0x128] sm:$0xff]
        %v1988 = vld [vmem:[%s533 + $0x130] sm:$0xff]
        %v1989 = vld [vmem:[%s533 + $0x138] sm:$0xff]
        %v1990 = vld [vmem:[%s533 + $0x140] sm:$0xff]
        %v1991 = vld [vmem:[%s533 + $0x148] sm:$0xff]
        %v1992 = vld [vmem:[%s533 + $0x150] sm:$0xff]
        %v1993 = vld [vmem:[%s533 + $0x158] sm:$0xff]
        %v1994 = vld [vmem:[%s533 + $0x160] sm:$0xff]
        %v1995 = vld [vmem:[%s533 + $0x168] sm:$0xff]
        %v1996 = vld [vmem:[%s533 + $0x170] sm:$0xff]
        %v1997 = vld [vmem:[%s533 + $0x178] sm:$0xff]
        %v1998 = vld [vmem:[%s533 + $0x180] sm:$0xff]
        %v1999 = vld [vmem:[%s533 + $0x188] sm:$0xff]
        %v2000 = vld [vmem:[%s533 + $0x190] sm:$0xff]
        %v2001 = vld [vmem:[%s533 + $0x198] sm:$0xff]
        %v2002 = vld [vmem:[%s533 + $0x1a0] sm:$0xff]
        %v2003 = vld [vmem:[%s533 + $0x1a8] sm:$0xff]
        %v2004 = vld [vmem:[%s533 + $0x1b0] sm:$0xff]
        %v2005 = vld [vmem:[%s533 + $0x1b8] sm:$0xff]
        %v2006 = vld [vmem:[%s533 + $0x1c0] sm:$0xff]
        %v2007 = vld [vmem:[%s533 + $0x1c8] sm:$0xff]
        %v2008 = vld [vmem:[%s533 + $0x1d0] sm:$0xff]
        %v2009 = vld [vmem:[%s533 + $0x1d8] sm:$0xff]
        %v2010 = vld [vmem:[%s533 + $0x1e0] sm:$0xff]
        %v2011 = vld [vmem:[%s533 + $0x1e8] sm:$0xff]
        %v2012 = vld [vmem:[%s533 + $0x1f0] sm:$0xff]
        %v2013 = vld [vmem:[%s533 + $0x1f8] sm:$0xff]
        %v2015 = vsel %vm896, %v1982, 0
        %v2018 = vsel %vm896, %v1983, 0
        %v2021 = vsel %vm896, %v1984, 0
        %v2024 = vsel %vm896, %v1985, 0
        %v2027 = vsel %vm896, %v1986, 0
        %v2030 = vsel %vm896, %v1987, 0
        %v2033 = vsel %vm896, %v1988, 0
        %v2036 = vsel %vm896, %v1989, 0
        %v2039 = vsel %vm896, %v1990, 0
        %v2042 = vsel %vm896, %v1991, 0
        %v2045 = vsel %vm896, %v1992, 0
        %v2048 = vsel %vm896, %v1993, 0
        %v2051 = vsel %vm896, %v1994, 0
        %v2054 = vsel %vm896, %v1995, 0
        %v2057 = vsel %vm896, %v1996, 0
        %v2060 = vsel %vm896, %v1997, 0
        %v2063 = vsel %vm896, %v1998, 0
        %v2066 = vsel %vm896, %v1999, 0
        %v2069 = vsel %vm896, %v2000, 0
        %v2072 = vsel %vm896, %v2001, 0
        %v2075 = vsel %vm896, %v2002, 0
        %v2078 = vsel %vm896, %v2003, 0
        %v2081 = vsel %vm896, %v2004, 0
        %v2084 = vsel %vm896, %v2005, 0
        %v2087 = vsel %vm896, %v2006, 0
        %v2090 = vsel %vm896, %v2007, 0
        %v2093 = vsel %vm896, %v2008, 0
        %v2096 = vsel %vm896, %v2009, 0
        %v2099 = vsel %vm896, %v2010, 0
        %v2102 = vsel %vm896, %v2011, 0
        %v2105 = vsel %vm896, %v2012, 0
        %v2108 = vsel %vm896, %v2013, 0
        %2110 = vmatprep.subr.mxu0 0.0
        %2111 = vmatpush1.msra.mxu0 0.0
        %2112 = vmatprep.subr.mxu0 0.0
        %2113 = vmatpush1.msra.mxu0 0.0
        %2114 = vmatprep.subr.mxu0 0.0
        %2115 = vmatpush1.msra.mxu0 0.0
        %2116 = vmatprep.subr.mxu0 0.0
        %2117 = vmatpush1.msra.mxu0 0.0
        %2118 = vmatprep.subr.mxu0 0.0
        %2119 = vmatpush1.msra.mxu0 0.0
        %2120 = vmatprep.subr.mxu0 0.0
        %2121 = vmatpush1.msra.mxu0 0.0
        %2122 = vmatprep.subr.mxu0 0.0
        %2123 = vmatpush1.msra.mxu0 0.0
        %2124 = vmatprep.subr.mxu0 0.0
        %2125 = vmatpush1.msra.mxu0 0.0
        %2126 = vmatprep.subr.mxu0 0.0
        %2127 = vmatpush1.msra.mxu0 %v761
        %2128 = vmatprep.subr.mxu0 0.0
        %2129 = vmatpush1.msra.mxu0 %v760
        %2130 = vmatprep.subr.mxu0 0.0
        %2131 = vmatpush1.msra.mxu0 %v759
        %2132 = vmatprep.subr.mxu0 0.0
        %2133 = vmatpush1.msra.mxu0 %v758
        %2134 = vmatprep.subr.mxu0 0.0
        %2135 = vmatpush1.msra.mxu0 %v757
        %2136 = vmatprep.subr.mxu0 0.0
        %2137 = vmatpush1.msra.mxu0 %v756
        %2138 = vmatprep.subr.mxu0 0.0
        %2139 = vmatpush1.msra.mxu0 %v755
        %2140 = vmatprep.subr.mxu0 0.0
        %2141 = vmatpush1.msra.mxu0 %v754
        %2142 = vmatprep.subr.mxu0 0.0
        %2143 = vmatpush2.msra.mxu0 0.0
        %2144 = vmatprep.subr.mxu0 0.0
        %2145 = vmatpush2.msra.mxu0 0.0
        %2146 = vmatprep.subr.mxu0 0.0
        %2147 = vmatpush2.msra.mxu0 0.0
        %2148 = vmatprep.subr.mxu0 0.0
        %2149 = vmatpush2.msra.mxu0 0.0
        %2150 = vmatprep.subr.mxu0 0.0
        %2151 = vmatpush2.msra.mxu0 0.0
        %2152 = vmatprep.subr.mxu0 0.0
        %2153 = vmatpush2.msra.mxu0 0.0
        %2154 = vmatprep.subr.mxu0 0.0
        %2155 = vmatpush2.msra.mxu0 0.0
        %2156 = vmatprep.subr.mxu0 0.0
        %2157 = vmatpush2.msra.mxu0 0.0
        %2158 = vmatprep.subr.mxu0 0.0
        %2159 = vmatpush2.msra.mxu0 0.0
        %2160 = vmatprep.subr.mxu0 0.0
        %2161 = vmatpush2.msra.mxu0 0.0
        %2162 = vmatprep.subr.mxu0 0.0
        %2163 = vmatpush2.msra.mxu0 0.0
        %2164 = vmatprep.subr.mxu0 0.0
        %2165 = vmatpush2.msra.mxu0 0.0
        %2166 = vmatprep.subr.mxu0 0.0
        %2167 = vmatpush2.msra.mxu0 0.0
        %2168 = vmatprep.subr.mxu0 0.0
        %2169 = vmatpush2.msra.mxu0 0.0
        %2170 = vmatprep.subr.mxu0 0.0
        %2171 = vmatpush2.msra.mxu0 0.0
        %2172 = vmatprep.subr.mxu0 0.0
        %2173 = vmatpush2.msra.mxu0 0.0
        %2174 = vmatprep.mubr.f32.mxu0 0.0
        %2175 = vmatmul.mubr.f32.gmra.mxu0 %v2015
        %v2176 = vpop.f32.mrf.mxu0
        %v2177 = vadd.f32 0.0, %v2176
        %v2178 = vpop.f32.mrf.mxu0
        %2179 = vmatprep.mubr.f32.mxu0 0.0
        %2180 = vmatmul.mubr.f32.gmra.mxu0 %v2018
        %v2181 = vpop.f32.mrf.mxu0
        %v2182 = vadd.f32 0.0, %v2181
        %v2183 = vpop.f32.mrf.mxu0
        %2184 = vmatprep.mubr.f32.mxu0 0.0
        %2185 = vmatmul.mubr.f32.gmra.mxu0 %v2021
        %v2186 = vpop.f32.mrf.mxu0
        %v2187 = vadd.f32 0.0, %v2186
        %v2188 = vpop.f32.mrf.mxu0
        %2189 = vmatprep.mubr.f32.mxu0 0.0
        %2190 = vmatmul.mubr.f32.gmra.mxu0 %v2024
        %v2191 = vpop.f32.mrf.mxu0
        %v2192 = vadd.f32 0.0, %v2191
        %v2193 = vpop.f32.mrf.mxu0
        %2194 = vmatprep.mubr.f32.mxu0 0.0
        %2195 = vmatmul.mubr.f32.gmra.mxu0 %v2027
        %v2196 = vpop.f32.mrf.mxu0
        %v2197 = vadd.f32 0.0, %v2196
        %v2198 = vpop.f32.mrf.mxu0
        %2199 = vmatprep.mubr.f32.mxu0 0.0
        %2200 = vmatmul.mubr.f32.gmra.mxu0 %v2030
        %v2201 = vpop.f32.mrf.mxu0
        %v2202 = vadd.f32 0.0, %v2201
        %v2203 = vpop.f32.mrf.mxu0
        %2204 = vmatprep.mubr.f32.mxu0 0.0
        %2205 = vmatmul.mubr.f32.gmra.mxu0 %v2033
        %v2206 = vpop.f32.mrf.mxu0
        %v2207 = vadd.f32 0.0, %v2206
        %v2208 = vpop.f32.mrf.mxu0
        %2209 = vmatprep.mubr.f32.mxu0 0.0
        %2210 = vmatmul.mubr.f32.gmra.mxu0 %v2036
        %v2211 = vpop.f32.mrf.mxu0
        %v2212 = vadd.f32 0.0, %v2211
        %v2213 = vpop.f32.mrf.mxu0
        %2214 = vmatprep.mubr.f32.mxu0 0.0
        %2215 = vmatmul.mubr.f32.gmra.mxu0 %v2039
        %v2216 = vpop.f32.mrf.mxu0
        %v2217 = vadd.f32 0.0, %v2216
        %v2218 = vpop.f32.mrf.mxu0
        %2219 = vmatprep.mubr.f32.mxu0 0.0
        %2220 = vmatmul.mubr.f32.gmra.mxu0 %v2042
        %v2221 = vpop.f32.mrf.mxu0
        %v2222 = vadd.f32 0.0, %v2221
        %v2223 = vpop.f32.mrf.mxu0
        %2224 = vmatprep.mubr.f32.mxu0 0.0
        %2225 = vmatmul.mubr.f32.gmra.mxu0 %v2045
        %v2226 = vpop.f32.mrf.mxu0
        %v2227 = vadd.f32 0.0, %v2226
        %v2228 = vpop.f32.mrf.mxu0
        %2229 = vmatprep.mubr.f32.mxu0 0.0
        %2230 = vmatmul.mubr.f32.gmra.mxu0 %v2048
        %v2231 = vpop.f32.mrf.mxu0
        %v2232 = vadd.f32 0.0, %v2231
        %v2233 = vpop.f32.mrf.mxu0
        %2234 = vmatprep.mubr.f32.mxu0 0.0
        %2235 = vmatmul.mubr.f32.gmra.mxu0 %v2051
        %v2236 = vpop.f32.mrf.mxu0
        %v2237 = vadd.f32 0.0, %v2236
        %v2238 = vpop.f32.mrf.mxu0
        %2239 = vmatprep.mubr.f32.mxu0 0.0
        %2240 = vmatmul.mubr.f32.gmra.mxu0 %v2054
        %v2241 = vpop.f32.mrf.mxu0
        %v2242 = vadd.f32 0.0, %v2241
        %v2243 = vpop.f32.mrf.mxu0
        %2244 = vmatprep.mubr.f32.mxu0 0.0
        %2245 = vmatmul.mubr.f32.gmra.mxu0 %v2057
        %v2246 = vpop.f32.mrf.mxu0
        %v2247 = vadd.f32 0.0, %v2246
        %v2248 = vpop.f32.mrf.mxu0
        %2249 = vmatprep.mubr.f32.mxu0 0.0
        %2250 = vmatmul.mubr.f32.gmra.mxu0 %v2060
        %v2251 = vpop.f32.mrf.mxu0
        %v2252 = vadd.f32 0.0, %v2251
        %v2253 = vpop.f32.mrf.mxu0
        %2254 = vmatprep.mubr.f32.mxu0 0.0
        %2255 = vmatmul.mubr.f32.gmra.mxu0 %v2063
        %v2256 = vpop.f32.mrf.mxu0
        %v2257 = vadd.f32 0.0, %v2256
        %v2258 = vpop.f32.mrf.mxu0
        %2259 = vmatprep.mubr.f32.mxu0 0.0
        %2260 = vmatmul.mubr.f32.gmra.mxu0 %v2066
        %v2261 = vpop.f32.mrf.mxu0
        %v2262 = vadd.f32 0.0, %v2261
        %v2263 = vpop.f32.mrf.mxu0
        %2264 = vmatprep.mubr.f32.mxu0 0.0
        %2265 = vmatmul.mubr.f32.gmra.mxu0 %v2069
        %v2266 = vpop.f32.mrf.mxu0
        %v2267 = vadd.f32 0.0, %v2266
        %v2268 = vpop.f32.mrf.mxu0
        %2269 = vmatprep.mubr.f32.mxu0 0.0
        %2270 = vmatmul.mubr.f32.gmra.mxu0 %v2072
        %v2271 = vpop.f32.mrf.mxu0
        %v2272 = vadd.f32 0.0, %v2271
        %v2273 = vpop.f32.mrf.mxu0
        %2274 = vmatprep.mubr.f32.mxu0 0.0
        %2275 = vmatmul.mubr.f32.gmra.mxu0 %v2075
        %v2276 = vpop.f32.mrf.mxu0
        %v2277 = vadd.f32 0.0, %v2276
        %v2278 = vpop.f32.mrf.mxu0
        %2279 = vmatprep.mubr.f32.mxu0 0.0
        %2280 = vmatmul.mubr.f32.gmra.mxu0 %v2078
        %v2281 = vpop.f32.mrf.mxu0
        %v2282 = vadd.f32 0.0, %v2281
        %v2283 = vpop.f32.mrf.mxu0
        %2284 = vmatprep.mubr.f32.mxu0 0.0
        %2285 = vmatmul.mubr.f32.gmra.mxu0 %v2081
        %v2286 = vpop.f32.mrf.mxu0
        %v2287 = vadd.f32 0.0, %v2286
        %v2288 = vpop.f32.mrf.mxu0
        %2289 = vmatprep.mubr.f32.mxu0 0.0
        %2290 = vmatmul.mubr.f32.gmra.mxu0 %v2084
        %v2291 = vpop.f32.mrf.mxu0
        %v2292 = vadd.f32 0.0, %v2291
        %v2293 = vpop.f32.mrf.mxu0
        %2294 = vmatprep.mubr.f32.mxu0 0.0
        %2295 = vmatmul.mubr.f32.gmra.mxu0 %v2087
        %v2296 = vpop.f32.mrf.mxu0
        %v2297 = vadd.f32 0.0, %v2296
        %v2298 = vpop.f32.mrf.mxu0
        %2299 = vmatprep.mubr.f32.mxu0 0.0
        %2300 = vmatmul.mubr.f32.gmra.mxu0 %v2090
        %v2301 = vpop.f32.mrf.mxu0
        %v2302 = vadd.f32 0.0, %v2301
        %v2303 = vpop.f32.mrf.mxu0
        %2304 = vmatprep.mubr.f32.mxu0 0.0
        %2305 = vmatmul.mubr.f32.gmra.mxu0 %v2093
        %v2306 = vpop.f32.mrf.mxu0
        %v2307 = vadd.f32 0.0, %v2306
        %v2308 = vpop.f32.mrf.mxu0
        %2309 = vmatprep.mubr.f32.mxu0 0.0
        %2310 = vmatmul.mubr.f32.gmra.mxu0 %v2096
        %v2311 = vpop.f32.mrf.mxu0
        %v2312 = vadd.f32 0.0, %v2311
        %v2313 = vpop.f32.mrf.mxu0
        %2314 = vmatprep.mubr.f32.mxu0 0.0
        %2315 = vmatmul.mubr.f32.gmra.mxu0 %v2099
        %v2316 = vpop.f32.mrf.mxu0
        %v2317 = vadd.f32 0.0, %v2316
        %v2318 = vpop.f32.mrf.mxu0
        %2319 = vmatprep.mubr.f32.mxu0 0.0
        %2320 = vmatmul.mubr.f32.gmra.mxu0 %v2102
        %v2321 = vpop.f32.mrf.mxu0
        %v2322 = vadd.f32 0.0, %v2321
        %v2323 = vpop.f32.mrf.mxu0
        %2324 = vmatprep.mubr.f32.mxu0 0.0
        %2325 = vmatmul.mubr.f32.gmra.mxu0 %v2105
        %v2326 = vpop.f32.mrf.mxu0
        %v2327 = vadd.f32 0.0, %v2326
        %v2328 = vpop.f32.mrf.mxu0
        %2329 = vmatprep.mubr.f32.mxu0 0.0
        %2330 = vmatmul.mubr.f32.gmra.mxu0 %v2108
        %v2331 = vpop.f32.mrf.mxu0
        %v2332 = vadd.f32 0.0, %v2331
        %v2333 = vpop.f32.mrf.mxu0
        %2334 = vdwg.mxu0
        %2335 = vxpose.xlu0.b32.start [1/16] %v2177, 128
        %2336 = vxpose.xlu0.b32.cont [2/16] %v2182, 128
        %2337 = vxpose.xlu0.b32.cont [3/16] %v2187, 128
        %2338 = vxpose.xlu0.b32.cont [4/16] %v2192, 128
        %2339 = vxpose.xlu0.b32.cont [5/16] %v2197, 128
        %2340 = vxpose.xlu0.b32.cont [6/16] %v2202, 128
        %2341 = vxpose.xlu0.b32.cont [7/16] %v2207, 128
        %2342 = vxpose.xlu0.b32.cont [8/16] %v2212, 128
        %2343 = vxpose.xlu0.b32.cont [9/16] %v2217, 128
        %2344 = vxpose.xlu0.b32.cont [10/16] %v2222, 128
        %2345 = vxpose.xlu0.b32.cont [11/16] %v2227, 128
        %2346 = vxpose.xlu0.b32.cont [12/16] %v2232, 128
        %2347 = vxpose.xlu0.b32.cont [13/16] %v2237, 128
        %2348 = vxpose.xlu0.b32.cont [14/16] %v2242, 128
        %2349 = vxpose.xlu0.b32.cont [15/16] %v2247, 128
        %2350 = vxpose.xlu0.b32.end [16/16] %v2252, 128
        %v2351 = vpop.trf.xlu0
        %v2352 = vpop.trf.xlu0
        %v2353 = vpop.trf.xlu0
        %v2354 = vpop.trf.xlu0
        %v2355 = vpop.trf.xlu0
        %v2356 = vpop.trf.xlu0
        %v2357 = vpop.trf.xlu0
        %v2358 = vpop.trf.xlu0
        %v2359 = vpop.trf.xlu0
        %v2360 = vpop.trf.xlu0
        %v2361 = vpop.trf.xlu0
        %v2362 = vpop.trf.xlu0
        %v2363 = vpop.trf.xlu0
        %v2364 = vpop.trf.xlu0
        %v2365 = vpop.trf.xlu0
        %v2366 = vpop.trf.xlu0
        %2367 = vxpose.xlu0.b32.start [1/16] %v2257, 128
        %2368 = vxpose.xlu0.b32.cont [2/16] %v2262, 128
        %2369 = vxpose.xlu0.b32.cont [3/16] %v2267, 128
        %2370 = vxpose.xlu0.b32.cont [4/16] %v2272, 128
        %2371 = vxpose.xlu0.b32.cont [5/16] %v2277, 128
        %2372 = vxpose.xlu0.b32.cont [6/16] %v2282, 128
        %2373 = vxpose.xlu0.b32.cont [7/16] %v2287, 128
        %2374 = vxpose.xlu0.b32.cont [8/16] %v2292, 128
        %2375 = vxpose.xlu0.b32.cont [9/16] %v2297, 128
        %2376 = vxpose.xlu0.b32.cont [10/16] %v2302, 128
        %2377 = vxpose.xlu0.b32.cont [11/16] %v2307, 128
        %2378 = vxpose.xlu0.b32.cont [12/16] %v2312, 128
        %2379 = vxpose.xlu0.b32.cont [13/16] %v2317, 128
        %2380 = vxpose.xlu0.b32.cont [14/16] %v2322, 128
        %2381 = vxpose.xlu0.b32.cont [15/16] %v2327, 128
        %2382 = vxpose.xlu0.b32.end [16/16] %v2332, 128
        %v2383 = vpop.trf.xlu0
        %v2384 = vpop.trf.xlu0
        %v2385 = vpop.trf.xlu0
        %v2386 = vpop.trf.xlu0
        %v2387 = vpop.trf.xlu0
        %v2388 = vpop.trf.xlu0
        %v2389 = vpop.trf.xlu0
        %v2390 = vpop.trf.xlu0
        %v2391 = vpop.trf.xlu0
        %v2392 = vpop.trf.xlu0
        %v2393 = vpop.trf.xlu0
        %v2394 = vpop.trf.xlu0
        %v2395 = vpop.trf.xlu0
        %v2396 = vpop.trf.xlu0
        %v2397 = vpop.trf.xlu0
        %v2398 = vpop.trf.xlu0
        %2399 = vmatprep.subr.mxu0 0.0
        %2400 = vmatpush1.msra.mxu0 %v777
        %2401 = vmatprep.subr.mxu0 0.0
        %2402 = vmatpush1.msra.mxu0 %v776
        %2403 = vmatprep.subr.mxu0 0.0
        %2404 = vmatpush1.msra.mxu0 %v775
        %2405 = vmatprep.subr.mxu0 0.0
        %2406 = vmatpush1.msra.mxu0 %v774
        %2407 = vmatprep.subr.mxu0 0.0
        %2408 = vmatpush1.msra.mxu0 %v773
        %2409 = vmatprep.subr.mxu0 0.0
        %2410 = vmatpush1.msra.mxu0 %v772
        %2411 = vmatprep.subr.mxu0 0.0
        %2412 = vmatpush1.msra.mxu0 %v771
        %2413 = vmatprep.subr.mxu0 0.0
        %2414 = vmatpush1.msra.mxu0 %v770
        %2415 = vmatprep.subr.mxu0 0.0
        %2416 = vmatpush1.msra.mxu0 %v769
        %2417 = vmatprep.subr.mxu0 0.0
        %2418 = vmatpush1.msra.mxu0 %v768
        %2419 = vmatprep.subr.mxu0 0.0
        %2420 = vmatpush1.msra.mxu0 %v767
        %2421 = vmatprep.subr.mxu0 0.0
        %2422 = vmatpush1.msra.mxu0 %v766
        %2423 = vmatprep.subr.mxu0 0.0
        %2424 = vmatpush1.msra.mxu0 %v765
        %2425 = vmatprep.subr.mxu0 0.0
        %2426 = vmatpush1.msra.mxu0 %v764
        %2427 = vmatprep.subr.mxu0 0.0
        %2428 = vmatpush1.msra.mxu0 %v763
        %2429 = vmatprep.subr.mxu0 0.0
        %2430 = vmatpush1.msra.mxu0 %v762
        %2431 = vmatprep.subr.mxu0 0.0
        %2432 = vmatpush2.msra.mxu0 %v793
        %2433 = vmatprep.subr.mxu0 0.0
        %2434 = vmatpush2.msra.mxu0 %v792
        %2435 = vmatprep.subr.mxu0 0.0
        %2436 = vmatpush2.msra.mxu0 %v791
        %2437 = vmatprep.subr.mxu0 0.0
        %2438 = vmatpush2.msra.mxu0 %v790
        %2439 = vmatprep.subr.mxu0 0.0
        %2440 = vmatpush2.msra.mxu0 %v789
        %2441 = vmatprep.subr.mxu0 0.0
        %2442 = vmatpush2.msra.mxu0 %v788
        %2443 = vmatprep.subr.mxu0 0.0
        %2444 = vmatpush2.msra.mxu0 %v787
        %2445 = vmatprep.subr.mxu0 0.0
        %2446 = vmatpush2.msra.mxu0 %v786
        %2447 = vmatprep.subr.mxu0 0.0
        %2448 = vmatpush2.msra.mxu0 %v785
        %2449 = vmatprep.subr.mxu0 0.0
        %2450 = vmatpush2.msra.mxu0 %v784
        %2451 = vmatprep.subr.mxu0 0.0
        %2452 = vmatpush2.msra.mxu0 %v783
        %2453 = vmatprep.subr.mxu0 0.0
        %2454 = vmatpush2.msra.mxu0 %v782
        %2455 = vmatprep.subr.mxu0 0.0
        %2456 = vmatpush2.msra.mxu0 %v781
        %2457 = vmatprep.subr.mxu0 0.0
        %2458 = vmatpush2.msra.mxu0 %v780
        %2459 = vmatprep.subr.mxu0 0.0
        %2460 = vmatpush2.msra.mxu0 %v779
        %2461 = vmatprep.subr.mxu0 0.0
        %2462 = vmatpush2.msra.mxu0 %v778
        %2463 = vmatprep.mubr.f32.mxu0 %v2383
        %2464 = vmatmul.mubr.f32.gmra.mxu0 %v2351
        %v2465 = vpop.f32.mrf.mxu0
        %v2466 = vadd.f32 0.0, %v2465
        %v2467 = vpop.f32.mrf.mxu0
        %2468 = vmatprep.mubr.f32.mxu0 %v2384
        %2469 = vmatmul.mubr.f32.gmra.mxu0 %v2352
        %v2470 = vpop.f32.mrf.mxu0
        %v2471 = vadd.f32 0.0, %v2470
        %v2472 = vpop.f32.mrf.mxu0
        %2473 = vmatprep.mubr.f32.mxu0 %v2385
        %2474 = vmatmul.mubr.f32.gmra.mxu0 %v2353
        %v2475 = vpop.f32.mrf.mxu0
        %v2476 = vadd.f32 0.0, %v2475
        %v2477 = vpop.f32.mrf.mxu0
        %2478 = vmatprep.mubr.f32.mxu0 %v2386
        %2479 = vmatmul.mubr.f32.gmra.mxu0 %v2354
        %v2480 = vpop.f32.mrf.mxu0
        %v2481 = vadd.f32 0.0, %v2480
        %v2482 = vpop.f32.mrf.mxu0
        %2483 = vdwg.mxu0
        %v2484 = vmul.f32 %v2466, %v634
        %v2485 = vmul.f32 %v2471, %v639
        %v2486 = vmul.f32 %v2476, %v644
        %v2487 = vmul.f32 %v2481, %v649
        %v2488 = vsub.f32 %v2466, %v2484
        %v2489 = vsub.f32 %v2471, %v2485
        %v2490 = vsub.f32 %v2476, %v2486
        %v2491 = vsub.f32 %v2481, %v2487
        %2492 = vrot.lane.b32.xlu0 %v2484, 1
        %v2493 = vpop.permute.xlu0 %2492
        %2494 = vrot.lane.b32.xlu0 %v2485, 1
        %v2495 = vpop.permute.xlu0 %2494
        %2496 = vrot.lane.b32.xlu0 %v2486, 1
        %v2497 = vpop.permute.xlu0 %2496
        %2498 = vrot.lane.b32.xlu0 %v2487, 1
        %v2499 = vpop.permute.xlu0 %2498
        %v2500 = vmax.f32 %v2484, %v2493
        %v2501 = vmax.f32 %v2485, %v2495
        %v2502 = vmax.f32 %v2486, %v2497
        %v2503 = vmax.f32 %v2487, %v2499
        %2504 = vrot.lane.b32.xlu0 %v2484, 127
        %v2505 = vpop.permute.xlu0 %2504
        %2506 = vrot.lane.b32.xlu0 %v2485, 127
        %v2507 = vpop.permute.xlu0 %2506
        %2508 = vrot.lane.b32.xlu0 %v2486, 127
        %v2509 = vpop.permute.xlu0 %2508
        %2510 = vrot.lane.b32.xlu0 %v2487, 127
        %v2511 = vpop.permute.xlu0 %2510
        %v2512 = vmax.f32 %v2500, %v2505
        %v2513 = vmax.f32 %v2501, %v2507
        %v2514 = vmax.f32 %v2502, %v2509
        %v2515 = vmax.f32 %v2503, %v2511
        %2516 = vrot.lane.b32.xlu0 %v2484, 2
        %v2517 = vpop.permute.xlu0 %2516
        %2518 = vrot.lane.b32.xlu0 %v2485, 2
        %v2519 = vpop.permute.xlu0 %2518
        %2520 = vrot.lane.b32.xlu0 %v2486, 2
        %v2521 = vpop.permute.xlu0 %2520
        %2522 = vrot.lane.b32.xlu0 %v2487, 2
        %v2523 = vpop.permute.xlu0 %2522
        %v2524 = vmax.f32 %v2512, %v2517
        %v2525 = vmax.f32 %v2513, %v2519
        %v2526 = vmax.f32 %v2514, %v2521
        %v2527 = vmax.f32 %v2515, %v2523
        %2528 = vrot.lane.b32.xlu0 %v2484, 126
        %v2529 = vpop.permute.xlu0 %2528
        %2530 = vrot.lane.b32.xlu0 %v2485, 126
        %v2531 = vpop.permute.xlu0 %2530
        %2532 = vrot.lane.b32.xlu0 %v2486, 126
        %v2533 = vpop.permute.xlu0 %2532
        %2534 = vrot.lane.b32.xlu0 %v2487, 126
        %v2535 = vpop.permute.xlu0 %2534
        %v2536 = vmax.f32 %v2524, %v2529
        %v2537 = vmax.f32 %v2525, %v2531
        %v2538 = vmax.f32 %v2526, %v2533
        %v2539 = vmax.f32 %v2527, %v2535
        %2540 = vrot.lane.b32.xlu0 %v2488, 1
        %v2541 = vpop.permute.xlu0 %2540
        %2542 = vrot.lane.b32.xlu0 %v2489, 1
        %v2543 = vpop.permute.xlu0 %2542
        %2544 = vrot.lane.b32.xlu0 %v2490, 1
        %v2545 = vpop.permute.xlu0 %2544
        %2546 = vrot.lane.b32.xlu0 %v2491, 1
        %v2547 = vpop.permute.xlu0 %2546
        %v2548 = vmax.f32 %v2488, %v2541
        %v2549 = vmax.f32 %v2489, %v2543
        %v2550 = vmax.f32 %v2490, %v2545
        %v2551 = vmax.f32 %v2491, %v2547
        %2552 = vrot.lane.b32.xlu0 %v2488, 127
        %v2553 = vpop.permute.xlu0 %2552
        %2554 = vrot.lane.b32.xlu0 %v2489, 127
        %v2555 = vpop.permute.xlu0 %2554
        %2556 = vrot.lane.b32.xlu0 %v2490, 127
        %v2557 = vpop.permute.xlu0 %2556
        %2558 = vrot.lane.b32.xlu0 %v2491, 127
        %v2559 = vpop.permute.xlu0 %2558
        %v2560 = vmax.f32 %v2548, %v2553
        %v2561 = vmax.f32 %v2549, %v2555
        %v2562 = vmax.f32 %v2550, %v2557
        %v2563 = vmax.f32 %v2551, %v2559
        %2564 = vrot.lane.b32.xlu0 %v2488, 2
        %v2565 = vpop.permute.xlu0 %2564
        %2566 = vrot.lane.b32.xlu0 %v2489, 2
        %v2567 = vpop.permute.xlu0 %2566
        %2568 = vrot.lane.b32.xlu0 %v2490, 2
        %v2569 = vpop.permute.xlu0 %2568
        %2570 = vrot.lane.b32.xlu0 %v2491, 2
        %v2571 = vpop.permute.xlu0 %2570
        %v2572 = vmax.f32 %v2560, %v2565
        %v2573 = vmax.f32 %v2561, %v2567
        %v2574 = vmax.f32 %v2562, %v2569
        %v2575 = vmax.f32 %v2563, %v2571
        %2576 = vrot.lane.b32.xlu0 %v2488, 126
        %v2577 = vpop.permute.xlu0 %2576
        %2578 = vrot.lane.b32.xlu0 %v2489, 126
        %v2579 = vpop.permute.xlu0 %2578
        %2580 = vrot.lane.b32.xlu0 %v2490, 126
        %v2581 = vpop.permute.xlu0 %2580
        %2582 = vrot.lane.b32.xlu0 %v2491, 126
        %v2583 = vpop.permute.xlu0 %2582
        %v2584 = vmax.f32 %v2572, %v2577
        %v2585 = vmax.f32 %v2573, %v2579
        %v2586 = vmax.f32 %v2574, %v2581
        %v2587 = vmax.f32 %v2575, %v2583
        %v2588 = vrot.slane %v2536, 7
        %v2589 = vrot.slane %v2584, 7
        %v2590 = vrot.slane %v2537, 7
        %v2591 = vrot.slane %v2585, 7
        %v2592 = vrot.slane %v2538, 7
        %v2593 = vrot.slane %v2586, 7
        %v2594 = vrot.slane %v2539, 7
        %v2595 = vrot.slane %v2587, 7
        %v2596 = vsel %vm1481, %v2592, %v2594
        %v2597 = vsel %vm1481, %v2593, %v2595
        %v2598 = vsel %vm1481, %v2590, %v2592
        %v2599 = vsel %vm1481, %v2591, %v2593
        %v2600 = vsel %vm1481, %v2588, %v2590
        %v2601 = vsel %vm1481, %v2589, %v2591
        %v2602 = vsel %vm1481, %v2594, %v2588
        %v2603 = vsel %vm1481, %v2595, %v2589
        %v2604 = vmax.f32 %v2536, %v2602
        %v2605 = vmax.f32 %v2584, %v2603
        %v2606 = vmax.f32 %v2537, %v2600
        %v2607 = vmax.f32 %v2585, %v2601
        %v2608 = vmax.f32 %v2538, %v2598
        %v2609 = vmax.f32 %v2586, %v2599
        %v2610 = vmax.f32 %v2539, %v2596
        %v2611 = vmax.f32 %v2587, %v2597
        %v2612 = vrot.slane %v2536, 1
        %v2613 = vrot.slane %v2584, 1
        %v2614 = vrot.slane %v2537, 1
        %v2615 = vrot.slane %v2585, 1
        %v2616 = vrot.slane %v2538, 1
        %v2617 = vrot.slane %v2586, 1
        %v2618 = vrot.slane %v2539, 1
        %v2619 = vrot.slane %v2587, 1
        %v2620 = vsel %vm1506, %v2616, %v2618
        %v2621 = vsel %vm1506, %v2617, %v2619
        %v2622 = vsel %vm1506, %v2614, %v2616
        %v2623 = vsel %vm1506, %v2615, %v2617
        %v2624 = vsel %vm1506, %v2612, %v2614
        %v2625 = vsel %vm1506, %v2613, %v2615
        %v2626 = vsel %vm1506, %v2618, %v2612
        %v2627 = vsel %vm1506, %v2619, %v2613
        %v2628 = vmax.f32 %v2604, %v2624
        %v2629 = vmax.f32 %v2605, %v2625
        %v2630 = vmax.f32 %v2606, %v2622
        %v2631 = vmax.f32 %v2607, %v2623
        %v2632 = vmax.f32 %v2608, %v2620
        %v2633 = vmax.f32 %v2609, %v2621
        %v2634 = vmax.f32 %v2610, %v2626
        %v2635 = vmax.f32 %v2611, %v2627
        %v2636 = vrot.slane %v2536, 6
        %v2637 = vrot.slane %v2584, 6
        %v2638 = vrot.slane %v2537, 6
        %v2639 = vrot.slane %v2585, 6
        %v2640 = vrot.slane %v2538, 6
        %v2641 = vrot.slane %v2586, 6
        %v2642 = vrot.slane %v2539, 6
        %v2643 = vrot.slane %v2587, 6
        %v2644 = vsel %vm1531, %v2640, %v2642
        %v2645 = vsel %vm1531, %v2641, %v2643
        %v2646 = vsel %vm1531, %v2638, %v2640
        %v2647 = vsel %vm1531, %v2639, %v2641
        %v2648 = vsel %vm1531, %v2636, %v2638
        %v2649 = vsel %vm1531, %v2637, %v2639
        %v2650 = vsel %vm1531, %v2642, %v2636
        %v2651 = vsel %vm1531, %v2643, %v2637
        %v2652 = vmax.f32 %v2628, %v2650
        %v2653 = vmax.f32 %v2629, %v2651
        %v2654 = vmax.f32 %v2630, %v2648
        %v2655 = vmax.f32 %v2631, %v2649
        %v2656 = vmax.f32 %v2632, %v2646
        %v2657 = vmax.f32 %v2633, %v2647
        %v2658 = vmax.f32 %v2634, %v2644
        %v2659 = vmax.f32 %v2635, %v2645
        %v2660 = vrot.slane %v2536, 2
        %v2661 = vrot.slane %v2584, 2
        %v2662 = vrot.slane %v2537, 2
        %v2663 = vrot.slane %v2585, 2
        %v2664 = vrot.slane %v2538, 2
        %v2665 = vrot.slane %v2586, 2
        %v2666 = vrot.slane %v2539, 2
        %v2667 = vrot.slane %v2587, 2
        %v2668 = vsel %vm1556, %v2664, %v2666
        %v2669 = vsel %vm1556, %v2665, %v2667
        %v2670 = vsel %vm1556, %v2662, %v2664
        %v2671 = vsel %vm1556, %v2663, %v2665
        %v2672 = vsel %vm1556, %v2660, %v2662
        %v2673 = vsel %vm1556, %v2661, %v2663
        %v2674 = vsel %vm1556, %v2666, %v2660
        %v2675 = vsel %vm1556, %v2667, %v2661
        %v2676 = vmax.f32 %v2652, %v2672
        %v2677 = vmax.f32 %v2653, %v2673
        %v2678 = vmax.f32 %v2654, %v2670
        %v2679 = vmax.f32 %v2655, %v2671
        %v2680 = vmax.f32 %v2656, %v2668
        %v2681 = vmax.f32 %v2657, %v2669
        %v2682 = vmax.f32 %v2658, %v2674
        %v2683 = vmax.f32 %v2659, %v2675
        %2684 = vmatprep.subr.mxu0 0.0
        %2685 = vmatpush1.msra.mxu0 0.0
        %2686 = vmatprep.subr.mxu0 0.0
        %2687 = vmatpush1.msra.mxu0 0.0
        %2688 = vmatprep.subr.mxu0 0.0
        %2689 = vmatpush1.msra.mxu0 0.0
        %2690 = vmatprep.subr.mxu0 0.0
        %2691 = vmatpush1.msra.mxu0 0.0
        %2692 = vmatprep.subr.mxu0 0.0
        %2693 = vmatpush1.msra.mxu0 0.0
        %2694 = vmatprep.subr.mxu0 0.0
        %2695 = vmatpush1.msra.mxu0 0.0
        %2696 = vmatprep.subr.mxu0 0.0
        %2697 = vmatpush1.msra.mxu0 0.0
        %2698 = vmatprep.subr.mxu0 0.0
        %2699 = vmatpush1.msra.mxu0 0.0
        %2700 = vmatprep.subr.mxu0 0.0
        %2701 = vmatpush1.msra.mxu0 0.0
        %2702 = vmatprep.subr.mxu0 0.0
        %2703 = vmatpush1.msra.mxu0 0.0
        %2704 = vmatprep.subr.mxu0 0.0
        %2705 = vmatpush1.msra.mxu0 0.0
        %2706 = vmatprep.subr.mxu0 0.0
        %2707 = vmatpush1.msra.mxu0 0.0
        %2708 = vmatprep.subr.mxu0 %v2683
        %2709 = vmatpush1.msra.mxu0 %v2682
        %2710 = vmatprep.subr.mxu0 %v2681
        %2711 = vmatpush1.msra.mxu0 %v2680
        %2712 = vmatprep.subr.mxu0 %v2679
        %2713 = vmatpush1.msra.mxu0 %v2678
        %2714 = vmatprep.subr.mxu0 %v2677
        %2715 = vmatpush1.msra.mxu0 %v2676
        %2716 = vmatprep.subr.mxu0 0.0
        %2717 = vmatpush2.msra.mxu0 0.0
        %2718 = vmatprep.subr.mxu0 0.0
        %2719 = vmatpush2.msra.mxu0 0.0
        %2720 = vmatprep.subr.mxu0 0.0
        %2721 = vmatpush2.msra.mxu0 0.0
        %2722 = vmatprep.subr.mxu0 0.0
        %2723 = vmatpush2.msra.mxu0 0.0
        %2724 = vmatprep.subr.mxu0 0.0
        %2725 = vmatpush2.msra.mxu0 0.0
        %2726 = vmatprep.subr.mxu0 0.0
        %2727 = vmatpush2.msra.mxu0 0.0
        %2728 = vmatprep.subr.mxu0 0.0
        %2729 = vmatpush2.msra.mxu0 0.0
        %2730 = vmatprep.subr.mxu0 0.0
        %2731 = vmatpush2.msra.mxu0 0.0
        %2732 = vmatprep.subr.mxu0 0.0
        %2733 = vmatpush2.msra.mxu0 0.0
        %2734 = vmatprep.subr.mxu0 0.0
        %2735 = vmatpush2.msra.mxu0 0.0
        %2736 = vmatprep.subr.mxu0 0.0
        %2737 = vmatpush2.msra.mxu0 0.0
        %2738 = vmatprep.subr.mxu0 0.0
        %2739 = vmatpush2.msra.mxu0 0.0
        %2740 = vmatprep.subr.mxu0 0.0
        %2741 = vmatpush2.msra.mxu0 0.0
        %2742 = vmatprep.subr.mxu0 0.0
        %2743 = vmatpush2.msra.mxu0 0.0
        %2744 = vmatprep.subr.mxu0 0.0
        %2745 = vmatpush2.msra.mxu0 0.0
        %2746 = vmatprep.subr.mxu0 0.0
        %2747 = vmatpush2.msra.mxu0 0.0
        %2748 = vmatprep.mubr.f32.mxu0 0.0
        %2749 = vmatmul.mubr.f32.gmra.mxu0 %v1574
        %v2750 = vpop.f32.mrf.mxu0
        %v2751 = vadd.f32 0.0, %v2750
        %v2752 = vpop.f32.mrf.mxu0
        %v2753 = vadd.f32 0.0, %v2752
        %2754 = vmatprep.mubr.f32.mxu0 0.0
        %2755 = vmatmul.mubr.f32.gmra.mxu0 %v1577
        %v2756 = vpop.f32.mrf.mxu0
        %v2757 = vadd.f32 0.0, %v2756
        %v2758 = vpop.f32.mrf.mxu0
        %v2759 = vadd.f32 0.0, %v2758
        %2760 = vdwg.mxu0
        %2761 = vmatprep.subr.mxu0 0.0
        %2762 = vmatpush1.msra.mxu0 %v811
        %2763 = vmatprep.subr.mxu0 0.0
        %2764 = vmatpush1.msra.mxu0 %v810
        %2765 = vmatprep.subr.mxu0 0.0
        %2766 = vmatpush1.msra.mxu0 %v809
        %2767 = vmatprep.subr.mxu0 0.0
        %2768 = vmatpush1.msra.mxu0 %v808
        %2769 = vmatprep.subr.mxu0 0.0
        %2770 = vmatpush1.msra.mxu0 %v807
        %2771 = vmatprep.subr.mxu0 0.0
        %2772 = vmatpush1.msra.mxu0 %v806
        %2773 = vmatprep.subr.mxu0 0.0
        %2774 = vmatpush1.msra.mxu0 %v805
        %2775 = vmatprep.subr.mxu0 0.0
        %2776 = vmatpush1.msra.mxu0 %v804
        %2777 = vmatprep.subr.mxu0 0.0
        %2778 = vmatpush1.msra.mxu0 %v803
        %2779 = vmatprep.subr.mxu0 0.0
        %2780 = vmatpush1.msra.mxu0 %v802
        %2781 = vmatprep.subr.mxu0 0.0
        %2782 = vmatpush1.msra.mxu0 %v801
        %2783 = vmatprep.subr.mxu0 0.0
        %2784 = vmatpush1.msra.mxu0 %v800
        %2785 = vmatprep.subr.mxu0 0.0
        %2786 = vmatpush1.msra.mxu0 %v799
        %2787 = vmatprep.subr.mxu0 0.0
        %2788 = vmatpush1.msra.mxu0 %v798
        %2789 = vmatprep.subr.mxu0 0.0
        %2790 = vmatpush1.msra.mxu0 %v797
        %2791 = vmatprep.subr.mxu0 0.0
        %2792 = vmatpush1.msra.mxu0 %v796
        %2793 = vmatprep.subr.mxu0 0.0
        %2794 = vmatpush2.msra.mxu0 %v827
        %2795 = vmatprep.subr.mxu0 0.0
        %2796 = vmatpush2.msra.mxu0 %v826
        %2797 = vmatprep.subr.mxu0 0.0
        %2798 = vmatpush2.msra.mxu0 %v825
        %2799 = vmatprep.subr.mxu0 0.0
        %2800 = vmatpush2.msra.mxu0 %v824
        %2801 = vmatprep.subr.mxu0 0.0
        %2802 = vmatpush2.msra.mxu0 %v823
        %2803 = vmatprep.subr.mxu0 0.0
        %2804 = vmatpush2.msra.mxu0 %v822
        %2805 = vmatprep.subr.mxu0 0.0
        %2806 = vmatpush2.msra.mxu0 %v821
        %2807 = vmatprep.subr.mxu0 0.0
        %2808 = vmatpush2.msra.mxu0 %v820
        %2809 = vmatprep.subr.mxu0 0.0
        %2810 = vmatpush2.msra.mxu0 %v819
        %2811 = vmatprep.subr.mxu0 0.0
        %2812 = vmatpush2.msra.mxu0 %v818
        %2813 = vmatprep.subr.mxu0 0.0
        %2814 = vmatpush2.msra.mxu0 %v817
        %2815 = vmatprep.subr.mxu0 0.0
        %2816 = vmatpush2.msra.mxu0 %v816
        %2817 = vmatprep.subr.mxu0 0.0
        %2818 = vmatpush2.msra.mxu0 %v815
        %2819 = vmatprep.subr.mxu0 0.0
        %2820 = vmatpush2.msra.mxu0 %v814
        %2821 = vmatprep.subr.mxu0 0.0
        %2822 = vmatpush2.msra.mxu0 %v813
        %2823 = vmatprep.subr.mxu0 0.0
        %2824 = vmatpush2.msra.mxu0 %v812
        %2825 = vmatprep.mubr.f32.mxu0 %v2753
        %2826 = vmatmul.mubr.f32.gmra.mxu0 %v2751
        %v2827 = vpop.f32.mrf.mxu0
        %v2828 = vadd.f32 0.0, %v2827
        %v2829 = vpop.f32.mrf.mxu0
        %2830 = vmatprep.mubr.f32.mxu0 %v2759
        %2831 = vmatmul.mubr.f32.gmra.mxu0 %v2757
        %v2832 = vpop.f32.mrf.mxu0
        %v2833 = vadd.f32 0.0, %v2832
        %v2834 = vpop.f32.mrf.mxu0
        %2835 = vdwg.mxu0
        %2836 = vrot.lane.b32.xlu0 %v2828, 1
        %v2837 = vpop.permute.xlu0 %2836
        %2838 = vrot.lane.b32.xlu0 %v2833, 1
        %v2839 = vpop.permute.xlu0 %2838
        %v2840 = vmax.f32 %v2828, %v2837
        %v2841 = vmax.f32 %v2833, %v2839
        %2842 = vrot.lane.b32.xlu0 %v2828, 127
        %v2843 = vpop.permute.xlu0 %2842
        %2844 = vrot.lane.b32.xlu0 %v2833, 127
        %v2845 = vpop.permute.xlu0 %2844
        %v2846 = vmax.f32 %v2840, %v2843
        %v2847 = vmax.f32 %v2841, %v2845
        %2848 = vrot.lane.b32.xlu0 %v2828, 2
        %v2849 = vpop.permute.xlu0 %2848
        %2850 = vrot.lane.b32.xlu0 %v2833, 2
        %v2851 = vpop.permute.xlu0 %2850
        %v2852 = vmax.f32 %v2846, %v2849
        %v2853 = vmax.f32 %v2847, %v2851
        %2854 = vrot.lane.b32.xlu0 %v2828, 126
        %v2855 = vpop.permute.xlu0 %2854
        %2856 = vrot.lane.b32.xlu0 %v2833, 126
        %v2857 = vpop.permute.xlu0 %2856
        %v2858 = vmax.f32 %v2852, %v2855
        %v2859 = vmax.f32 %v2853, %v2857
        %v2860 = vrot.slane %v2858, 7
        %v2861 = vrot.slane %v2859, 7
        %v2862 = vsel %vm1481, %v2860, %v2861
        %v2863 = vsel %vm1481, %v2861, %v2860
        %v2864 = vmax.f32 %v2858, %v2863
        %v2865 = vmax.f32 %v2859, %v2862
        %v2866 = vrot.slane %v2858, 1
        %v2867 = vrot.slane %v2859, 1
        %v2868 = vsel %vm1506, %v2866, %v2867
        %v2869 = vsel %vm1506, %v2867, %v2866
        %v2870 = vmax.f32 %v2864, %v2868
        %v2871 = vmax.f32 %v2865, %v2869
        %v2872 = vrot.slane %v2858, 6
        %v2873 = vrot.slane %v2859, 6
        %v2874 = vsel %vm1531, %v2872, %v2873
        %v2875 = vsel %vm1531, %v2873, %v2872
        %v2876 = vmax.f32 %v2870, %v2875
        %v2877 = vmax.f32 %v2871, %v2874
        %v2878 = vrot.slane %v2858, 2
        %v2879 = vrot.slane %v2859, 2
        %v2880 = vsel %vm1556, %v2878, %v2879
        %v2881 = vsel %vm1556, %v2879, %v2878
        %v2882 = vmax.f32 %v2876, %v2880
        %v2883 = vmax.f32 %v2877, %v2881
        %2884 = vmatprep.subr.mxu0 0.0
        %2885 = vmatpush1.msra.mxu0 0.0
        %2886 = vmatprep.subr.mxu0 0.0
        %2887 = vmatpush1.msra.mxu0 0.0
        %2888 = vmatprep.subr.mxu0 0.0
        %2889 = vmatpush1.msra.mxu0 0.0
        %2890 = vmatprep.subr.mxu0 0.0
        %2891 = vmatpush1.msra.mxu0 0.0
        %2892 = vmatprep.subr.mxu0 0.0
        %2893 = vmatpush1.msra.mxu0 0.0
        %2894 = vmatprep.subr.mxu0 0.0
        %2895 = vmatpush1.msra.mxu0 0.0
        %2896 = vmatprep.subr.mxu0 0.0
        %2897 = vmatpush1.msra.mxu0 0.0
        %2898 = vmatprep.subr.mxu0 0.0
        %2899 = vmatpush1.msra.mxu0 0.0
        %2900 = vmatprep.subr.mxu0 0.0
        %2901 = vmatpush1.msra.mxu0 0.0
        %2902 = vmatprep.subr.mxu0 0.0
        %2903 = vmatpush1.msra.mxu0 0.0
        %2904 = vmatprep.subr.mxu0 0.0
        %2905 = vmatpush1.msra.mxu0 0.0
        %2906 = vmatprep.subr.mxu0 0.0
        %2907 = vmatpush1.msra.mxu0 0.0
        %2908 = vmatprep.subr.mxu0 0.0
        %2909 = vmatpush1.msra.mxu0 0.0
        %2910 = vmatprep.subr.mxu0 0.0
        %2911 = vmatpush1.msra.mxu0 0.0
        %2912 = vmatprep.subr.mxu0 0.0
        %2913 = vmatpush1.msra.mxu0 %v2883
        %2914 = vmatprep.subr.mxu0 0.0
        %2915 = vmatpush1.msra.mxu0 %v2882
        %2916 = vmatprep.subr.mxu0 0.0
        %2917 = vmatpush2.msra.mxu0 0.0
        %2918 = vmatprep.subr.mxu0 0.0
        %2919 = vmatpush2.msra.mxu0 0.0
        %2920 = vmatprep.subr.mxu0 0.0
        %2921 = vmatpush2.msra.mxu0 0.0
        %2922 = vmatprep.subr.mxu0 0.0
        %2923 = vmatpush2.msra.mxu0 0.0
        %2924 = vmatprep.subr.mxu0 0.0
        %2925 = vmatpush2.msra.mxu0 0.0
        %2926 = vmatprep.subr.mxu0 0.0
        %2927 = vmatpush2.msra.mxu0 0.0
        %2928 = vmatprep.subr.mxu0 0.0
        %2929 = vmatpush2.msra.mxu0 0.0
        %2930 = vmatprep.subr.mxu0 0.0
        %2931 = vmatpush2.msra.mxu0 0.0
        %2932 = vmatprep.subr.mxu0 0.0
        %2933 = vmatpush2.msra.mxu0 0.0
        %2934 = vmatprep.subr.mxu0 0.0
        %2935 = vmatpush2.msra.mxu0 0.0
        %2936 = vmatprep.subr.mxu0 0.0
        %2937 = vmatpush2.msra.mxu0 0.0
        %2938 = vmatprep.subr.mxu0 0.0
        %2939 = vmatpush2.msra.mxu0 0.0
        %2940 = vmatprep.subr.mxu0 0.0
        %2941 = vmatpush2.msra.mxu0 0.0
        %2942 = vmatprep.subr.mxu0 0.0
        %2943 = vmatpush2.msra.mxu0 0.0
        %2944 = vmatprep.subr.mxu0 0.0
        %2945 = vmatpush2.msra.mxu0 0.0
        %2946 = vmatprep.subr.mxu0 0.0
        %2947 = vmatpush2.msra.mxu0 0.0
        %2948 = vmatprep.mubr.f32.mxu0 0.0
        %2949 = vmatmul.mubr.f32.gmra.mxu0 %v1781
        %v2950 = vpop.f32.mrf.mxu0
        %v2951 = vadd.f32 0.0, %v2950
        %v2952 = vpop.f32.mrf.mxu0
        %2953 = vmatprep.mubr.f32.mxu0 0.0
        %2954 = vmatmul.mubr.f32.gmra.mxu0 %v1784
        %v2955 = vpop.f32.mrf.mxu0
        %v2956 = vadd.f32 0.0, %v2955
        %v2957 = vpop.f32.mrf.mxu0
        %2958 = vmatprep.mubr.f32.mxu0 0.0
        %2959 = vmatmul.mubr.f32.gmra.mxu0 %v1787
        %v2960 = vpop.f32.mrf.mxu0
        %v2961 = vadd.f32 0.0, %v2960
        %v2962 = vpop.f32.mrf.mxu0
        %2963 = vmatprep.mubr.f32.mxu0 0.0
        %2964 = vmatmul.mubr.f32.gmra.mxu0 %v1790
        %v2965 = vpop.f32.mrf.mxu0
        %v2966 = vadd.f32 0.0, %v2965
        %v2967 = vpop.f32.mrf.mxu0
        %2968 = vdwg.mxu0
        %2969 = vmatprep.subr.mxu0 %v863
        %2970 = vmatpush1.msra.mxu0 %v862
        %2971 = vmatprep.subr.mxu0 %v861
        %2972 = vmatpush1.msra.mxu0 %v860
        %2973 = vmatprep.subr.mxu0 %v859
        %2974 = vmatpush1.msra.mxu0 %v858
        %2975 = vmatprep.subr.mxu0 %v857
        %2976 = vmatpush1.msra.mxu0 %v856
        %2977 = vmatprep.subr.mxu0 %v855
        %2978 = vmatpush1.msra.mxu0 %v854
        %2979 = vmatprep.subr.mxu0 %v853
        %2980 = vmatpush1.msra.mxu0 %v852
        %2981 = vmatprep.subr.mxu0 %v851
        %2982 = vmatpush1.msra.mxu0 %v850
        %2983 = vmatprep.subr.mxu0 %v849
        %2984 = vmatpush1.msra.mxu0 %v848
        %2985 = vmatprep.subr.mxu0 %v847
        %2986 = vmatpush1.msra.mxu0 %v846
        %2987 = vmatprep.subr.mxu0 %v845
        %2988 = vmatpush1.msra.mxu0 %v844
        %2989 = vmatprep.subr.mxu0 %v843
        %2990 = vmatpush1.msra.mxu0 %v842
        %2991 = vmatprep.subr.mxu0 %v841
        %2992 = vmatpush1.msra.mxu0 %v840
        %2993 = vmatprep.subr.mxu0 %v839
        %2994 = vmatpush1.msra.mxu0 %v838
        %2995 = vmatprep.subr.mxu0 %v837
        %2996 = vmatpush1.msra.mxu0 %v836
        %2997 = vmatprep.subr.mxu0 %v835
        %2998 = vmatpush1.msra.mxu0 %v834
        %2999 = vmatprep.subr.mxu0 %v833
        %3000 = vmatpush1.msra.mxu0 %v832
        %3001 = vmatprep.subr.mxu0 0.0
        %3002 = vmatpush2.msra.mxu0 0.0
        %3003 = vmatprep.subr.mxu0 0.0
        %3004 = vmatpush2.msra.mxu0 0.0
        %3005 = vmatprep.subr.mxu0 0.0
        %3006 = vmatpush2.msra.mxu0 0.0
        %3007 = vmatprep.subr.mxu0 0.0
        %3008 = vmatpush2.msra.mxu0 0.0
        %3009 = vmatprep.subr.mxu0 0.0
        %3010 = vmatpush2.msra.mxu0 0.0
        %3011 = vmatprep.subr.mxu0 0.0
        %3012 = vmatpush2.msra.mxu0 0.0
        %3013 = vmatprep.subr.mxu0 0.0
        %3014 = vmatpush2.msra.mxu0 0.0
        %3015 = vmatprep.subr.mxu0 0.0
        %3016 = vmatpush2.msra.mxu0 0.0
        %3017 = vmatprep.subr.mxu0 0.0
        %3018 = vmatpush2.msra.mxu0 0.0
        %3019 = vmatprep.subr.mxu0 0.0
        %3020 = vmatpush2.msra.mxu0 0.0
        %3021 = vmatprep.subr.mxu0 0.0
        %3022 = vmatpush2.msra.mxu0 0.0
        %3023 = vmatprep.subr.mxu0 0.0
        %3024 = vmatpush2.msra.mxu0 0.0
        %3025 = vmatprep.subr.mxu0 0.0
        %3026 = vmatpush2.msra.mxu0 0.0
        %3027 = vmatprep.subr.mxu0 0.0
        %3028 = vmatpush2.msra.mxu0 0.0
        %3029 = vmatprep.subr.mxu0 0.0
        %3030 = vmatpush2.msra.mxu0 0.0
        %3031 = vmatprep.subr.mxu0 0.0
        %3032 = vmatpush2.msra.mxu0 0.0
        %3033 = vmatprep.mubr.f32.mxu0 0.0
        %3034 = vmatmul.mubr.f32.gmra.mxu0 %v2951
        %v3035 = vpop.f32.mrf.mxu0
        %v3036 = vadd.f32 0.0, %v3035
        %v3037 = vpop.f32.mrf.mxu0
        %v3038 = vadd.f32 0.0, %v3037
        %3039 = vmatprep.mubr.f32.mxu0 0.0
        %3040 = vmatmul.mubr.f32.gmra.mxu0 %v2956
        %v3041 = vpop.f32.mrf.mxu0
        %v3042 = vadd.f32 0.0, %v3041
        %v3043 = vpop.f32.mrf.mxu0
        %v3044 = vadd.f32 0.0, %v3043
        %3045 = vmatprep.mubr.f32.mxu0 0.0
        %3046 = vmatmul.mubr.f32.gmra.mxu0 %v2961
        %v3047 = vpop.f32.mrf.mxu0
        %v3048 = vadd.f32 0.0, %v3047
        %v3049 = vpop.f32.mrf.mxu0
        %v3050 = vadd.f32 0.0, %v3049
        %3051 = vmatprep.mubr.f32.mxu0 0.0
        %3052 = vmatmul.mubr.f32.gmra.mxu0 %v2966
        %v3053 = vpop.f32.mrf.mxu0
        %v3054 = vadd.f32 0.0, %v3053
        %v3055 = vpop.f32.mrf.mxu0
        %v3056 = vadd.f32 0.0, %v3055
        %3057 = vdwg.mxu0
        %v3058 = vsub.f32 %v3036, %v3038
        %v3059 = vsub.f32 %v3042, %v3044
        %v3060 = vsub.f32 %v3048, %v3050
        %v3061 = vsub.f32 %v3054, %v3056
        %v3062 = vmul.f32 %v3058, %v736
        %v3063 = vmul.f32 %v3059, %v741
        %v3064 = vmul.f32 %v3060, %v746
        %v3065 = vmul.f32 %v3061, %v751
        %v3066 = vadd.f32 %v3038, %v3062
        %v3067 = vadd.f32 %v3044, %v3063
        %v3068 = vadd.f32 %v3050, %v3064
        %v3069 = vadd.f32 %v3056, %v3065
        %s3070 = scalar_lea.vmem %s544, 32
        %3071 = vst [vmem:[%s3070] sm:$0xff] %v3066
        %3072 = vst [vmem:[%s3070 + $0x8] sm:$0xff] %v3067
        %3073 = vst [vmem:[%s3070 + $0x10] sm:$0xff] %v3068
        %3074 = vst [vmem:[%s3070 + $0x18] sm:$0xff] %v3069
        %s3075 = smul.u32 2, %s29
        %p3076 = scmp.lt.s32.totalorder %s28, 1
        %s3077 = scalar_select %p3076, %s28, 1
        %p3078 = scmp.lt.s32.totalorder %s3075, 1
        %s3079 = scalar_select %p3078, %s3075, 1
        %s3080 = smul.addr %s3079, 4
        %s3081 = smul.addr %s3077, 8
        %s3082 = sadd.s32 %s3080, %s3081
        %s3083 = smul.addr %s3082, 8
        %s3084 = scalar_lea.vmem %s9, %s3083
        // Predicated region
        $region119: #{featmap_transfer.3} parent=89 // pred_check
          %p3085 = pneg %p257
        $region120: #{featmap_transfer.3} parent=89 // pred_check_branch
          %3087 = sbr.rel (%p3085) target = $region122
        $region121: #{featmap_transfer.3} parent=89 // pred_region
          %s3088 = smul.u32 2, %s29
        $region122: #{featmap_transfer.3} parent=89 // pred_fallthru
          _
      $region90: #{featmap_transfer.3} parent=5 // pred_fallthru
        _
      %p3089 = scmp.le.s32.totalorder 2, %s19
      // Predicated region
      $region123: #{featmap_transfer.3} parent=5 // pred_check
        %p3090 = pneg %p3089
      $region124: #{featmap_transfer.3} parent=5 // pred_check_branch
        %3092 = sbr.rel (%p3090) target = $region126
      $region125: #{featmap_transfer.3} parent=5 // pred_region
        %s3093 = ssub.s32 %s19, 2
        // Predicated region
        $region127: #{featmap_transfer.3} parent=125 // pred_check
          %p3094 = pneg %p263
        $region128: #{featmap_transfer.3} parent=125 // pred_check_branch
          %3096 = sbr.rel (%p3094) target = $region130
        $region129: #{featmap_transfer.3} parent=125 // pred_region
          %s3097 = smul.u32 2, %s31
          %p3098 = scmp.lt.s32.totalorder %s30, 1
          %s3099 = scalar_select %p3098, %s30, 1
          %p3100 = scmp.lt.s32.totalorder %s3097, 1
          %s3101 = scalar_select %p3100, %s3097, 1
          %s3102 = smul.addr %s3101, 4
          %s3103 = smul.addr %s3099, 8
          %s3104 = sadd.s32 %s3102, %s3103
          %s3105 = smul.addr %s3104, 8
          %s3106 = scalar_lea.vmem %s9, %s3105
        $region130: #{featmap_transfer.3} parent=125 // pred_fallthru
          _
      $region126: #{featmap_transfer.3} parent=5 // pred_fallthru
        _
    $region6: #{featmap_transfer.3} parent=1 // loop_footer
      %s23 = sadd.s32 1, %s19
    $region7: #{featmap_transfer.3} parent=1 // loop_footer_branch
      %18 = sbr.rel target = $region3
    $region8: #{featmap_transfer.3} parent=1 // loop_exit
      _
    %3107 = vsyncpa [#allocation4], 1
    %s3108 = scalar_lea.sflag [#allocation4], 1
    %3109 = vsyncpa %s3108, 1
    %3110 = vsyncpa [#allocation6], 1
    %3111 = vsyncpa [#allocation9], 1
    %3112 = vsyncpa [#allocation12], 1

</llo_original>
